<compile_context>
chip_gen: v6e
topology: v6e:2x2x1
jax: 0.10.0
libtpu: 0.0.40
codegen_flags: <defaults>
</compile_context>

<pallas_src>
import functools

import numpy as np

import jax
import jax.numpy as jnp
from jax import lax
from jax.experimental import pallas as pl

HIDDEN = 32      # hidden_dim
NUM_HEADS = 4    # MultiheadAttention heads

# ----------------------------------------------------------------------------
# in-kernel math helpers (all f32 elementwise)
# ----------------------------------------------------------------------------
_SQRT1_2 = 0.7071067811865476


def _erf(x):
    # Abramowitz & Stegun 7.1.26 (|err| <= 1.5e-7): matches torch's exact-erf GELU
    # to float32 noise using only Mosaic-supported ops (exp / abs / where).
    a1, a2, a3, a4, a5 = 0.254829592, -0.284496736, 1.421413741, -1.453152027, 1.061405429
    p = 0.3275911
    ax = jnp.abs(x)
    t = 1.0 / (1.0 + p * ax)
    poly = ((((a5 * t + a4) * t + a3) * t + a2) * t + a1) * t
    y = 1.0 - poly * jnp.exp(-ax * ax)
    return jnp.where(x >= 0, y, -y)


def _gelu(x):
    return 0.5 * x * (1.0 + _erf(x * _SQRT1_2))


def _layer_norm(x, w, b, eps=1e-5):
    mu = jnp.mean(x, axis=-1, keepdims=True)
    xc = x - mu
    var = jnp.mean(xc * xc, axis=-1, keepdims=True)
    return xc * lax.rsqrt(var + eps) * w + b


# ----------------------------------------------------------------------------
# the single fused model kernel
#   row ordering everywhere: sequence index n = b * num_assets + asset (b-major);
#   time-major row blocks of N for the encoder stages.
# ----------------------------------------------------------------------------
def _portfolio_kernel(x1_ref, bias_ref, pool_ref, mask_ref, strat_ref, risk_ref,
                      wb_ref, vp_ref, o_ref, *, woff, voff, num_heads):
    f32 = jnp.float32
    bf = jnp.bfloat16
    h = strat_ref.shape[1]                 # hidden_dim
    n = pool_ref.shape[1]                  # N = B * num_assets
    t_steps = x1_ref.shape[0] // n         # T = window_size // 4
    qn = t_steps * n
    hd = h // num_heads

    def W(name):                           # bf16 MXU weight (static slice, 16-row aligned)
        r, nr, nc = woff[name]
        return wb_ref[r:r + nr, 0:nc]

    def V(name):                           # f32 bias / vector param (8-row aligned row)
        r, nr, nc = voff[name]
        return vp_ref[r:r + 1, 0:nc]

    # ---- conv1 (both encoders, all 4 time phases) : ONE banded MXU dot ----
    x1 = x1_ref[...].astype(bf)                                        # (qn, 8*Cin_tot)
    c1 = _gelu(jnp.dot(x1, W('c1'), preferred_element_type=f32) + V('b_c1'))   # (qn, 8H)
    # MaxPool1d(2,2) #1 : phase pairs (4q,4q+1) and (4q+2,4q+3)
    stage1 = jnp.concatenate(
        [jnp.maximum(c1[:, 0:2 * h], c1[:, 2 * h:4 * h]),              # even  [ret|feat]
         jnp.maximum(c1[:, 4 * h:6 * h], c1[:, 6 * h:8 * h])],         # odd   [ret|feat]
        axis=1)                                                        # (qn, 4H)

    # ---- conv2 (both encoders, both pool phases) : ONE block-banded dot ----
    zpad = jnp.zeros((n, 4 * h), f32)
    padded = jnp.concatenate([zpad, stage1, zpad], axis=0)             # ((T+2)*N, 4H)
    x2cat = jnp.concatenate([padded[0:qn],                             # block q-1
                             padded[n:n + qn],                         # block q
                             padded[2 * n:2 * n + qn]], axis=1)        # block q+1 -> (qn, 12H)
    c2 = _gelu(jnp.dot(x2cat.astype(bf), W('c2'),
                       preferred_element_type=f32) + V('b_c2'))        # (qn, 4H)
    # MaxPool1d(2,2) #2
    seq = jnp.maximum(c2[:, 0:2 * h], c2[:, 2 * h:4 * h])              # (qn, 2H) [ret|feat]

    # ---- fused bidirectional LSTM (both encoders share one recurrence chain) ----
    gx = jnp.dot(seq.astype(bf), W('ih_f'), preferred_element_type=f32) + V('b_gf')  # (qn, 8H)
    w_hh = W('hh_f')
    hs = jnp.zeros((n, 2 * h), f32)
    cs = jnp.zeros((n, 2 * h), f32)
    # TODO(synk): switch to lax.fori_loop(..., unroll=k) once window_size grows past toy sizes.
    for t in range(t_steps):
        g = gx[t * n:(t + 1) * n, :] + jnp.dot(hs.astype(bf), w_hh,
                                               preferred_element_type=f32)
        s_if = jax.nn.sigmoid(g[:, 0:4 * h])         # i|f gates together (128 lanes)
        gg = jnp.tanh(g[:, 4 * h:6 * h])
        og = jax.nn.sigmoid(g[:, 6 * h:8 * h])
        cs = s_if[:, 2 * h:4 * h] * cs + s_if[:, 0:2 * h] * gg
        hs = og * jnp.tanh(cs)

    # reverse direction: lstm_out[:, -1, H:] is the backward cell's FIRST step
    # (zero initial state), so only x_{T-1} and input->hidden weights matter.
    gb = (jnp.dot(seq[(t_steps - 1) * n:t_steps * n, :].astype(bf), W('ih_b'),
                  preferred_element_type=f32) + V('b_gb'))
    hbwd = (jax.nn.sigmoid(gb[:, 6 * h:8 * h])
            * jnp.tanh(jax.nn.sigmoid(gb[:, 0:2 * h]) * jnp.tanh(gb[:, 4 * h:6 * h])))

    # ---- output_proj ∘ asset_combiner (folded host-side into two packed weights) ----
    x = (jnp.dot(hs.astype(bf), W('proj_f'), preferred_element_type=f32)
         + jnp.dot(hbwd.astype(bf), W('proj_b'), preferred_element_type=f32)
         + V('b_x'))                                                   # (N, H)

    # ---- cross-asset attention (batch via block-diagonal additive bias) ----
    # TODO(synk): at production B*A sizes make this a per-batch grid dimension
    # (dimension_semantics=("parallel",)) instead of an O((B*A)^2) bias.
    qkv = (jnp.dot(x.astype(bf), W('attn_in'), preferred_element_type=f32)
           + V('b_in'))                                                # (N, 3H), q pre-scaled
    bias = bias_ref[...]
    ctxs = []
    for hh in range(num_heads):
        q = qkv[:, hh * hd:(hh + 1) * hd]
        k = qkv[:, h + hh * hd:h + (hh + 1) * hd]
        v = qkv[:, 2 * h + hh * hd:2 * h + (hh + 1) * hd]
        s = jnp.dot(q, k.T, preferred_element_type=f32) + bias
        s = s - jnp.max(s, axis=-1, keepdims=True)
        e = jnp.exp(s)
        p = e / jnp.sum(e, axis=-1, keepdims=True)
        ctxs.append(jnp.dot(p, v, preferred_element_type=f32))
    ctx = jnp.concatenate(ctxs, axis=1)                                # (N, H)
    attn = (jnp.dot(ctx.astype(bf), W('attn_out'), preferred_element_type=f32)
            + V('b_out'))

    x1a = _layer_norm(x + attn, V('ln1_w'), V('ln1_b'))
    hm = _gelu(jnp.dot(x1a.astype(bf), W('ffn1'), preferred_element_type=f32)
               + V('b_ffn1'))
    ff = jnp.dot(hm.astype(bf), W('ffn2'), preferred_element_type=f32) + V('b_ffn2')
    x2 = _layer_norm(x1a + ff, V('ln2_w'), V('ln2_b'))                 # (N, H)

    # ---- portfolio head ----
    pooled = jnp.dot(pool_ref[...], x2, preferred_element_type=f32)    # (B, H) masked mean
    risk = risk_ref[...]                                               # (B, 1)
    rh = _gelu(risk * V('risk_w1') + V('risk_b1'))                     # (B, H/2)
    re = (jnp.dot(rh.astype(bf), W('risk2'), preferred_element_type=f32)
          + V('b_risk2'))                                              # (B, H)
    hc1 = _gelu(jnp.dot(pooled.astype(bf), W('comb1_p'), preferred_element_type=f32)
                + jnp.dot(strat_ref[...].astype(bf), W('comb1_s'),
                          preferred_element_type=f32)
                + jnp.dot(re.astype(bf), W('comb1_r'), preferred_element_type=f32)
                + V('b_comb1'))                                        # (B, 2H)
    # TODO(synk): Dropout(0.2) is eval-mode identity only.
    hc2 = _gelu(jnp.dot(hc1.astype(bf), W('comb2'), preferred_element_type=f32)
                + V('b_comb2'))                                        # (B, H)
    raw = jnp.dot(hc2.astype(bf), W('gen'), preferred_element_type=f32) + V('b_gen')
    m = mask_ref[...]
    mw = raw * m - 1e10 * (1.0 - m)
    mw = mw - jnp.max(mw, axis=1, keepdims=True)
    e = jnp.exp(mw)
    o_ref[...] = e / jnp.sum(e, axis=1, keepdims=True)


# ----------------------------------------------------------------------------
# host-side parameter packing (block-banded / block-diagonal fused weights)
# ----------------------------------------------------------------------------
def _np(x):
    return np.asarray(jax.device_get(x), dtype=np.float32)


class _Packer:
    """Row-stacks matrices into one lane-padded, row-aligned packed array."""

    def __init__(self, width, row_align):
        self.width = width
        self.align = row_align
        self.blocks = []
        self.off = {}
        self.rows = 0

    def add(self, name, mat):
        mat = np.asarray(mat, np.float32)
        if mat.ndim == 1:
            mat = mat[None, :]
        r, c = mat.shape
        assert c <= self.width, (name, c, self.width)
        rp = -(-r // self.align) * self.align
        buf = np.zeros((rp, self.width), np.float32)
        buf[:r, :c] = mat
        self.blocks.append(buf)
        self.off[name] = (self.rows, r, c)
        self.rows += rp

    def finalize(self, dtype):
        return jnp.asarray(np.concatenate(self.blocks, axis=0), dtype=dtype), self.off


def _conv1_band(w_ret, w_feat, h):
    """Banded weight: X (qn, 2*4*(Cr+Cf)) -> 4 phase outputs x [ret(H)|feat(H)]."""
    cin_r, cin_f = w_ret.shape[1], w_feat.shape[1]
    blk_w = 4 * (cin_r + cin_f)
    wmat = np.zeros((2 * blk_w, 4 * 2 * h), np.float32)
    for po in range(4):                       # conv output time 4q + po
        out_r = po * 2 * h
        for k in range(5):                    # tap -> global phase j = po + k
            b, p = divmod(po + k, 4)
            base = b * blk_w
            for c in range(cin_r):
                wmat[base + p * cin_r + c, out_r:out_r + h] = w_ret[:, c, k]
            for c in range(cin_f):
                wmat[base + 4 * cin_r + p * cin_f + c,
                     out_r + h:out_r + 2 * h] = w_feat[:, c, k]
    return wmat


def _conv2_band(w_ret, w_feat, h):
    """Banded weight: X2 (qn, 3*4H) -> [even: ret|feat | odd: ret|feat] (4H)."""
    wmat = np.zeros((3 * 4 * h, 4 * h), np.float32)
    # tap schedule: pool phase -> [(row-block shift d, even/odd)] for taps k=0..4
    sched = {0: [(-1, 0), (-1, 1), (0, 0), (0, 1), (1, 0)],
             1: [(-1, 1), (0, 0), (0, 1), (1, 0), (1, 1)]}
    for po in (0, 1):
        for k, (d, eo) in enumerate(sched[po]):
            base = (d + 1) * 4 * h + eo * 2 * h
            wmat[base:base + h, po * 2 * h:po * 2 * h + h] = w_ret[:, :, k].T
            wmat[base + h:base + 2 * h,
                 po * 2 * h + h:po * 2 * h + 2 * h] = w_feat[:, :, k].T
    return wmat


def _lstm_fused(w_ret, w_feat, h):
    """Block-diag (2H, 8H): fused hidden/input [ret|feat] -> gates [i_r i_f f_r f_f g_r g_f o_r o_f]."""
    w = np.zeros((2 * h, 8 * h), np.float32)
    for gi in range(4):
        w[0:h, gi * 2 * h:gi * 2 * h + h] = w_ret[gi * h:(gi + 1) * h, :].T
        w[h:2 * h, gi * 2 * h + h:(gi + 1) * 2 * h] = w_feat[gi * h:(gi + 1) * h, :].T
    return w


def _gate_bias(b_ret, b_feat, h):
    b = np.zeros((8 * h,), np.float32)
    for gi in range(4):
        b[gi * 2 * h:gi * 2 * h + h] = b_ret[gi * h:(gi + 1) * h]
        b[gi * 2 * h + h:(gi + 1) * 2 * h] = b_feat[gi * h:(gi + 1) * h]
    return b


def pack_params(params):
    h = HIDDEN
    ret, feat = params['return_encoder'], params['feature_encoder']
    pa = params['attn']
    scale = 1.0 / float(np.sqrt(h // NUM_HEADS))

    wp = _Packer(256, 16)     # bf16 MXU operands  (16-row aligned for bf16 tiling)
    vp = _Packer(256, 8)      # f32 bias / LN / vector params (8-row aligned)

    # fused encoders
    wp.add('c1', _conv1_band(_np(ret['conv1_w']), _np(feat['conv1_w']), h))
    wp.add('c2', _conv2_band(_np(ret['conv2_w']), _np(feat['conv2_w']), h))
    wp.add('ih_f', _lstm_fused(_np(ret['w_ih_f']), _np(feat['w_ih_f']), h))
    wp.add('hh_f', _lstm_fused(_np(ret['w_hh_f']), _np(feat['w_hh_f']), h))
    wp.add('ih_b', _lstm_fused(_np(ret['w_ih_b']), _np(feat['w_ih_b']), h))

    # output_proj folded into the asset combiner (both linear, no nonlinearity between)
    pr, pf = _np(ret['proj_w']), _np(feat['proj_w'])      # (H, 2H)
    cw = _np(params['combiner_w'])                        # (H, 2H)
    wp.add('proj_f', np.concatenate([pr[:, :h].T @ cw[:, :h].T,
                                     pf[:, :h].T @ cw[:, h:].T], axis=0))
    wp.add('proj_b', np.concatenate([pr[:, h:].T @ cw[:, :h].T,
                                     pf[:, h:].T @ cw[:, h:].T], axis=0))

    w_in = _np(pa['in_w']).T.copy()
    w_in[:, :h] *= scale                                  # fold 1/sqrt(head_dim) into q
    wp.add('attn_in', w_in)
    wp.add('attn_out', _np(pa['out_w']).T)
    wp.add('ffn1', _np(pa['ffn_w1']).T)
    wp.add('ffn2', _np(pa['ffn_w2']).T)
    wp.add('risk2', _np(params['risk_w2']).T)
    cw1 = _np(params['comb_w1'])                          # (2H, 3H)
    wp.add('comb1_p', cw1[:, 0:h].T)
    wp.add('comb1_s', cw1[:, h:2 * h].T)
    wp.add('comb1_r', cw1[:, 2 * h:3 * h].T)
    wp.add('comb2', _np(params['comb_w2']).T)
    wp.add('gen', _np(params['gen_w']).T)

    # vector / bias params (stay f32)
    vp.add('b_c1', np.tile(np.concatenate([_np(ret['conv1_b']), _np(feat['conv1_b'])]), 4))
    vp.add('b_c2', np.tile(np.concatenate([_np(ret['conv2_b']), _np(feat['conv2_b'])]), 2))
    vp.add('b_gf', _gate_bias(_np(ret['b_ih_f']) + _np(ret['b_hh_f']),
                              _np(feat['b_ih_f']) + _np(feat['b_hh_f']), h))
    vp.add('b_gb', _gate_bias(_np(ret['b_ih_b']) + _np(ret['b_hh_b']),
                              _np(feat['b_ih_b']) + _np(feat['b_hh_b']), h))
    vp.add('b_x', _np(ret['proj_b']) @ cw[:, :h].T + _np(feat['proj_b']) @ cw[:, h:].T
           + _np(params['combiner_b']))
    b_in = _np(pa['in_b']).copy()
    b_in[:h] *= scale
    vp.add('b_in', b_in)
    vp.add('b_out', _np(pa['out_b']))
    vp.add('ln1_w', _np(pa['ln1_w']))
    vp.add('ln1_b', _np(pa['ln1_b']))
    vp.add('b_ffn1', _np(pa['ffn_b1']))
    vp.add('b_ffn2', _np(pa['ffn_b2']))
    vp.add('ln2_w', _np(pa['ln2_w']))
    vp.add('ln2_b', _np(pa['ln2_b']))
    vp.add('risk_w1', _np(params['risk_w1'])[:, 0])
    vp.add('risk_b1', _np(params['risk_b1']))
    vp.add('b_risk2', _np(params['risk_b2']))
    vp.add('b_comb1', _np(params['comb_b1']))
    vp.add('b_comb2', _np(params['comb_b2']))
    vp.add('b_gen', _np(params['gen_b']))

    wb, woff = wp.finalize(jnp.bfloat16)
    vb, voff = vp.finalize(jnp.float32)
    arrays = dict(wb=wb, vp=vb,
                  strategy_table=jnp.asarray(_np(params['strategy_table'])))
    return arrays, woff, voff


# ----------------------------------------------------------------------------
# wrapper glue: input phase layout + pallas_call
# ----------------------------------------------------------------------------
def _make_phases(x):
    """(N, W, Cin) -> ((W/4 + 1) * N, 4*Cin): time zero-padded by 2 on each side and
    split into 4 phases (time mod 4); rows ordered (phase-block index, sequence)."""
    n, w, cin = x.shape
    assert w % 4 == 0, "window_size must be a multiple of 4"
    xpad = jnp.pad(x, ((0, 0), (2, 2), (0, 0)))                  # (N, W+4, Cin)
    xr = xpad.reshape(n, w // 4 + 1, 4, cin)
    xr = jnp.transpose(xr, (1, 0, 2, 3))                         # (T+1, N, 4, Cin)
    return xr.reshape((w // 4 + 1) * n, 4 * cin)


def build_forward(woff, voff, num_heads=NUM_HEADS):
    kernel = functools.partial(_portfolio_kernel, woff=woff, voff=voff,
                               num_heads=num_heads)

    @jax.jit
    def forward(packed, returns, features, mask, strategy, risk_tolerance):
        b_sz, w_len, a = returns.shape
        f_dim = features.shape[-1]
        n = b_sz * a
        t_steps = w_len // 4
        qn = t_steps * n

        # per-asset sequences, row index = b * num_assets + asset (b-major)
        ret_seq = jnp.transpose(returns, (0, 2, 1)).reshape(n, w_len, 1)
        feat_seq = jnp.transpose(features, (0, 2, 1, 3)).reshape(n, w_len, f_dim)
        # TODO(synk): at production sizes move this pad/transpose and the block-diag
        # bias into the kernel via a batch grid + index_map-driven loads.
        ph = jnp.concatenate([_make_phases(ret_seq.astype(jnp.float32)),
                              _make_phases(feat_seq.astype(jnp.float32))], axis=1)
        x1cat = jnp.concatenate([ph[0:qn], ph[n:n + qn]], axis=1)   # (T*N, 8*(1+F))

        maskf = mask.astype(jnp.float32)
        riskf = risk_tolerance.astype(jnp.float32).reshape(b_sz, 1)

        # block-diagonal additive attention bias (per-batch softmax over the A assets)
        bvec = jnp.repeat(jnp.arange(b_sz), a)
        attn_bias = jnp.where(bvec[:, None] == bvec[None, :], 0.0, -1e9).astype(jnp.float32)

        # masked-mean pooling as a (B, N) matmul:  pooled = pool_mat @ x2
        denom = jnp.sum(maskf, axis=1, keepdims=True) + 1e-10
        pool_mat = (jnp.eye(b_sz, dtype=jnp.float32)[:, :, None]
                    * (maskf / denom)[None, :, :]).reshape(b_sz, n)

        # strategy embedding lookup (argmax + gather are glue, matching torch semantics)
        strat_idx = jnp.argmax(strategy, axis=1)
        strat_emb = packed['strategy_table'][strat_idx]

        return pl.pallas_call(
            kernel,
            out_shape=jax.ShapeDtypeStruct((b_sz, a), jnp.float32),
        )(x1cat, attn_bias, pool_mat, maskf, strat_emb, riskf,
          packed['wb'], packed['vp'])

    return forward


# ----------------------------------------------------------------------------
# pure-JAX reference (non-Pallas) used only for the self-check in __main__
# ----------------------------------------------------------------------------
def _reference_forward(params, returns, features, mask, strategy, risk_tolerance):
    hp = jax.lax.Precision.HIGHEST
    h = HIDDEN
    b_sz, w_len, a = returns.shape
    f_dim = features.shape[-1]

    def conv1d(x, w, b):                       # x (N, L, C), w (H, C, 5)
        xp = jnp.pad(x, ((0, 0), (2, 2), (0, 0)))
        cols = jnp.stack([xp[:, k:k + x.shape[1], :] for k in range(5)], axis=2)
        return jnp.einsum('nlkc,hck->nlh', cols, w, precision=hp) + b

    def encoder(p, x):
        y = _gelu(conv1d(x, p['conv1_w'], p['conv1_b']))
        y = jnp.maximum(y[:, 0::2, :], y[:, 1::2, :])
        y = _gelu(conv1d(y, p['conv2_w'], p['conv2_b']))
        y = jnp.maximum(y[:, 0::2, :], y[:, 1::2, :])            # (N, T, H)
        t_steps = y.shape[1]
        hs = jnp.zeros((y.shape[0], h), jnp.float32)
        cs = jnp.zeros((y.shape[0], h), jnp.float32)
        for t in range(t_steps):
            g = (jnp.dot(y[:, t, :], p['w_ih_f'].T, precision=hp) + p['b_ih_f']
                 + jnp.dot(hs, p['w_hh_f'].T, precision=hp) + p['b_hh_f'])
            i = jax.nn.sigmoid(g[:, :h]); f = jax.nn.sigmoid(g[:, h:2 * h])
            gg = jnp.tanh(g[:, 2 * h:3 * h]); o = jax.nn.sigmoid(g[:, 3 * h:])
            cs = f * cs + i * gg
            hs = o * jnp.tanh(cs)
        gb = (jnp.dot(y[:, t_steps - 1, :], p['w_ih_b'].T, precision=hp)
              + p['b_ih_b'] + p['b_hh_b'])
        hb = (jax.nn.sigmoid(gb[:, 3 * h:])
              * jnp.tanh(jax.nn.sigmoid(gb[:, :h]) * jnp.tanh(gb[:, 2 * h:3 * h])))
        last = jnp.concatenate([hs, hb], axis=1)
        return jnp.dot(last, p['proj_w'].T, precision=hp) + p['proj_b']

    n = b_sz * a
    ret_seq = jnp.transpose(returns, (0, 2, 1)).reshape(n, w_len, 1)
    feat_seq = jnp.transpose(features, (0, 2, 1, 3)).reshape(n, w_len, f_dim)
    ret_emb = encoder(params['return_encoder'], ret_seq)
    feat_emb = encoder(params['feature_encoder'], feat_seq)
    x = (jnp.dot(jnp.concatenate([ret_emb, feat_emb], axis=1),
                 params['combiner_w'].T, precision=hp)
         + params['combiner_b']).reshape(b_sz, a, h)

    pa = params['attn']
    qkv = jnp.einsum('bah,kh->bak', x, pa['in_w'], precision=hp) + pa['in_b']
    hd = h // NUM_HEADS
    ctxs = []
    for hh in range(NUM_HEADS):
        q = qkv[..., hh * hd:(hh + 1) * hd] / jnp.sqrt(float(hd))
        k = qkv[..., h + hh * hd:h + (hh + 1) * hd]
        v = qkv[..., 2 * h + hh * hd:2 * h + (hh + 1) * hd]
        s = jnp.einsum('bqd,bkd->bqk', q, k, precision=hp)
        p_attn = jax.nn.softmax(s, axis=-1)
        ctxs.append(jnp.einsum('bqk,bkd->bqd', p_attn, v, precision=hp))
    ctx = jnp.concatenate(ctxs, axis=-1)
    attn_out = jnp.einsum('bah,kh->bak', ctx, pa['out_w'], precision=hp) + pa['out_b']

    def ln(z, wt, bs):
        mu = z.mean(-1, keepdims=True)
        va = ((z - mu) ** 2).mean(-1, keepdims=True)
        return (z - mu) / jnp.sqrt(va + 1e-5) * wt + bs

    x1 = ln(x + attn_out, pa['ln1_w'], pa['ln1_b'])
    ffo = (jnp.einsum('bah,kh->bak',
                      _gelu(jnp.einsum('bah,kh->bak', x1, pa['ffn_w1'], precision=hp)
                            + pa['ffn_b1']),
                      pa['ffn_w2'], precision=hp) + pa['ffn_b2'])
    x2 = ln(x1 + ffo, pa['ln2_w'], pa['ln2_b'])

    strat_idx = jnp.argmax(strategy, axis=1)
    s_emb = params['strategy_table'][strat_idx]
    r_emb = (jnp.dot(_gelu(jnp.dot(risk_tolerance, params['risk_w1'].T, precision=hp)
                           + params['risk_b1']),
                     params['risk_w2'].T, precision=hp) + params['risk_b2'])
    maskf = mask.astype(jnp.float32)
    pooled = (x2 * maskf[:, :, None]).sum(1) / (maskf.sum(1, keepdims=True) + 1e-10)
    comb = jnp.concatenate([pooled, s_emb, r_emb], axis=1)
    hh1 = _gelu(jnp.dot(comb, params['comb_w1'].T, precision=hp) + params['comb_b1'])
    hh2 = _gelu(jnp.dot(hh1, params['comb_w2'].T, precision=hp) + params['comb_b2'])
    raw = jnp.dot(hh2, params['gen_w'].T, precision=hp) + params['gen_b']
    mw = raw * maskf - 1e10 * (1.0 - maskf)
    return jax.nn.softmax(mw, axis=1)


# ----------------------------------------------------------------------------
# deterministic parameter init
# ----------------------------------------------------------------------------
def init_params(key, h=HIDDEN, a=4, f=4, s=3):
    keys = iter(jax.random.split(key, 64))

    def nrm(shape, scale=0.1):
        return (scale * jax.random.normal(next(keys), shape)).astype(jnp.float32)

    def encoder(cin):
        # NOTE: reverse-direction hidden->hidden LSTM weights are omitted because
        # lstm_out[:, -1, H:] only depends on the first backward step (zero hidden state).
        return dict(
            conv1_w=nrm((h, cin, 5)), conv1_b=nrm((h,)),
            conv2_w=nrm((h, h, 5)), conv2_b=nrm((h,)),
            w_ih_f=nrm((4 * h, h)), w_hh_f=nrm((4 * h, h)),
            b_ih_f=nrm((4 * h,)), b_hh_f=nrm((4 * h,)),
            w_ih_b=nrm((4 * h, h)), b_ih_b=nrm((4 * h,)), b_hh_b=nrm((4 * h,)),
            proj_w=nrm((h, 2 * h)), proj_b=nrm((h,)),
        )

    return dict(
        return_encoder=encoder(1),
        feature_encoder=encoder(f),
        combiner_w=nrm((h, 2 * h)), combiner_b=nrm((h,)),
        attn=dict(
            in_w=nrm((3 * h, h)), in_b=nrm((3 * h,)),
            out_w=nrm((h, h)), out_b=nrm((h,)),
            ln1_w=jnp.ones((h,), jnp.float32), ln1_b=jnp.zeros((h,), jnp.float32),
            ffn_w1=nrm((4 * h, h)), ffn_b1=nrm((4 * h,)),
            ffn_w2=nrm((h, 4 * h)), ffn_b2=nrm((h,)),
            ln2_w=jnp.ones((h,), jnp.float32), ln2_b=jnp.zeros((h,), jnp.float32),
        ),
        strategy_table=nrm((s, h)),
        risk_w1=nrm((h // 2, 1)), risk_b1=nrm((h // 2,)),
        risk_w2=nrm((h, h // 2)), risk_b2=nrm((h,)),
        comb_w1=nrm((2 * h, 3 * h)), comb_b1=nrm((2 * h,)),
        comb_w2=nrm((h, 2 * h)), comb_b2=nrm((h,)),
        gen_w=nrm((a, h)), gen_b=nrm((a,)),
    )


# ----------------------------------------------------------------------------
if __name__ == "__main__":
    key = jax.random.PRNGKey(0)
    kp, kr, kf, krisk = jax.random.split(key, 4)

    B, W, A, F, S = 2, 16, 4, 4, 3   # batch, window_size, num_assets, feature_dim, strategies

    params = init_params(kp, h=HIDDEN, a=A, f=F, s=S)
    arrays, woff, voff = pack_params(params)
    forward = build_forward(woff, voff)

    returns = (0.01 * jax.random.normal(kr, (B, W, A))).astype(jnp.float32)
    features = jax.random.normal(kf, (B, W, A, F), dtype=jnp.float32)
    mask = jnp.ones((B, A), jnp.float32).at[1, A - 1].set(0.0)
    strategy = jax.nn.one_hot(jnp.array([0, 2]), S, dtype=jnp.float32)
    risk = jax.random.uniform(krisk, (B, 1), dtype=jnp.float32)

    out = jax.block_until_ready(forward(arrays, returns, features, mask, strategy, risk))

    assert out.shape == (B, A)
    assert bool(jnp.all(jnp.isfinite(out)))
    assert bool(jnp.all(jnp.abs(jnp.sum(out, axis=1) - 1.0) < 1e-4))

    # cross-check against a plain-JAX f32 reference of the same forward pass
    ref = jax.jit(_reference_forward)(params, returns, features, mask, strategy, risk)
    max_err = float(jnp.max(jnp.abs(out - ref)))
    assert max_err < 2e-2, max_err

    print("KERNEL_OK")
</pallas_src>

<mosaic_0001>
module attributes {stable_mosaic.version = 11 : i64} {
  func.func @_portfolio_kernel(%arg0: memref<32x40xf32, #tpu.memory_space<vmem>>, %arg1: memref<8x8xf32, #tpu.memory_space<vmem>>, %arg2: memref<2x8xf32, #tpu.memory_space<vmem>>, %arg3: memref<2x4xf32, #tpu.memory_space<vmem>>, %arg4: memref<2x32xf32, #tpu.memory_space<vmem>>, %arg5: memref<2x1xf32, #tpu.memory_space<vmem>>, %arg6: memref<1184x256xbf16, #tpu.memory_space<vmem>>, %arg7: memref<152x256xf32, #tpu.memory_space<vmem>>, %arg8: memref<2x4xf32, #tpu.memory_space<vmem>>) attributes {dimension_semantics = [], scalar_prefetch = 0 : i64, scratch_operands = 0 : i64, tpu.core_type = #tpu.core_type<tc>} {
    %c0 = arith.constant 0 : index
    %c0_0 = arith.constant 0 : index
    %0 = vector.load %arg0[%c0, %c0_0] : memref<32x40xf32, #tpu.memory_space<vmem>>, vector<32x40xf32>
    %1 = arith.truncf %0 : vector<32x40xf32> to vector<32x40xbf16>
    %c0_1 = arith.constant 0 : index
    %c0_2 = arith.constant 0 : index
    %2 = vector.load %arg6[%c0_1, %c0_2] : memref<1184x256xbf16, #tpu.memory_space<vmem>>, vector<40x256xbf16>
    %cst = arith.constant dense<0.000000e+00> : vector<32x256xf32>
    %3 = tpu.matmul %1, %2, %cst {dimension_numbers = #tpu.dot_dimension_numbers<[1], [0], [0], [1], [0, 0, 1, 1], [], []>} : vector<32x40xbf16>, vector<40x256xbf16>, vector<32x256xf32> -> vector<32x256xf32>
    %c0_3 = arith.constant 0 : index
    %c0_4 = arith.constant 0 : index
    %4 = vector.load %arg7[%c0_3, %c0_4] : memref<152x256xf32, #tpu.memory_space<vmem>>, vector<1x256xf32>
    %5 = vector.broadcast %4 : vector<1x256xf32> to vector<32x256xf32>
    %6 = arith.addf %3, %5 : vector<32x256xf32>
    %cst_5 = arith.constant 5.000000e-01 : f32
    %7 = vector.broadcast %cst_5 : f32 to vector<32x256xf32>
    %8 = arith.mulf %7, %6 : vector<32x256xf32>
    %cst_6 = arith.constant 0.707106769 : f32
    %9 = vector.broadcast %cst_6 : f32 to vector<32x256xf32>
    %10 = arith.mulf %6, %9 : vector<32x256xf32>
    %11 = math.absf %10 : vector<32x256xf32>
    %cst_7 = arith.constant 0.327591091 : f32
    %12 = vector.broadcast %cst_7 : f32 to vector<32x256xf32>
    %13 = arith.mulf %12, %11 : vector<32x256xf32>
    %cst_8 = arith.constant 1.000000e+00 : f32
    %14 = vector.broadcast %cst_8 : f32 to vector<32x256xf32>
    %15 = arith.addf %14, %13 : vector<32x256xf32>
    %cst_9 = arith.constant 1.000000e+00 : f32
    %16 = vector.broadcast %cst_9 : f32 to vector<32x256xf32>
    %17 = arith.divf %16, %15 : vector<32x256xf32>
    %cst_10 = arith.constant 1.06140542 : f32
    %18 = vector.broadcast %cst_10 : f32 to vector<32x256xf32>
    %19 = arith.mulf %18, %17 : vector<32x256xf32>
    %cst_11 = arith.constant -1.45315206 : f32
    %20 = vector.broadcast %cst_11 : f32 to vector<32x256xf32>
    %21 = arith.addf %19, %20 : vector<32x256xf32>
    %22 = arith.mulf %21, %17 : vector<32x256xf32>
    %cst_12 = arith.constant 1.42141378 : f32
    %23 = vector.broadcast %cst_12 : f32 to vector<32x256xf32>
    %24 = arith.addf %22, %23 : vector<32x256xf32>
    %25 = arith.mulf %24, %17 : vector<32x256xf32>
    %cst_13 = arith.constant -0.284496725 : f32
    %26 = vector.broadcast %cst_13 : f32 to vector<32x256xf32>
    %27 = arith.addf %25, %26 : vector<32x256xf32>
    %28 = arith.mulf %27, %17 : vector<32x256xf32>
    %cst_14 = arith.constant 0.254829586 : f32
    %29 = vector.broadcast %cst_14 : f32 to vector<32x256xf32>
    %30 = arith.addf %28, %29 : vector<32x256xf32>
    %31 = arith.mulf %30, %17 : vector<32x256xf32>
    %cst_15 = arith.constant 0.000000e+00 : f32
    %32 = vector.broadcast %cst_15 : f32 to vector<32x256xf32>
    %33 = arith.subf %32, %11 : vector<32x256xf32>
    %34 = arith.mulf %33, %11 : vector<32x256xf32>
    %35 = math.exp %34 : vector<32x256xf32>
    %36 = arith.mulf %31, %35 : vector<32x256xf32>
    %cst_16 = arith.constant 1.000000e+00 : f32
    %37 = vector.broadcast %cst_16 : f32 to vector<32x256xf32>
    %38 = arith.subf %37, %36 : vector<32x256xf32>
    %cst_17 = arith.constant 0.000000e+00 : f32
    %39 = vector.broadcast %cst_17 : f32 to vector<32x256xf32>
    %40 = arith.cmpf oge, %10, %39 : vector<32x256xf32>
    %cst_18 = arith.constant 0.000000e+00 : f32
    %41 = vector.broadcast %cst_18 : f32 to vector<32x256xf32>
    %42 = arith.subf %41, %38 : vector<32x256xf32>
    %43 = arith.select %40, %38, %42 : vector<32x256xi1>, vector<32x256xf32>
    %cst_19 = arith.constant 1.000000e+00 : f32
    %44 = vector.broadcast %cst_19 : f32 to vector<32x256xf32>
    %45 = arith.addf %44, %43 : vector<32x256xf32>
    %46 = arith.mulf %8, %45 : vector<32x256xf32>
    %47 = vector.extract_strided_slice %46 {offsets = [0, 0], sizes = [32, 64], strides = [1, 1]} : vector<32x256xf32> to vector<32x64xf32>
    %48 = vector.extract_strided_slice %46 {offsets = [0, 64], sizes = [32, 64], strides = [1, 1]} : vector<32x256xf32> to vector<32x64xf32>
    %49 = arith.maximumf %47, %48 : vector<32x64xf32>
    %50 = vector.extract_strided_slice %46 {offsets = [0, 128], sizes = [32, 64], strides = [1, 1]} : vector<32x256xf32> to vector<32x64xf32>
    %51 = vector.extract_strided_slice %46 {offsets = [0, 192], sizes = [32, 64], strides = [1, 1]} : vector<32x256xf32> to vector<32x64xf32>
    %52 = arith.maximumf %50, %51 : vector<32x64xf32>
    %53 = tpu.concatenate %49, %52 in 1 : vector<32x64xf32>, vector<32x64xf32> -> vector<32x128xf32>
    %cst_20 = arith.constant 0.000000e+00 : f32
    %54 = vector.broadcast %cst_20 : f32 to vector<8x128xf32>
    %55 = tpu.concatenate %54, %53, %54 in 0 : vector<8x128xf32>, vector<32x128xf32>, vector<8x128xf32> -> vector<48x128xf32>
    %56 = vector.extract_strided_slice %55 {offsets = [0, 0], sizes = [32, 128], strides = [1, 1]} : vector<48x128xf32> to vector<32x128xf32>
    %57 = vector.extract_strided_slice %55 {offsets = [8, 0], sizes = [32, 128], strides = [1, 1]} : vector<48x128xf32> to vector<32x128xf32>
    %58 = vector.extract_strided_slice %55 {offsets = [16, 0], sizes = [32, 128], strides = [1, 1]} : vector<48x128xf32> to vector<32x128xf32>
    %59 = tpu.concatenate %56, %57, %58 in 1 : vector<32x128xf32>, vector<32x128xf32>, vector<32x128xf32> -> vector<32x384xf32>
    %60 = arith.truncf %59 : vector<32x384xf32> to vector<32x384xbf16>
    %c48 = arith.constant 48 : index
    %c0_21 = arith.constant 0 : index
    %61 = vector.load %arg6[%c48, %c0_21] : memref<1184x256xbf16, #tpu.memory_space<vmem>>, vector<384x128xbf16>
    %cst_22 = arith.constant dense<0.000000e+00> : vector<32x128xf32>
    %62 = tpu.matmul %60, %61, %cst_22 {dimension_numbers = #tpu.dot_dimension_numbers<[1], [0], [0], [1], [0, 0, 1, 1], [], []>} : vector<32x384xbf16>, vector<384x128xbf16>, vector<32x128xf32> -> vector<32x128xf32>
    %c8 = arith.constant 8 : index
    %c0_23 = arith.constant 0 : index
    %63 = vector.load %arg7[%c8, %c0_23] : memref<152x256xf32, #tpu.memory_space<vmem>>, vector<1x128xf32>
    %64 = vector.broadcast %63 : vector<1x128xf32> to vector<32x128xf32>
    %65 = arith.addf %62, %64 : vector<32x128xf32>
    %cst_24 = arith.constant 5.000000e-01 : f32
    %66 = vector.broadcast %cst_24 : f32 to vector<32x128xf32>
    %67 = arith.mulf %66, %65 : vector<32x128xf32>
    %cst_25 = arith.constant 0.707106769 : f32
    %68 = vector.broadcast %cst_25 : f32 to vector<32x128xf32>
    %69 = arith.mulf %65, %68 : vector<32x128xf32>
    %70 = math.absf %69 : vector<32x128xf32>
    %cst_26 = arith.constant 0.327591091 : f32
    %71 = vector.broadcast %cst_26 : f32 to vector<32x128xf32>
    %72 = arith.mulf %71, %70 : vector<32x128xf32>
    %cst_27 = arith.constant 1.000000e+00 : f32
    %73 = vector.broadcast %cst_27 : f32 to vector<32x128xf32>
    %74 = arith.addf %73, %72 : vector<32x128xf32>
    %cst_28 = arith.constant 1.000000e+00 : f32
    %75 = vector.broadcast %cst_28 : f32 to vector<32x128xf32>
    %76 = arith.divf %75, %74 : vector<32x128xf32>
    %cst_29 = arith.constant 1.06140542 : f32
    %77 = vector.broadcast %cst_29 : f32 to vector<32x128xf32>
    %78 = arith.mulf %77, %76 : vector<32x128xf32>
    %cst_30 = arith.constant -1.45315206 : f32
    %79 = vector.broadcast %cst_30 : f32 to vector<32x128xf32>
    %80 = arith.addf %78, %79 : vector<32x128xf32>
    %81 = arith.mulf %80, %76 : vector<32x128xf32>
    %cst_31 = arith.constant 1.42141378 : f32
    %82 = vector.broadcast %cst_31 : f32 to vector<32x128xf32>
    %83 = arith.addf %81, %82 : vector<32x128xf32>
    %84 = arith.mulf %83, %76 : vector<32x128xf32>
    %cst_32 = arith.constant -0.284496725 : f32
    %85 = vector.broadcast %cst_32 : f32 to vector<32x128xf32>
    %86 = arith.addf %84, %85 : vector<32x128xf32>
    %87 = arith.mulf %86, %76 : vector<32x128xf32>
    %cst_33 = arith.constant 0.254829586 : f32
    %88 = vector.broadcast %cst_33 : f32 to vector<32x128xf32>
    %89 = arith.addf %87, %88 : vector<32x128xf32>
    %90 = arith.mulf %89, %76 : vector<32x128xf32>
    %cst_34 = arith.constant 0.000000e+00 : f32
    %91 = vector.broadcast %cst_34 : f32 to vector<32x128xf32>
    %92 = arith.subf %91, %70 : vector<32x128xf32>
    %93 = arith.mulf %92, %70 : vector<32x128xf32>
    %94 = math.exp %93 : vector<32x128xf32>
    %95 = arith.mulf %90, %94 : vector<32x128xf32>
    %cst_35 = arith.constant 1.000000e+00 : f32
    %96 = vector.broadcast %cst_35 : f32 to vector<32x128xf32>
    %97 = arith.subf %96, %95 : vector<32x128xf32>
    %cst_36 = arith.constant 0.000000e+00 : f32
    %98 = vector.broadcast %cst_36 : f32 to vector<32x128xf32>
    %99 = arith.cmpf oge, %69, %98 : vector<32x128xf32>
    %cst_37 = arith.constant 0.000000e+00 : f32
    %100 = vector.broadcast %cst_37 : f32 to vector<32x128xf32>
    %101 = arith.subf %100, %97 : vector<32x128xf32>
    %102 = arith.select %99, %97, %101 : vector<32x128xi1>, vector<32x128xf32>
    %cst_38 = arith.constant 1.000000e+00 : f32
    %103 = vector.broadcast %cst_38 : f32 to vector<32x128xf32>
    %104 = arith.addf %103, %102 : vector<32x128xf32>
    %105 = arith.mulf %67, %104 : vector<32x128xf32>
    %106 = vector.extract_strided_slice %105 {offsets = [0, 0], sizes = [32, 64], strides = [1, 1]} : vector<32x128xf32> to vector<32x64xf32>
    %107 = vector.extract_strided_slice %105 {offsets = [0, 64], sizes = [32, 64], strides = [1, 1]} : vector<32x128xf32> to vector<32x64xf32>
    %108 = arith.maximumf %106, %107 : vector<32x64xf32>
    %109 = arith.truncf %108 : vector<32x64xf32> to vector<32x64xbf16>
    %c432 = arith.constant 432 : index
    %c0_39 = arith.constant 0 : index
    %110 = vector.load %arg6[%c432, %c0_39] : memref<1184x256xbf16, #tpu.memory_space<vmem>>, vector<64x256xbf16>
    %cst_40 = arith.constant dense<0.000000e+00> : vector<32x256xf32>
    %111 = tpu.matmul %109, %110, %cst_40 {dimension_numbers = #tpu.dot_dimension_numbers<[1], [0], [0], [1], [0, 0, 1, 1], [], []>} : vector<32x64xbf16>, vector<64x256xbf16>, vector<32x256xf32> -> vector<32x256xf32>
    %c16 = arith.constant 16 : index
    %c0_41 = arith.constant 0 : index
    %112 = vector.load %arg7[%c16, %c0_41] : memref<152x256xf32, #tpu.memory_space<vmem>>, vector<1x256xf32>
    %113 = vector.broadcast %112 : vector<1x256xf32> to vector<32x256xf32>
    %114 = arith.addf %111, %113 : vector<32x256xf32>
    %c496 = arith.constant 496 : index
    %c0_42 = arith.constant 0 : index
    %115 = vector.load %arg6[%c496, %c0_42] : memref<1184x256xbf16, #tpu.memory_space<vmem>>, vector<64x256xbf16>
    %cst_43 = arith.constant 0.000000e+00 : f32
    %116 = vector.broadcast %cst_43 : f32 to vector<8x64xf32>
    %cst_44 = arith.constant 0.000000e+00 : f32
    %117 = vector.broadcast %cst_44 : f32 to vector<8x64xf32>
    %118 = vector.extract_strided_slice %114 {offsets = [0, 0], sizes = [8, 256], strides = [1, 1]} : vector<32x256xf32> to vector<8x256xf32>
    %119 = arith.truncf %116 : vector<8x64xf32> to vector<8x64xbf16>
    %cst_45 = arith.constant dense<0.000000e+00> : vector<8x256xf32>
    %120 = tpu.matmul %119, %115, %cst_45 {dimension_numbers = #tpu.dot_dimension_numbers<[1], [0], [0], [1], [0, 0, 1, 1], [], []>} : vector<8x64xbf16>, vector<64x256xbf16>, vector<8x256xf32> -> vector<8x256xf32>
    %121 = arith.addf %118, %120 : vector<8x256xf32>
    %122 = vector.extract_strided_slice %121 {offsets = [0, 0], sizes = [8, 128], strides = [1, 1]} : vector<8x256xf32> to vector<8x128xf32>
    %123 = arith.negf %122 : vector<8x128xf32>
    %124 = math.exp %123 : vector<8x128xf32>
    %cst_46 = arith.constant 1.000000e+00 : f32
    %125 = vector.broadcast %cst_46 : f32 to vector<8x128xf32>
    %126 = arith.addf %125, %124 : vector<8x128xf32>
    %127 = arith.divf %125, %126 : vector<8x128xf32>
    %128 = vector.extract_strided_slice %121 {offsets = [0, 128], sizes = [8, 64], strides = [1, 1]} : vector<8x256xf32> to vector<8x64xf32>
    %129 = math.tanh %128 : vector<8x64xf32>
    %130 = vector.extract_strided_slice %121 {offsets = [0, 192], sizes = [8, 64], strides = [1, 1]} : vector<8x256xf32> to vector<8x64xf32>
    %131 = arith.negf %130 : vector<8x64xf32>
    %132 = math.exp %131 : vector<8x64xf32>
    %cst_47 = arith.constant 1.000000e+00 : f32
    %133 = vector.broadcast %cst_47 : f32 to vector<8x64xf32>
    %134 = arith.addf %133, %132 : vector<8x64xf32>
    %135 = arith.divf %133, %134 : vector<8x64xf32>
    %136 = vector.extract_strided_slice %127 {offsets = [0, 64], sizes = [8, 64], strides = [1, 1]} : vector<8x128xf32> to vector<8x64xf32>
    %137 = arith.mulf %136, %117 : vector<8x64xf32>
    %138 = vector.extract_strided_slice %127 {offsets = [0, 0], sizes = [8, 64], strides = [1, 1]} : vector<8x128xf32> to vector<8x64xf32>
    %139 = arith.mulf %138, %129 : vector<8x64xf32>
    %140 = arith.addf %137, %139 : vector<8x64xf32>
    %141 = math.tanh %140 : vector<8x64xf32>
    %142 = arith.mulf %135, %141 : vector<8x64xf32>
    %143 = vector.extract_strided_slice %114 {offsets = [8, 0], sizes = [8, 256], strides = [1, 1]} : vector<32x256xf32> to vector<8x256xf32>
    %144 = arith.truncf %142 : vector<8x64xf32> to vector<8x64xbf16>
    %cst_48 = arith.constant dense<0.000000e+00> : vector<8x256xf32>
    %145 = tpu.matmul %144, %115, %cst_48 {dimension_numbers = #tpu.dot_dimension_numbers<[1], [0], [0], [1], [0, 0, 1, 1], [], []>} : vector<8x64xbf16>, vector<64x256xbf16>, vector<8x256xf32> -> vector<8x256xf32>
    %146 = arith.addf %143, %145 : vector<8x256xf32>
    %147 = vector.extract_strided_slice %146 {offsets = [0, 0], sizes = [8, 128], strides = [1, 1]} : vector<8x256xf32> to vector<8x128xf32>
    %148 = arith.negf %147 : vector<8x128xf32>
    %149 = math.exp %148 : vector<8x128xf32>
    %cst_49 = arith.constant 1.000000e+00 : f32
    %150 = vector.broadcast %cst_49 : f32 to vector<8x128xf32>
    %151 = arith.addf %150, %149 : vector<8x128xf32>
    %152 = arith.divf %150, %151 : vector<8x128xf32>
    %153 = vector.extract_strided_slice %146 {offsets = [0, 128], sizes = [8, 64], strides = [1, 1]} : vector<8x256xf32> to vector<8x64xf32>
    %154 = math.tanh %153 : vector<8x64xf32>
    %155 = vector.extract_strided_slice %146 {offsets = [0, 192], sizes = [8, 64], strides = [1, 1]} : vector<8x256xf32> to vector<8x64xf32>
    %156 = arith.negf %155 : vector<8x64xf32>
    %157 = math.exp %156 : vector<8x64xf32>
    %cst_50 = arith.constant 1.000000e+00 : f32
    %158 = vector.broadcast %cst_50 : f32 to vector<8x64xf32>
    %159 = arith.addf %158, %157 : vector<8x64xf32>
    %160 = arith.divf %158, %159 : vector<8x64xf32>
    %161 = vector.extract_strided_slice %152 {offsets = [0, 64], sizes = [8, 64], strides = [1, 1]} : vector<8x128xf32> to vector<8x64xf32>
    %162 = arith.mulf %161, %140 : vector<8x64xf32>
    %163 = vector.extract_strided_slice %152 {offsets = [0, 0], sizes = [8, 64], strides = [1, 1]} : vector<8x128xf32> to vector<8x64xf32>
    %164 = arith.mulf %163, %154 : vector<8x64xf32>
    %165 = arith.addf %162, %164 : vector<8x64xf32>
    %166 = math.tanh %165 : vector<8x64xf32>
    %167 = arith.mulf %160, %166 : vector<8x64xf32>
    %168 = vector.extract_strided_slice %114 {offsets = [16, 0], sizes = [8, 256], strides = [1, 1]} : vector<32x256xf32> to vector<8x256xf32>
    %169 = arith.truncf %167 : vector<8x64xf32> to vector<8x64xbf16>
    %cst_51 = arith.constant dense<0.000000e+00> : vector<8x256xf32>
    %170 = tpu.matmul %169, %115, %cst_51 {dimension_numbers = #tpu.dot_dimension_numbers<[1], [0], [0], [1], [0, 0, 1, 1], [], []>} : vector<8x64xbf16>, vector<64x256xbf16>, vector<8x256xf32> -> vector<8x256xf32>
    %171 = arith.addf %168, %170 : vector<8x256xf32>
    %172 = vector.extract_strided_slice %171 {offsets = [0, 0], sizes = [8, 128], strides = [1, 1]} : vector<8x256xf32> to vector<8x128xf32>
    %173 = arith.negf %172 : vector<8x128xf32>
    %174 = math.exp %173 : vector<8x128xf32>
    %cst_52 = arith.constant 1.000000e+00 : f32
    %175 = vector.broadcast %cst_52 : f32 to vector<8x128xf32>
    %176 = arith.addf %175, %174 : vector<8x128xf32>
    %177 = arith.divf %175, %176 : vector<8x128xf32>
    %178 = vector.extract_strided_slice %171 {offsets = [0, 128], sizes = [8, 64], strides = [1, 1]} : vector<8x256xf32> to vector<8x64xf32>
    %179 = math.tanh %178 : vector<8x64xf32>
    %180 = vector.extract_strided_slice %171 {offsets = [0, 192], sizes = [8, 64], strides = [1, 1]} : vector<8x256xf32> to vector<8x64xf32>
    %181 = arith.negf %180 : vector<8x64xf32>
    %182 = math.exp %181 : vector<8x64xf32>
    %cst_53 = arith.constant 1.000000e+00 : f32
    %183 = vector.broadcast %cst_53 : f32 to vector<8x64xf32>
    %184 = arith.addf %183, %182 : vector<8x64xf32>
    %185 = arith.divf %183, %184 : vector<8x64xf32>
    %186 = vector.extract_strided_slice %177 {offsets = [0, 64], sizes = [8, 64], strides = [1, 1]} : vector<8x128xf32> to vector<8x64xf32>
    %187 = arith.mulf %186, %165 : vector<8x64xf32>
    %188 = vector.extract_strided_slice %177 {offsets = [0, 0], sizes = [8, 64], strides = [1, 1]} : vector<8x128xf32> to vector<8x64xf32>
    %189 = arith.mulf %188, %179 : vector<8x64xf32>
    %190 = arith.addf %187, %189 : vector<8x64xf32>
    %191 = math.tanh %190 : vector<8x64xf32>
    %192 = arith.mulf %185, %191 : vector<8x64xf32>
    %193 = vector.extract_strided_slice %114 {offsets = [24, 0], sizes = [8, 256], strides = [1, 1]} : vector<32x256xf32> to vector<8x256xf32>
    %194 = arith.truncf %192 : vector<8x64xf32> to vector<8x64xbf16>
    %cst_54 = arith.constant dense<0.000000e+00> : vector<8x256xf32>
    %195 = tpu.matmul %194, %115, %cst_54 {dimension_numbers = #tpu.dot_dimension_numbers<[1], [0], [0], [1], [0, 0, 1, 1], [], []>} : vector<8x64xbf16>, vector<64x256xbf16>, vector<8x256xf32> -> vector<8x256xf32>
    %196 = arith.addf %193, %195 : vector<8x256xf32>
    %197 = vector.extract_strided_slice %196 {offsets = [0, 0], sizes = [8, 128], strides = [1, 1]} : vector<8x256xf32> to vector<8x128xf32>
    %198 = arith.negf %197 : vector<8x128xf32>
    %199 = math.exp %198 : vector<8x128xf32>
    %cst_55 = arith.constant 1.000000e+00 : f32
    %200 = vector.broadcast %cst_55 : f32 to vector<8x128xf32>
    %201 = arith.addf %200, %199 : vector<8x128xf32>
    %202 = arith.divf %200, %201 : vector<8x128xf32>
    %203 = vector.extract_strided_slice %196 {offsets = [0, 128], sizes = [8, 64], strides = [1, 1]} : vector<8x256xf32> to vector<8x64xf32>
    %204 = math.tanh %203 : vector<8x64xf32>
    %205 = vector.extract_strided_slice %196 {offsets = [0, 192], sizes = [8, 64], strides = [1, 1]} : vector<8x256xf32> to vector<8x64xf32>
    %206 = arith.negf %205 : vector<8x64xf32>
    %207 = math.exp %206 : vector<8x64xf32>
    %cst_56 = arith.constant 1.000000e+00 : f32
    %208 = vector.broadcast %cst_56 : f32 to vector<8x64xf32>
    %209 = arith.addf %208, %207 : vector<8x64xf32>
    %210 = arith.divf %208, %209 : vector<8x64xf32>
    %211 = vector.extract_strided_slice %202 {offsets = [0, 64], sizes = [8, 64], strides = [1, 1]} : vector<8x128xf32> to vector<8x64xf32>
    %212 = arith.mulf %211, %190 : vector<8x64xf32>
    %213 = vector.extract_strided_slice %202 {offsets = [0, 0], sizes = [8, 64], strides = [1, 1]} : vector<8x128xf32> to vector<8x64xf32>
    %214 = arith.mulf %213, %204 : vector<8x64xf32>
    %215 = arith.addf %212, %214 : vector<8x64xf32>
    %216 = math.tanh %215 : vector<8x64xf32>
    %217 = arith.mulf %210, %216 : vector<8x64xf32>
    %218 = vector.extract_strided_slice %108 {offsets = [24, 0], sizes = [8, 64], strides = [1, 1]} : vector<32x64xf32> to vector<8x64xf32>
    %219 = arith.truncf %218 : vector<8x64xf32> to vector<8x64xbf16>
    %c560 = arith.constant 560 : index
    %c0_57 = arith.constant 0 : index
    %220 = vector.load %arg6[%c560, %c0_57] : memref<1184x256xbf16, #tpu.memory_space<vmem>>, vector<64x256xbf16>
    %cst_58 = arith.constant dense<0.000000e+00> : vector<8x256xf32>
    %221 = tpu.matmul %219, %220, %cst_58 {dimension_numbers = #tpu.dot_dimension_numbers<[1], [0], [0], [1], [0, 0, 1, 1], [], []>} : vector<8x64xbf16>, vector<64x256xbf16>, vector<8x256xf32> -> vector<8x256xf32>
    %c24 = arith.constant 24 : index
    %c0_59 = arith.constant 0 : index
    %222 = vector.load %arg7[%c24, %c0_59] : memref<152x256xf32, #tpu.memory_space<vmem>>, vector<1x256xf32>
    %223 = vector.broadcast %222 : vector<1x256xf32> to vector<8x256xf32>
    %224 = arith.addf %221, %223 : vector<8x256xf32>
    %225 = vector.extract_strided_slice %224 {offsets = [0, 192], sizes = [8, 64], strides = [1, 1]} : vector<8x256xf32> to vector<8x64xf32>
    %226 = arith.negf %225 : vector<8x64xf32>
    %227 = math.exp %226 : vector<8x64xf32>
    %cst_60 = arith.constant 1.000000e+00 : f32
    %228 = vector.broadcast %cst_60 : f32 to vector<8x64xf32>
    %229 = arith.addf %228, %227 : vector<8x64xf32>
    %230 = arith.divf %228, %229 : vector<8x64xf32>
    %231 = vector.extract_strided_slice %224 {offsets = [0, 0], sizes = [8, 64], strides = [1, 1]} : vector<8x256xf32> to vector<8x64xf32>
    %232 = arith.negf %231 : vector<8x64xf32>
    %233 = math.exp %232 : vector<8x64xf32>
    %cst_61 = arith.constant 1.000000e+00 : f32
    %234 = vector.broadcast %cst_61 : f32 to vector<8x64xf32>
    %235 = arith.addf %234, %233 : vector<8x64xf32>
    %236 = arith.divf %234, %235 : vector<8x64xf32>
    %237 = vector.extract_strided_slice %224 {offsets = [0, 128], sizes = [8, 64], strides = [1, 1]} : vector<8x256xf32> to vector<8x64xf32>
    %238 = math.tanh %237 : vector<8x64xf32>
    %239 = arith.mulf %236, %238 : vector<8x64xf32>
    %240 = math.tanh %239 : vector<8x64xf32>
    %241 = arith.mulf %230, %240 : vector<8x64xf32>
    %242 = arith.truncf %217 : vector<8x64xf32> to vector<8x64xbf16>
    %c624 = arith.constant 624 : index
    %c0_62 = arith.constant 0 : index
    %243 = vector.load %arg6[%c624, %c0_62] : memref<1184x256xbf16, #tpu.memory_space<vmem>>, vector<64x32xbf16>
    %cst_63 = arith.constant dense<0.000000e+00> : vector<8x32xf32>
    %244 = tpu.matmul %242, %243, %cst_63 {dimension_numbers = #tpu.dot_dimension_numbers<[1], [0], [0], [1], [0, 0, 1, 1], [], []>} : vector<8x64xbf16>, vector<64x32xbf16>, vector<8x32xf32> -> vector<8x32xf32>
    %245 = arith.truncf %241 : vector<8x64xf32> to vector<8x64xbf16>
    %c688 = arith.constant 688 : index
    %c0_64 = arith.constant 0 : index
    %246 = vector.load %arg6[%c688, %c0_64] : memref<1184x256xbf16, #tpu.memory_space<vmem>>, vector<64x32xbf16>
    %cst_65 = arith.constant dense<0.000000e+00> : vector<8x32xf32>
    %247 = tpu.matmul %245, %246, %cst_65 {dimension_numbers = #tpu.dot_dimension_numbers<[1], [0], [0], [1], [0, 0, 1, 1], [], []>} : vector<8x64xbf16>, vector<64x32xbf16>, vector<8x32xf32> -> vector<8x32xf32>
    %248 = arith.addf %244, %247 : vector<8x32xf32>
    %c32 = arith.constant 32 : index
    %c0_66 = arith.constant 0 : index
    %249 = vector.load %arg7[%c32, %c0_66] : memref<152x256xf32, #tpu.memory_space<vmem>>, vector<1x32xf32>
    %250 = vector.broadcast %249 : vector<1x32xf32> to vector<8x32xf32>
    %251 = arith.addf %248, %250 : vector<8x32xf32>
    %252 = arith.truncf %251 : vector<8x32xf32> to vector<8x32xbf16>
    %c752 = arith.constant 752 : index
    %c0_67 = arith.constant 0 : index
    %253 = vector.load %arg6[%c752, %c0_67] : memref<1184x256xbf16, #tpu.memory_space<vmem>>, vector<32x96xbf16>
    %cst_68 = arith.constant dense<0.000000e+00> : vector<8x96xf32>
    %254 = tpu.matmul %252, %253, %cst_68 {dimension_numbers = #tpu.dot_dimension_numbers<[1], [0], [0], [1], [0, 0, 1, 1], [], []>} : vector<8x32xbf16>, vector<32x96xbf16>, vector<8x96xf32> -> vector<8x96xf32>
    %c40 = arith.constant 40 : index
    %c0_69 = arith.constant 0 : index
    %255 = vector.load %arg7[%c40, %c0_69] : memref<152x256xf32, #tpu.memory_space<vmem>>, vector<1x96xf32>
    %256 = vector.broadcast %255 : vector<1x96xf32> to vector<8x96xf32>
    %257 = arith.addf %254, %256 : vector<8x96xf32>
    %c0_70 = arith.constant 0 : index
    %c0_71 = arith.constant 0 : index
    %258 = vector.load %arg1[%c0_70, %c0_71] : memref<8x8xf32, #tpu.memory_space<vmem>>, vector<8x8xf32>
    %259 = vector.extract_strided_slice %257 {offsets = [0, 0], sizes = [8, 8], strides = [1, 1]} : vector<8x96xf32> to vector<8x8xf32>
    %260 = vector.extract_strided_slice %257 {offsets = [0, 32], sizes = [8, 8], strides = [1, 1]} : vector<8x96xf32> to vector<8x8xf32>
    %261 = vector.extract_strided_slice %257 {offsets = [0, 64], sizes = [8, 8], strides = [1, 1]} : vector<8x96xf32> to vector<8x8xf32>
    %262 = tpu.transpose %260, [1, 0] : vector<8x8xf32> -> vector<8x8xf32>
    %cst_72 = arith.constant dense<0.000000e+00> : vector<8x8xf32>
    %263 = tpu.matmul %259, %262, %cst_72 {dimension_numbers = #tpu.dot_dimension_numbers<[1], [0], [0], [1], [0, 0, 1, 1], [], []>} : vector<8x8xf32>, vector<8x8xf32>, vector<8x8xf32> -> vector<8x8xf32>
    %264 = arith.addf %263, %258 : vector<8x8xf32>
    %cst_73 = arith.constant dense<0xFF800000> : vector<8xf32>
    %265 = vector.multi_reduction <maximumf>, %264, %cst_73 [1] : vector<8x8xf32> to vector<8xf32>
    %266 = vector.shape_cast %265 : vector<8xf32> to vector<8x1xf32>
    %267 = vector.broadcast %266 : vector<8x1xf32> to vector<8x8xf32>
    %268 = arith.subf %264, %267 : vector<8x8xf32>
    %269 = math.exp %268 : vector<8x8xf32>
    %cst_74 = arith.constant dense<0.000000e+00> : vector<8xf32>
    %270 = vector.multi_reduction <add>, %269, %cst_74 [1] : vector<8x8xf32> to vector<8xf32>
    %271 = vector.shape_cast %270 : vector<8xf32> to vector<8x1xf32>
    %272 = vector.broadcast %271 : vector<8x1xf32> to vector<8x8xf32>
    %273 = arith.divf %269, %272 : vector<8x8xf32>
    %cst_75 = arith.constant dense<0.000000e+00> : vector<8x8xf32>
    %274 = tpu.matmul %273, %261, %cst_75 {dimension_numbers = #tpu.dot_dimension_numbers<[1], [0], [0], [1], [0, 0, 1, 1], [], []>} : vector<8x8xf32>, vector<8x8xf32>, vector<8x8xf32> -> vector<8x8xf32>
    %275 = vector.extract_strided_slice %257 {offsets = [0, 8], sizes = [8, 8], strides = [1, 1]} : vector<8x96xf32> to vector<8x8xf32>
    %276 = vector.extract_strided_slice %257 {offsets = [0, 40], sizes = [8, 8], strides = [1, 1]} : vector<8x96xf32> to vector<8x8xf32>
    %277 = vector.extract_strided_slice %257 {offsets = [0, 72], sizes = [8, 8], strides = [1, 1]} : vector<8x96xf32> to vector<8x8xf32>
    %278 = tpu.transpose %276, [1, 0] : vector<8x8xf32> -> vector<8x8xf32>
    %cst_76 = arith.constant dense<0.000000e+00> : vector<8x8xf32>
    %279 = tpu.matmul %275, %278, %cst_76 {dimension_numbers = #tpu.dot_dimension_numbers<[1], [0], [0], [1], [0, 0, 1, 1], [], []>} : vector<8x8xf32>, vector<8x8xf32>, vector<8x8xf32> -> vector<8x8xf32>
    %280 = arith.addf %279, %258 : vector<8x8xf32>
    %cst_77 = arith.constant dense<0xFF800000> : vector<8xf32>
    %281 = vector.multi_reduction <maximumf>, %280, %cst_77 [1] : vector<8x8xf32> to vector<8xf32>
    %282 = vector.shape_cast %281 : vector<8xf32> to vector<8x1xf32>
    %283 = vector.broadcast %282 : vector<8x1xf32> to vector<8x8xf32>
    %284 = arith.subf %280, %283 : vector<8x8xf32>
    %285 = math.exp %284 : vector<8x8xf32>
    %cst_78 = arith.constant dense<0.000000e+00> : vector<8xf32>
    %286 = vector.multi_reduction <add>, %285, %cst_78 [1] : vector<8x8xf32> to vector<8xf32>
    %287 = vector.shape_cast %286 : vector<8xf32> to vector<8x1xf32>
    %288 = vector.broadcast %287 : vector<8x1xf32> to vector<8x8xf32>
    %289 = arith.divf %285, %288 : vector<8x8xf32>
    %cst_79 = arith.constant dense<0.000000e+00> : vector<8x8xf32>
    %290 = tpu.matmul %289, %277, %cst_79 {dimension_numbers = #tpu.dot_dimension_numbers<[1], [0], [0], [1], [0, 0, 1, 1], [], []>} : vector<8x8xf32>, vector<8x8xf32>, vector<8x8xf32> -> vector<8x8xf32>
    %291 = vector.extract_strided_slice %257 {offsets = [0, 16], sizes = [8, 8], strides = [1, 1]} : vector<8x96xf32> to vector<8x8xf32>
    %292 = vector.extract_strided_slice %257 {offsets = [0, 48], sizes = [8, 8], strides = [1, 1]} : vector<8x96xf32> to vector<8x8xf32>
    %293 = vector.extract_strided_slice %257 {offsets = [0, 80], sizes = [8, 8], strides = [1, 1]} : vector<8x96xf32> to vector<8x8xf32>
    %294 = tpu.transpose %292, [1, 0] : vector<8x8xf32> -> vector<8x8xf32>
    %cst_80 = arith.constant dense<0.000000e+00> : vector<8x8xf32>
    %295 = tpu.matmul %291, %294, %cst_80 {dimension_numbers = #tpu.dot_dimension_numbers<[1], [0], [0], [1], [0, 0, 1, 1], [], []>} : vector<8x8xf32>, vector<8x8xf32>, vector<8x8xf32> -> vector<8x8xf32>
    %296 = arith.addf %295, %258 : vector<8x8xf32>
    %cst_81 = arith.constant dense<0xFF800000> : vector<8xf32>
    %297 = vector.multi_reduction <maximumf>, %296, %cst_81 [1] : vector<8x8xf32> to vector<8xf32>
    %298 = vector.shape_cast %297 : vector<8xf32> to vector<8x1xf32>
    %299 = vector.broadcast %298 : vector<8x1xf32> to vector<8x8xf32>
    %300 = arith.subf %296, %299 : vector<8x8xf32>
    %301 = math.exp %300 : vector<8x8xf32>
    %cst_82 = arith.constant dense<0.000000e+00> : vector<8xf32>
    %302 = vector.multi_reduction <add>, %301, %cst_82 [1] : vector<8x8xf32> to vector<8xf32>
    %303 = vector.shape_cast %302 : vector<8xf32> to vector<8x1xf32>
    %304 = vector.broadcast %303 : vector<8x1xf32> to vector<8x8xf32>
    %305 = arith.divf %301, %304 : vector<8x8xf32>
    %cst_83 = arith.constant dense<0.000000e+00> : vector<8x8xf32>
    %306 = tpu.matmul %305, %293, %cst_83 {dimension_numbers = #tpu.dot_dimension_numbers<[1], [0], [0], [1], [0, 0, 1, 1], [], []>} : vector<8x8xf32>, vector<8x8xf32>, vector<8x8xf32> -> vector<8x8xf32>
    %307 = vector.extract_strided_slice %257 {offsets = [0, 24], sizes = [8, 8], strides = [1, 1]} : vector<8x96xf32> to vector<8x8xf32>
    %308 = vector.extract_strided_slice %257 {offsets = [0, 56], sizes = [8, 8], strides = [1, 1]} : vector<8x96xf32> to vector<8x8xf32>
    %309 = vector.extract_strided_slice %257 {offsets = [0, 88], sizes = [8, 8], strides = [1, 1]} : vector<8x96xf32> to vector<8x8xf32>
    %310 = tpu.transpose %308, [1, 0] : vector<8x8xf32> -> vector<8x8xf32>
    %cst_84 = arith.constant dense<0.000000e+00> : vector<8x8xf32>
    %311 = tpu.matmul %307, %310, %cst_84 {dimension_numbers = #tpu.dot_dimension_numbers<[1], [0], [0], [1], [0, 0, 1, 1], [], []>} : vector<8x8xf32>, vector<8x8xf32>, vector<8x8xf32> -> vector<8x8xf32>
    %312 = arith.addf %311, %258 : vector<8x8xf32>
    %cst_85 = arith.constant dense<0xFF800000> : vector<8xf32>
    %313 = vector.multi_reduction <maximumf>, %312, %cst_85 [1] : vector<8x8xf32> to vector<8xf32>
    %314 = vector.shape_cast %313 : vector<8xf32> to vector<8x1xf32>
    %315 = vector.broadcast %314 : vector<8x1xf32> to vector<8x8xf32>
    %316 = arith.subf %312, %315 : vector<8x8xf32>
    %317 = math.exp %316 : vector<8x8xf32>
    %cst_86 = arith.constant dense<0.000000e+00> : vector<8xf32>
    %318 = vector.multi_reduction <add>, %317, %cst_86 [1] : vector<8x8xf32> to vector<8xf32>
    %319 = vector.shape_cast %318 : vector<8xf32> to vector<8x1xf32>
    %320 = vector.broadcast %319 : vector<8x1xf32> to vector<8x8xf32>
    %321 = arith.divf %317, %320 : vector<8x8xf32>
    %cst_87 = arith.constant dense<0.000000e+00> : vector<8x8xf32>
    %322 = tpu.matmul %321, %309, %cst_87 {dimension_numbers = #tpu.dot_dimension_numbers<[1], [0], [0], [1], [0, 0, 1, 1], [], []>} : vector<8x8xf32>, vector<8x8xf32>, vector<8x8xf32> -> vector<8x8xf32>
    %323 = tpu.concatenate %274, %290, %306, %322 in 1 : vector<8x8xf32>, vector<8x8xf32>, vector<8x8xf32>, vector<8x8xf32> -> vector<8x32xf32>
    %324 = arith.truncf %323 : vector<8x32xf32> to vector<8x32xbf16>
    %c784 = arith.constant 784 : index
    %c0_88 = arith.constant 0 : index
    %325 = vector.load %arg6[%c784, %c0_88] : memref<1184x256xbf16, #tpu.memory_space<vmem>>, vector<32x32xbf16>
    %cst_89 = arith.constant dense<0.000000e+00> : vector<8x32xf32>
    %326 = tpu.matmul %324, %325, %cst_89 {dimension_numbers = #tpu.dot_dimension_numbers<[1], [0], [0], [1], [0, 0, 1, 1], [], []>} : vector<8x32xbf16>, vector<32x32xbf16>, vector<8x32xf32> -> vector<8x32xf32>
    %c48_90 = arith.constant 48 : index
    %c0_91 = arith.constant 0 : index
    %327 = vector.load %arg7[%c48_90, %c0_91] : memref<152x256xf32, #tpu.memory_space<vmem>>, vector<1x32xf32>
    %328 = vector.broadcast %327 : vector<1x32xf32> to vector<8x32xf32>
    %329 = arith.addf %326, %328 : vector<8x32xf32>
    %330 = arith.addf %251, %329 : vector<8x32xf32>
    %c56 = arith.constant 56 : index
    %c0_92 = arith.constant 0 : index
    %331 = vector.load %arg7[%c56, %c0_92] : memref<152x256xf32, #tpu.memory_space<vmem>>, vector<1x32xf32>
    %c64 = arith.constant 64 : index
    %c0_93 = arith.constant 0 : index
    %332 = vector.load %arg7[%c64, %c0_93] : memref<152x256xf32, #tpu.memory_space<vmem>>, vector<1x32xf32>
    %cst_94 = arith.constant dense<0.000000e+00> : vector<8xf32>
    %333 = vector.multi_reduction <add>, %330, %cst_94 [1] : vector<8x32xf32> to vector<8xf32>
    %334 = vector.shape_cast %333 : vector<8xf32> to vector<8x1xf32>
    %cst_95 = arith.constant 3.200000e+01 : f32
    %335 = vector.broadcast %cst_95 : f32 to vector<8x1xf32>
    %336 = arith.divf %334, %335 : vector<8x1xf32>
    %337 = vector.broadcast %336 : vector<8x1xf32> to vector<8x32xf32>
    %338 = arith.subf %330, %337 : vector<8x32xf32>
    %339 = arith.mulf %338, %338 : vector<8x32xf32>
    %cst_96 = arith.constant dense<0.000000e+00> : vector<8xf32>
    %340 = vector.multi_reduction <add>, %339, %cst_96 [1] : vector<8x32xf32> to vector<8xf32>
    %341 = vector.shape_cast %340 : vector<8xf32> to vector<8x1xf32>
    %cst_97 = arith.constant 3.200000e+01 : f32
    %342 = vector.broadcast %cst_97 : f32 to vector<8x1xf32>
    %343 = arith.divf %341, %342 : vector<8x1xf32>
    %cst_98 = arith.constant 9.99999974E-6 : f32
    %344 = vector.broadcast %cst_98 : f32 to vector<8x1xf32>
    %345 = arith.addf %343, %344 : vector<8x1xf32>
    %346 = math.rsqrt %345 : vector<8x1xf32>
    %347 = vector.broadcast %346 : vector<8x1xf32> to vector<8x32xf32>
    %348 = arith.mulf %338, %347 : vector<8x32xf32>
    %349 = vector.broadcast %331 : vector<1x32xf32> to vector<8x32xf32>
    %350 = arith.mulf %348, %349 : vector<8x32xf32>
    %351 = vector.broadcast %332 : vector<1x32xf32> to vector<8x32xf32>
    %352 = arith.addf %350, %351 : vector<8x32xf32>
    %353 = arith.truncf %352 : vector<8x32xf32> to vector<8x32xbf16>
    %c816 = arith.constant 816 : index
    %c0_99 = arith.constant 0 : index
    %354 = vector.load %arg6[%c816, %c0_99] : memref<1184x256xbf16, #tpu.memory_space<vmem>>, vector<32x128xbf16>
    %cst_100 = arith.constant dense<0.000000e+00> : vector<8x128xf32>
    %355 = tpu.matmul %353, %354, %cst_100 {dimension_numbers = #tpu.dot_dimension_numbers<[1], [0], [0], [1], [0, 0, 1, 1], [], []>} : vector<8x32xbf16>, vector<32x128xbf16>, vector<8x128xf32> -> vector<8x128xf32>
    %c72 = arith.constant 72 : index
    %c0_101 = arith.constant 0 : index
    %356 = vector.load %arg7[%c72, %c0_101] : memref<152x256xf32, #tpu.memory_space<vmem>>, vector<1x128xf32>
    %357 = vector.broadcast %356 : vector<1x128xf32> to vector<8x128xf32>
    %358 = arith.addf %355, %357 : vector<8x128xf32>
    %cst_102 = arith.constant 5.000000e-01 : f32
    %359 = vector.broadcast %cst_102 : f32 to vector<8x128xf32>
    %360 = arith.mulf %359, %358 : vector<8x128xf32>
    %cst_103 = arith.constant 0.707106769 : f32
    %361 = vector.broadcast %cst_103 : f32 to vector<8x128xf32>
    %362 = arith.mulf %358, %361 : vector<8x128xf32>
    %363 = math.absf %362 : vector<8x128xf32>
    %cst_104 = arith.constant 0.327591091 : f32
    %364 = vector.broadcast %cst_104 : f32 to vector<8x128xf32>
    %365 = arith.mulf %364, %363 : vector<8x128xf32>
    %cst_105 = arith.constant 1.000000e+00 : f32
    %366 = vector.broadcast %cst_105 : f32 to vector<8x128xf32>
    %367 = arith.addf %366, %365 : vector<8x128xf32>
    %cst_106 = arith.constant 1.000000e+00 : f32
    %368 = vector.broadcast %cst_106 : f32 to vector<8x128xf32>
    %369 = arith.divf %368, %367 : vector<8x128xf32>
    %cst_107 = arith.constant 1.06140542 : f32
    %370 = vector.broadcast %cst_107 : f32 to vector<8x128xf32>
    %371 = arith.mulf %370, %369 : vector<8x128xf32>
    %cst_108 = arith.constant -1.45315206 : f32
    %372 = vector.broadcast %cst_108 : f32 to vector<8x128xf32>
    %373 = arith.addf %371, %372 : vector<8x128xf32>
    %374 = arith.mulf %373, %369 : vector<8x128xf32>
    %cst_109 = arith.constant 1.42141378 : f32
    %375 = vector.broadcast %cst_109 : f32 to vector<8x128xf32>
    %376 = arith.addf %374, %375 : vector<8x128xf32>
    %377 = arith.mulf %376, %369 : vector<8x128xf32>
    %cst_110 = arith.constant -0.284496725 : f32
    %378 = vector.broadcast %cst_110 : f32 to vector<8x128xf32>
    %379 = arith.addf %377, %378 : vector<8x128xf32>
    %380 = arith.mulf %379, %369 : vector<8x128xf32>
    %cst_111 = arith.constant 0.254829586 : f32
    %381 = vector.broadcast %cst_111 : f32 to vector<8x128xf32>
    %382 = arith.addf %380, %381 : vector<8x128xf32>
    %383 = arith.mulf %382, %369 : vector<8x128xf32>
    %cst_112 = arith.constant 0.000000e+00 : f32
    %384 = vector.broadcast %cst_112 : f32 to vector<8x128xf32>
    %385 = arith.subf %384, %363 : vector<8x128xf32>
    %386 = arith.mulf %385, %363 : vector<8x128xf32>
    %387 = math.exp %386 : vector<8x128xf32>
    %388 = arith.mulf %383, %387 : vector<8x128xf32>
    %cst_113 = arith.constant 1.000000e+00 : f32
    %389 = vector.broadcast %cst_113 : f32 to vector<8x128xf32>
    %390 = arith.subf %389, %388 : vector<8x128xf32>
    %cst_114 = arith.constant 0.000000e+00 : f32
    %391 = vector.broadcast %cst_114 : f32 to vector<8x128xf32>
    %392 = arith.cmpf oge, %362, %391 : vector<8x128xf32>
    %cst_115 = arith.constant 0.000000e+00 : f32
    %393 = vector.broadcast %cst_115 : f32 to vector<8x128xf32>
    %394 = arith.subf %393, %390 : vector<8x128xf32>
    %395 = arith.select %392, %390, %394 : vector<8x128xi1>, vector<8x128xf32>
    %cst_116 = arith.constant 1.000000e+00 : f32
    %396 = vector.broadcast %cst_116 : f32 to vector<8x128xf32>
    %397 = arith.addf %396, %395 : vector<8x128xf32>
    %398 = arith.mulf %360, %397 : vector<8x128xf32>
    %399 = arith.truncf %398 : vector<8x128xf32> to vector<8x128xbf16>
    %c848 = arith.constant 848 : index
    %c0_117 = arith.constant 0 : index
    %400 = vector.load %arg6[%c848, %c0_117] : memref<1184x256xbf16, #tpu.memory_space<vmem>>, vector<128x32xbf16>
    %cst_118 = arith.constant dense<0.000000e+00> : vector<8x32xf32>
    %401 = tpu.matmul %399, %400, %cst_118 {dimension_numbers = #tpu.dot_dimension_numbers<[1], [0], [0], [1], [0, 0, 1, 1], [], []>} : vector<8x128xbf16>, vector<128x32xbf16>, vector<8x32xf32> -> vector<8x32xf32>
    %c80 = arith.constant 80 : index
    %c0_119 = arith.constant 0 : index
    %402 = vector.load %arg7[%c80, %c0_119] : memref<152x256xf32, #tpu.memory_space<vmem>>, vector<1x32xf32>
    %403 = vector.broadcast %402 : vector<1x32xf32> to vector<8x32xf32>
    %404 = arith.addf %401, %403 : vector<8x32xf32>
    %405 = arith.addf %352, %404 : vector<8x32xf32>
    %c88 = arith.constant 88 : index
    %c0_120 = arith.constant 0 : index
    %406 = vector.load %arg7[%c88, %c0_120] : memref<152x256xf32, #tpu.memory_space<vmem>>, vector<1x32xf32>
    %c96 = arith.constant 96 : index
    %c0_121 = arith.constant 0 : index
    %407 = vector.load %arg7[%c96, %c0_121] : memref<152x256xf32, #tpu.memory_space<vmem>>, vector<1x32xf32>
    %cst_122 = arith.constant dense<0.000000e+00> : vector<8xf32>
    %408 = vector.multi_reduction <add>, %405, %cst_122 [1] : vector<8x32xf32> to vector<8xf32>
    %409 = vector.shape_cast %408 : vector<8xf32> to vector<8x1xf32>
    %cst_123 = arith.constant 3.200000e+01 : f32
    %410 = vector.broadcast %cst_123 : f32 to vector<8x1xf32>
    %411 = arith.divf %409, %410 : vector<8x1xf32>
    %412 = vector.broadcast %411 : vector<8x1xf32> to vector<8x32xf32>
    %413 = arith.subf %405, %412 : vector<8x32xf32>
    %414 = arith.mulf %413, %413 : vector<8x32xf32>
    %cst_124 = arith.constant dense<0.000000e+00> : vector<8xf32>
    %415 = vector.multi_reduction <add>, %414, %cst_124 [1] : vector<8x32xf32> to vector<8xf32>
    %416 = vector.shape_cast %415 : vector<8xf32> to vector<8x1xf32>
    %cst_125 = arith.constant 3.200000e+01 : f32
    %417 = vector.broadcast %cst_125 : f32 to vector<8x1xf32>
    %418 = arith.divf %416, %417 : vector<8x1xf32>
    %cst_126 = arith.constant 9.99999974E-6 : f32
    %419 = vector.broadcast %cst_126 : f32 to vector<8x1xf32>
    %420 = arith.addf %418, %419 : vector<8x1xf32>
    %421 = math.rsqrt %420 : vector<8x1xf32>
    %422 = vector.broadcast %421 : vector<8x1xf32> to vector<8x32xf32>
    %423 = arith.mulf %413, %422 : vector<8x32xf32>
    %424 = vector.broadcast %406 : vector<1x32xf32> to vector<8x32xf32>
    %425 = arith.mulf %423, %424 : vector<8x32xf32>
    %426 = vector.broadcast %407 : vector<1x32xf32> to vector<8x32xf32>
    %427 = arith.addf %425, %426 : vector<8x32xf32>
    %c0_127 = arith.constant 0 : index
    %c0_128 = arith.constant 0 : index
    %428 = vector.load %arg2[%c0_127, %c0_128] : memref<2x8xf32, #tpu.memory_space<vmem>>, vector<2x8xf32>
    %cst_129 = arith.constant dense<0.000000e+00> : vector<2x32xf32>
    %429 = tpu.matmul %428, %427, %cst_129 {dimension_numbers = #tpu.dot_dimension_numbers<[1], [0], [0], [1], [0, 0, 1, 1], [], []>} : vector<2x8xf32>, vector<8x32xf32>, vector<2x32xf32> -> vector<2x32xf32>
    %c0_130 = arith.constant 0 : index
    %c0_131 = arith.constant 0 : index
    %430 = vector.load %arg5[%c0_130, %c0_131] : memref<2x1xf32, #tpu.memory_space<vmem>>, vector<2x1xf32>
    %c104 = arith.constant 104 : index
    %c0_132 = arith.constant 0 : index
    %431 = vector.load %arg7[%c104, %c0_132] : memref<152x256xf32, #tpu.memory_space<vmem>>, vector<1x16xf32>
    %432 = vector.broadcast %430 : vector<2x1xf32> to vector<2x16xf32>
    %433 = vector.broadcast %431 : vector<1x16xf32> to vector<2x16xf32>
    %434 = arith.mulf %432, %433 : vector<2x16xf32>
    %c112 = arith.constant 112 : index
    %c0_133 = arith.constant 0 : index
    %435 = vector.load %arg7[%c112, %c0_133] : memref<152x256xf32, #tpu.memory_space<vmem>>, vector<1x16xf32>
    %436 = vector.broadcast %435 : vector<1x16xf32> to vector<2x16xf32>
    %437 = arith.addf %434, %436 : vector<2x16xf32>
    %cst_134 = arith.constant 5.000000e-01 : f32
    %438 = vector.broadcast %cst_134 : f32 to vector<2x16xf32>
    %439 = arith.mulf %438, %437 : vector<2x16xf32>
    %cst_135 = arith.constant 0.707106769 : f32
    %440 = vector.broadcast %cst_135 : f32 to vector<2x16xf32>
    %441 = arith.mulf %437, %440 : vector<2x16xf32>
    %442 = math.absf %441 : vector<2x16xf32>
    %cst_136 = arith.constant 0.327591091 : f32
    %443 = vector.broadcast %cst_136 : f32 to vector<2x16xf32>
    %444 = arith.mulf %443, %442 : vector<2x16xf32>
    %cst_137 = arith.constant 1.000000e+00 : f32
    %445 = vector.broadcast %cst_137 : f32 to vector<2x16xf32>
    %446 = arith.addf %445, %444 : vector<2x16xf32>
    %cst_138 = arith.constant 1.000000e+00 : f32
    %447 = vector.broadcast %cst_138 : f32 to vector<2x16xf32>
    %448 = arith.divf %447, %446 : vector<2x16xf32>
    %cst_139 = arith.constant 1.06140542 : f32
    %449 = vector.broadcast %cst_139 : f32 to vector<2x16xf32>
    %450 = arith.mulf %449, %448 : vector<2x16xf32>
    %cst_140 = arith.constant -1.45315206 : f32
    %451 = vector.broadcast %cst_140 : f32 to vector<2x16xf32>
    %452 = arith.addf %450, %451 : vector<2x16xf32>
    %453 = arith.mulf %452, %448 : vector<2x16xf32>
    %cst_141 = arith.constant 1.42141378 : f32
    %454 = vector.broadcast %cst_141 : f32 to vector<2x16xf32>
    %455 = arith.addf %453, %454 : vector<2x16xf32>
    %456 = arith.mulf %455, %448 : vector<2x16xf32>
    %cst_142 = arith.constant -0.284496725 : f32
    %457 = vector.broadcast %cst_142 : f32 to vector<2x16xf32>
    %458 = arith.addf %456, %457 : vector<2x16xf32>
    %459 = arith.mulf %458, %448 : vector<2x16xf32>
    %cst_143 = arith.constant 0.254829586 : f32
    %460 = vector.broadcast %cst_143 : f32 to vector<2x16xf32>
    %461 = arith.addf %459, %460 : vector<2x16xf32>
    %462 = arith.mulf %461, %448 : vector<2x16xf32>
    %cst_144 = arith.constant 0.000000e+00 : f32
    %463 = vector.broadcast %cst_144 : f32 to vector<2x16xf32>
    %464 = arith.subf %463, %442 : vector<2x16xf32>
    %465 = arith.mulf %464, %442 : vector<2x16xf32>
    %466 = math.exp %465 : vector<2x16xf32>
    %467 = arith.mulf %462, %466 : vector<2x16xf32>
    %cst_145 = arith.constant 1.000000e+00 : f32
    %468 = vector.broadcast %cst_145 : f32 to vector<2x16xf32>
    %469 = arith.subf %468, %467 : vector<2x16xf32>
    %cst_146 = arith.constant 0.000000e+00 : f32
    %470 = vector.broadcast %cst_146 : f32 to vector<2x16xf32>
    %471 = arith.cmpf oge, %441, %470 : vector<2x16xf32>
    %cst_147 = arith.constant 0.000000e+00 : f32
    %472 = vector.broadcast %cst_147 : f32 to vector<2x16xf32>
    %473 = arith.subf %472, %469 : vector<2x16xf32>
    %474 = arith.select %471, %469, %473 : vector<2x16xi1>, vector<2x16xf32>
    %cst_148 = arith.constant 1.000000e+00 : f32
    %475 = vector.broadcast %cst_148 : f32 to vector<2x16xf32>
    %476 = arith.addf %475, %474 : vector<2x16xf32>
    %477 = arith.mulf %439, %476 : vector<2x16xf32>
    %478 = arith.truncf %477 : vector<2x16xf32> to vector<2x16xbf16>
    %c976 = arith.constant 976 : index
    %c0_149 = arith.constant 0 : index
    %479 = vector.load %arg6[%c976, %c0_149] : memref<1184x256xbf16, #tpu.memory_space<vmem>>, vector<16x32xbf16>
    %cst_150 = arith.constant dense<0.000000e+00> : vector<2x32xf32>
    %480 = tpu.matmul %478, %479, %cst_150 {dimension_numbers = #tpu.dot_dimension_numbers<[1], [0], [0], [1], [0, 0, 1, 1], [], []>} : vector<2x16xbf16>, vector<16x32xbf16>, vector<2x32xf32> -> vector<2x32xf32>
    %c120 = arith.constant 120 : index
    %c0_151 = arith.constant 0 : index
    %481 = vector.load %arg7[%c120, %c0_151] : memref<152x256xf32, #tpu.memory_space<vmem>>, vector<1x32xf32>
    %482 = vector.broadcast %481 : vector<1x32xf32> to vector<2x32xf32>
    %483 = arith.addf %480, %482 : vector<2x32xf32>
    %484 = arith.truncf %429 : vector<2x32xf32> to vector<2x32xbf16>
    %c992 = arith.constant 992 : index
    %c0_152 = arith.constant 0 : index
    %485 = vector.load %arg6[%c992, %c0_152] : memref<1184x256xbf16, #tpu.memory_space<vmem>>, vector<32x64xbf16>
    %cst_153 = arith.constant dense<0.000000e+00> : vector<2x64xf32>
    %486 = tpu.matmul %484, %485, %cst_153 {dimension_numbers = #tpu.dot_dimension_numbers<[1], [0], [0], [1], [0, 0, 1, 1], [], []>} : vector<2x32xbf16>, vector<32x64xbf16>, vector<2x64xf32> -> vector<2x64xf32>
    %c0_154 = arith.constant 0 : index
    %c0_155 = arith.constant 0 : index
    %487 = vector.load %arg4[%c0_154, %c0_155] : memref<2x32xf32, #tpu.memory_space<vmem>>, vector<2x32xf32>
    %488 = arith.truncf %487 : vector<2x32xf32> to vector<2x32xbf16>
    %c1024 = arith.constant 1024 : index
    %c0_156 = arith.constant 0 : index
    %489 = vector.load %arg6[%c1024, %c0_156] : memref<1184x256xbf16, #tpu.memory_space<vmem>>, vector<32x64xbf16>
    %cst_157 = arith.constant dense<0.000000e+00> : vector<2x64xf32>
    %490 = tpu.matmul %488, %489, %cst_157 {dimension_numbers = #tpu.dot_dimension_numbers<[1], [0], [0], [1], [0, 0, 1, 1], [], []>} : vector<2x32xbf16>, vector<32x64xbf16>, vector<2x64xf32> -> vector<2x64xf32>
    %491 = arith.addf %486, %490 : vector<2x64xf32>
    %492 = arith.truncf %483 : vector<2x32xf32> to vector<2x32xbf16>
    %c1056 = arith.constant 1056 : index
    %c0_158 = arith.constant 0 : index
    %493 = vector.load %arg6[%c1056, %c0_158] : memref<1184x256xbf16, #tpu.memory_space<vmem>>, vector<32x64xbf16>
    %cst_159 = arith.constant dense<0.000000e+00> : vector<2x64xf32>
    %494 = tpu.matmul %492, %493, %cst_159 {dimension_numbers = #tpu.dot_dimension_numbers<[1], [0], [0], [1], [0, 0, 1, 1], [], []>} : vector<2x32xbf16>, vector<32x64xbf16>, vector<2x64xf32> -> vector<2x64xf32>
    %495 = arith.addf %491, %494 : vector<2x64xf32>
    %c128 = arith.constant 128 : index
    %c0_160 = arith.constant 0 : index
    %496 = vector.load %arg7[%c128, %c0_160] : memref<152x256xf32, #tpu.memory_space<vmem>>, vector<1x64xf32>
    %497 = vector.broadcast %496 : vector<1x64xf32> to vector<2x64xf32>
    %498 = arith.addf %495, %497 : vector<2x64xf32>
    %cst_161 = arith.constant 5.000000e-01 : f32
    %499 = vector.broadcast %cst_161 : f32 to vector<2x64xf32>
    %500 = arith.mulf %499, %498 : vector<2x64xf32>
    %cst_162 = arith.constant 0.707106769 : f32
    %501 = vector.broadcast %cst_162 : f32 to vector<2x64xf32>
    %502 = arith.mulf %498, %501 : vector<2x64xf32>
    %503 = math.absf %502 : vector<2x64xf32>
    %cst_163 = arith.constant 0.327591091 : f32
    %504 = vector.broadcast %cst_163 : f32 to vector<2x64xf32>
    %505 = arith.mulf %504, %503 : vector<2x64xf32>
    %cst_164 = arith.constant 1.000000e+00 : f32
    %506 = vector.broadcast %cst_164 : f32 to vector<2x64xf32>
    %507 = arith.addf %506, %505 : vector<2x64xf32>
    %cst_165 = arith.constant 1.000000e+00 : f32
    %508 = vector.broadcast %cst_165 : f32 to vector<2x64xf32>
    %509 = arith.divf %508, %507 : vector<2x64xf32>
    %cst_166 = arith.constant 1.06140542 : f32
    %510 = vector.broadcast %cst_166 : f32 to vector<2x64xf32>
    %511 = arith.mulf %510, %509 : vector<2x64xf32>
    %cst_167 = arith.constant -1.45315206 : f32
    %512 = vector.broadcast %cst_167 : f32 to vector<2x64xf32>
    %513 = arith.addf %511, %512 : vector<2x64xf32>
    %514 = arith.mulf %513, %509 : vector<2x64xf32>
    %cst_168 = arith.constant 1.42141378 : f32
    %515 = vector.broadcast %cst_168 : f32 to vector<2x64xf32>
    %516 = arith.addf %514, %515 : vector<2x64xf32>
    %517 = arith.mulf %516, %509 : vector<2x64xf32>
    %cst_169 = arith.constant -0.284496725 : f32
    %518 = vector.broadcast %cst_169 : f32 to vector<2x64xf32>
    %519 = arith.addf %517, %518 : vector<2x64xf32>
    %520 = arith.mulf %519, %509 : vector<2x64xf32>
    %cst_170 = arith.constant 0.254829586 : f32
    %521 = vector.broadcast %cst_170 : f32 to vector<2x64xf32>
    %522 = arith.addf %520, %521 : vector<2x64xf32>
    %523 = arith.mulf %522, %509 : vector<2x64xf32>
    %cst_171 = arith.constant 0.000000e+00 : f32
    %524 = vector.broadcast %cst_171 : f32 to vector<2x64xf32>
    %525 = arith.subf %524, %503 : vector<2x64xf32>
    %526 = arith.mulf %525, %503 : vector<2x64xf32>
    %527 = math.exp %526 : vector<2x64xf32>
    %528 = arith.mulf %523, %527 : vector<2x64xf32>
    %cst_172 = arith.constant 1.000000e+00 : f32
    %529 = vector.broadcast %cst_172 : f32 to vector<2x64xf32>
    %530 = arith.subf %529, %528 : vector<2x64xf32>
    %cst_173 = arith.constant 0.000000e+00 : f32
    %531 = vector.broadcast %cst_173 : f32 to vector<2x64xf32>
    %532 = arith.cmpf oge, %502, %531 : vector<2x64xf32>
    %cst_174 = arith.constant 0.000000e+00 : f32
    %533 = vector.broadcast %cst_174 : f32 to vector<2x64xf32>
    %534 = arith.subf %533, %530 : vector<2x64xf32>
    %535 = arith.select %532, %530, %534 : vector<2x64xi1>, vector<2x64xf32>
    %cst_175 = arith.constant 1.000000e+00 : f32
    %536 = vector.broadcast %cst_175 : f32 to vector<2x64xf32>
    %537 = arith.addf %536, %535 : vector<2x64xf32>
    %538 = arith.mulf %500, %537 : vector<2x64xf32>
    %539 = arith.truncf %538 : vector<2x64xf32> to vector<2x64xbf16>
    %c1088 = arith.constant 1088 : index
    %c0_176 = arith.constant 0 : index
    %540 = vector.load %arg6[%c1088, %c0_176] : memref<1184x256xbf16, #tpu.memory_space<vmem>>, vector<64x32xbf16>
    %cst_177 = arith.constant dense<0.000000e+00> : vector<2x32xf32>
    %541 = tpu.matmul %539, %540, %cst_177 {dimension_numbers = #tpu.dot_dimension_numbers<[1], [0], [0], [1], [0, 0, 1, 1], [], []>} : vector<2x64xbf16>, vector<64x32xbf16>, vector<2x32xf32> -> vector<2x32xf32>
    %c136 = arith.constant 136 : index
    %c0_178 = arith.constant 0 : index
    %542 = vector.load %arg7[%c136, %c0_178] : memref<152x256xf32, #tpu.memory_space<vmem>>, vector<1x32xf32>
    %543 = vector.broadcast %542 : vector<1x32xf32> to vector<2x32xf32>
    %544 = arith.addf %541, %543 : vector<2x32xf32>
    %cst_179 = arith.constant 5.000000e-01 : f32
    %545 = vector.broadcast %cst_179 : f32 to vector<2x32xf32>
    %546 = arith.mulf %545, %544 : vector<2x32xf32>
    %cst_180 = arith.constant 0.707106769 : f32
    %547 = vector.broadcast %cst_180 : f32 to vector<2x32xf32>
    %548 = arith.mulf %544, %547 : vector<2x32xf32>
    %549 = math.absf %548 : vector<2x32xf32>
    %cst_181 = arith.constant 0.327591091 : f32
    %550 = vector.broadcast %cst_181 : f32 to vector<2x32xf32>
    %551 = arith.mulf %550, %549 : vector<2x32xf32>
    %cst_182 = arith.constant 1.000000e+00 : f32
    %552 = vector.broadcast %cst_182 : f32 to vector<2x32xf32>
    %553 = arith.addf %552, %551 : vector<2x32xf32>
    %cst_183 = arith.constant 1.000000e+00 : f32
    %554 = vector.broadcast %cst_183 : f32 to vector<2x32xf32>
    %555 = arith.divf %554, %553 : vector<2x32xf32>
    %cst_184 = arith.constant 1.06140542 : f32
    %556 = vector.broadcast %cst_184 : f32 to vector<2x32xf32>
    %557 = arith.mulf %556, %555 : vector<2x32xf32>
    %cst_185 = arith.constant -1.45315206 : f32
    %558 = vector.broadcast %cst_185 : f32 to vector<2x32xf32>
    %559 = arith.addf %557, %558 : vector<2x32xf32>
    %560 = arith.mulf %559, %555 : vector<2x32xf32>
    %cst_186 = arith.constant 1.42141378 : f32
    %561 = vector.broadcast %cst_186 : f32 to vector<2x32xf32>
    %562 = arith.addf %560, %561 : vector<2x32xf32>
    %563 = arith.mulf %562, %555 : vector<2x32xf32>
    %cst_187 = arith.constant -0.284496725 : f32
    %564 = vector.broadcast %cst_187 : f32 to vector<2x32xf32>
    %565 = arith.addf %563, %564 : vector<2x32xf32>
    %566 = arith.mulf %565, %555 : vector<2x32xf32>
    %cst_188 = arith.constant 0.254829586 : f32
    %567 = vector.broadcast %cst_188 : f32 to vector<2x32xf32>
    %568 = arith.addf %566, %567 : vector<2x32xf32>
    %569 = arith.mulf %568, %555 : vector<2x32xf32>
    %cst_189 = arith.constant 0.000000e+00 : f32
    %570 = vector.broadcast %cst_189 : f32 to vector<2x32xf32>
    %571 = arith.subf %570, %549 : vector<2x32xf32>
    %572 = arith.mulf %571, %549 : vector<2x32xf32>
    %573 = math.exp %572 : vector<2x32xf32>
    %574 = arith.mulf %569, %573 : vector<2x32xf32>
    %cst_190 = arith.constant 1.000000e+00 : f32
    %575 = vector.broadcast %cst_190 : f32 to vector<2x32xf32>
    %576 = arith.subf %575, %574 : vector<2x32xf32>
    %cst_191 = arith.constant 0.000000e+00 : f32
    %577 = vector.broadcast %cst_191 : f32 to vector<2x32xf32>
    %578 = arith.cmpf oge, %548, %577 : vector<2x32xf32>
    %cst_192 = arith.constant 0.000000e+00 : f32
    %579 = vector.broadcast %cst_192 : f32 to vector<2x32xf32>
    %580 = arith.subf %579, %576 : vector<2x32xf32>
    %581 = arith.select %578, %576, %580 : vector<2x32xi1>, vector<2x32xf32>
    %cst_193 = arith.constant 1.000000e+00 : f32
    %582 = vector.broadcast %cst_193 : f32 to vector<2x32xf32>
    %583 = arith.addf %582, %581 : vector<2x32xf32>
    %584 = arith.mulf %546, %583 : vector<2x32xf32>
    %585 = arith.truncf %584 : vector<2x32xf32> to vector<2x32xbf16>
    %c1152 = arith.constant 1152 : index
    %c0_194 = arith.constant 0 : index
    %586 = vector.load %arg6[%c1152, %c0_194] : memref<1184x256xbf16, #tpu.memory_space<vmem>>, vector<32x4xbf16>
    %cst_195 = arith.constant dense<0.000000e+00> : vector<2x4xf32>
    %587 = tpu.matmul %585, %586, %cst_195 {dimension_numbers = #tpu.dot_dimension_numbers<[1], [0], [0], [1], [0, 0, 1, 1], [], []>} : vector<2x32xbf16>, vector<32x4xbf16>, vector<2x4xf32> -> vector<2x4xf32>
    %c144 = arith.constant 144 : index
    %c0_196 = arith.constant 0 : index
    %588 = vector.load %arg7[%c144, %c0_196] : memref<152x256xf32, #tpu.memory_space<vmem>>, vector<1x4xf32>
    %589 = vector.broadcast %588 : vector<1x4xf32> to vector<2x4xf32>
    %590 = arith.addf %587, %589 : vector<2x4xf32>
    %c0_197 = arith.constant 0 : index
    %c0_198 = arith.constant 0 : index
    %591 = vector.load %arg3[%c0_197, %c0_198] : memref<2x4xf32, #tpu.memory_space<vmem>>, vector<2x4xf32>
    %592 = arith.mulf %590, %591 : vector<2x4xf32>
    %cst_199 = arith.constant 1.000000e+00 : f32
    %593 = vector.broadcast %cst_199 : f32 to vector<2x4xf32>
    %594 = arith.subf %593, %591 : vector<2x4xf32>
    %cst_200 = arith.constant 1.000000e+10 : f32
    %595 = vector.broadcast %cst_200 : f32 to vector<2x4xf32>
    %596 = arith.mulf %595, %594 : vector<2x4xf32>
    %597 = arith.subf %592, %596 : vector<2x4xf32>
    %cst_201 = arith.constant dense<0xFF800000> : vector<2xf32>
    %598 = vector.multi_reduction <maximumf>, %597, %cst_201 [1] : vector<2x4xf32> to vector<2xf32>
    %599 = vector.shape_cast %598 : vector<2xf32> to vector<2x1xf32>
    %600 = vector.broadcast %599 : vector<2x1xf32> to vector<2x4xf32>
    %601 = arith.subf %597, %600 : vector<2x4xf32>
    %602 = math.exp %601 : vector<2x4xf32>
    %cst_202 = arith.constant dense<0.000000e+00> : vector<2xf32>
    %603 = vector.multi_reduction <add>, %602, %cst_202 [1] : vector<2x4xf32> to vector<2xf32>
    %604 = vector.shape_cast %603 : vector<2xf32> to vector<2x1xf32>
    %605 = vector.broadcast %604 : vector<2x1xf32> to vector<2x4xf32>
    %606 = arith.divf %602, %605 : vector<2x4xf32>
    %c0_203 = arith.constant 0 : index
    %c0_204 = arith.constant 0 : index
    %607 = vector.load %arg8[%c0_203, %c0_204] : memref<2x4xf32, #tpu.memory_space<vmem>>, vector<2x4xf32>
    tpu.vector_store %arg8[%c0_203, %c0_204], %606 {strides = array<i32>} : memref<2x4xf32, #tpu.memory_space<vmem>>, vector<2x4xf32>,
    return
  }
}

</mosaic_0001>

<llo_original>
// kernel: eq.11
$region0: #{eq.11}
  %s0 = inlined_call_operand.vmem [shape: s32[2,4], index: 0, kind: input, shape index: {}]
  %s1 = inlined_call_operand.vmem [shape: s32[8], index: 1, kind: output, shape index: {}]
  $region1: #{eq.11} parent=0
    #allocation0 [shape = 'u8[4096]{0}', space=vmem, size = 0x1000, scoped, tag = 'scoped mem for output reshape']
    #allocation1 [shape = 'u8[4096]{0}', space=vmem, size = 0x1000, scoped, tag = 'scoped mem for input reshape']
    %s3 = sshll.u32 1, 2
    %s4 = ssub.s32 %s3, 1
    %v5 = vld [vmem:[%s0] sm:%s4]
    %6 = vst [vmem:[#allocation1] sm:%s4] %v5
    %v7 = vld [vmem:[#allocation1] sm:$0x1]
    %vm8 = vcmask 31744
    %9 = vst.msk [vmem:[#allocation0] sm:$0x1] %vm8, %v7
    %s10 = scalar_lea.vmem [#allocation1], 1
    %v11 = vld [vmem:[%s10] sm:$0x1]
    %12 = vrot.lane.b32.xlu0 %v11, 4
    %v13 = vpop.permute.xlu0 %12
    %vm14 = vcmask 64544
    %15 = vst.msk [vmem:[#allocation0] sm:$0x1] %vm14, %v13
    %s17 = sshll.u32 1, 1
    %s18 = ssub.s32 %s17, 1
    %v20 = vld [vmem:[#allocation0] sm:%s18]
    %s21 = sshll.u32 1, 1
    %s22 = ssub.s32 %s21, 1
    %23 = vst [vmem:[%s1] sm:%s22] %v20

// kernel: forward.1
$region0: #{forward.1}
  #allocation0 [shape = 'u32[]', space=smem, size = 0x4, offset = 0x4, fixed_abs, tag = 'smem constant byte address 0x4 - core index']
  #allocation1 [shape = 'u32[144,128]{1,0:T(1,128)}', space=vmem, size = 0x12000, scoped, tag = 'internal scratch']
  %s0 = inlined_call_operand.vmem [shape: f32[32,40], index: 0, kind: input, shape index: {}]
  %s1 = inlined_call_operand.vmem [shape: f32[8,8], index: 1, kind: input, shape index: {}]
  %s2 = inlined_call_operand.vmem [shape: f32[2,8], index: 2, kind: input, shape index: {}]
  %s3 = inlined_call_operand.vmem [shape: f32[2,4], index: 3, kind: input, shape index: {}]
  %s4 = inlined_call_operand.vmem [shape: f32[2,32], index: 4, kind: input, shape index: {}]
  %s5 = inlined_call_operand.vmem [shape: f32[2,1], index: 5, kind: input, shape index: {}]
  %s6 = inlined_call_operand.hbm [shape: bf16[1184,256], index: 6, kind: input, shape index: {}]
  %s7 = inlined_call_operand.vmem [shape: f32[152,256], index: 7, kind: input, shape index: {}]
  %s8 = inlined_call_operand.hbm [shape: f32[2,4], index: 8, kind: output, shape index: {}]
  %s9 = sld [smem:[#allocation0]]
  $region46: #{forward.1} parent=0
    _
  %s11 = ssub.s32 1, %s9
  %s12 = scalar_select 0, %s11, %s9
  $region1: #{forward.1} parent=0
    #allocation2 [shape = 'u8[606208]{0}', space=vmem, size = 0x94000, scoped, tag = 'input window, operand 6, single buffered']
    #allocation3 [shape = 's32[1]{0}', space=sflag, size = 0x4, scoped, tag = 'scoped memory for forward.1']
    #allocation4 [shape = 's32[1]{0}', space=sflag, size = 0x4, scoped, tag = 'scoped memory for forward.1']
    #allocation5 [shape = 'u8[1024]{0}', space=vmem, size = 0x400, scoped, tag = 'output window, operand 0, single buffered']
    %13 = vsyncpa [#allocation3], 0
    %14 = vsyncpa [#allocation4], 0
    // Predicated region
    $region2: #{forward.1} parent=1 // pred_check
      _
    $region3: #{forward.1} parent=1 // pred_check_branch
      %16 = sbr.rel (0) target = $region5
    $region4: #{forward.1} parent=1 // pred_region
      _
    $region5: #{forward.1} parent=1 // pred_fallthru
      _
    // Predicated region
    $region6: #{forward.1} parent=1 // pred_check
      _
    $region7: #{forward.1} parent=1 // pred_check_branch
      %18 = sbr.rel (0) target = $region9
    $region8: #{forward.1} parent=1 // pred_region
      _
    $region9: #{forward.1} parent=1 // pred_fallthru
      _
    // Predicated region
    $region10: #{forward.1} parent=1 // pred_check
      _
    $region11: #{forward.1} parent=1 // pred_check_branch
      %20 = sbr.rel (0) target = $region13
    $region12: #{forward.1} parent=1 // pred_region
      _
    $region13: #{forward.1} parent=1 // pred_fallthru
      _
    // Predicated region
    $region14: #{forward.1} parent=1 // pred_check
      _
    $region15: #{forward.1} parent=1 // pred_check_branch
      %22 = sbr.rel (0) target = $region17
    $region16: #{forward.1} parent=1 // pred_region
      _
    $region17: #{forward.1} parent=1 // pred_fallthru
      _
    // Predicated region
    $region18: #{forward.1} parent=1 // pred_check
      _
    $region19: #{forward.1} parent=1 // pred_check_branch
      %24 = sbr.rel (0) target = $region21
    $region20: #{forward.1} parent=1 // pred_region
      _
    $region21: #{forward.1} parent=1 // pred_fallthru
      _
    // Predicated region
    $region22: #{forward.1} parent=1 // pred_check
      _
    $region23: #{forward.1} parent=1 // pred_check_branch
      %26 = sbr.rel (0) target = $region25
    $region24: #{forward.1} parent=1 // pred_region
      _
    $region25: #{forward.1} parent=1 // pred_fallthru
      _
    // Predicated region
    $region26: #{forward.1} parent=1 // pred_check
      _
    $region27: #{forward.1} parent=1 // pred_check_branch
      %28 = sbr.rel (0) target = $region29
    $region28: #{forward.1} parent=1 // pred_region
      %s30 = ssub.s32 18944, 18944
      %31 = vsyncadd [#allocation3], %s30
      %s32 = sshll.u32 [#allocation2], 4
      %s33 = int_to_ptr.vmem [resolvable:$true] %s32
      %38 = dma.hbm_to_vmem [thread:$0]  %s6, 18944, %s33, [#allocation3], 128, 128, 8
    $region29: #{forward.1} parent=1 // pred_fallthru
      _
    // Predicated region
    $region30: #{forward.1} parent=1 // pred_check
      _
    $region31: #{forward.1} parent=1 // pred_check_branch
      %40 = sbr.rel (0) target = $region33
    $region32: #{forward.1} parent=1 // pred_region
      _
    $region33: #{forward.1} parent=1 // pred_fallthru
      _
    // Predicated region
    $region34: #{forward.1} parent=1 // pred_check
      _
    $region35: #{forward.1} parent=1 // pred_check_branch
      %42 = sbr.rel (0) target = $region37
    $region36: #{forward.1} parent=1 // pred_region
      %43 = dma.done [#allocation3], 18944
    $region37: #{forward.1} parent=1 // pred_fallthru
      _
    %v45 = vld [vmem:[%s0] sm:$0xff]
    %v46 = vld [vmem:[%s0 + $0x8] sm:$0xff]
    %v47 = vld [vmem:[%s0 + $0x10] sm:$0xff]
    %v48 = vld [vmem:[%s0 + $0x18] sm:$0xff]
    %v49 = vpack.c.bf16 %v46, %v45
    %v50 = vpack.c.bf16 %v48, %v47
    %v51 = vld [vmem:[#allocation2] sm:$0xff]
    %v52 = vld [vmem:[#allocation2 + $0x8] sm:$0xff]
    %v53 = vld [vmem:[#allocation2 + $0x10] sm:$0xff]
    %v54 = vld [vmem:[#allocation2 + $0x18] sm:$0xff]
    %v55 = vld [vmem:[#allocation2 + $0x20] sm:$0xff]
    %v56 = vld [vmem:[%s7] ss:$8 sm:$0x3]
    %v58 = vlaneseq
    %v59 = vshrl.u32 %v58, 7
    %v60 = vsub.s32 0, %v59
    %v61 = vrot.slane %v56, %v60
    %v62 = vlaneseq
    %v63 = vshrl.u32 %v62, 7
    %v64 = vsub.s32 1, %v63
    %v65 = vrot.slane %v56, %v64
    %v73 = vunpack.c.l.b16 %v51
    %v74 = vunpack.c.h.b16 %v51
    %v75 = vunpack.c.l.b16 %v52
    %v76 = vunpack.c.h.b16 %v52
    %v77 = vunpack.c.l.b16 %v53
    %v78 = vunpack.c.h.b16 %v53
    %v79 = vunpack.c.l.b16 %v54
    %v80 = vunpack.c.h.b16 %v54
    %v81 = vunpack.c.l.b16 %v55
    %v82 = vunpack.c.h.b16 %v55
    %v83 = vpack.c.b16 %v75, %v73
    %v84 = vpack.c.b16 %v76, %v74
    %v85 = vpack.c.b16 %v79, %v77
    %v86 = vpack.c.b16 %v80, %v78
    %v87 = vpack.c.b16 %v81, %v81
    %v88 = vpack.c.b16 %v82, %v82
    %vm93 = vcmask 326656
    %v95 = vsel %vm93, %v49, 0
    %v98 = vsel %vm93, %v50, 0
    %vm100 = vcmask 1043456
    %v102 = vsel %vm100, %v87, 0
    %v105 = vsel %vm100, %v88, 0
    %107 = vmatprep.subr.bf16.mxu0 0
    %108 = vmatpush1.bf16.msra.mxu0 0
    %109 = vmatprep.subr.bf16.mxu0 0
    %110 = vmatpush1.bf16.msra.mxu0 0
    %111 = vmatprep.subr.bf16.mxu0 0
    %112 = vmatpush1.bf16.msra.mxu0 0
    %113 = vmatprep.subr.bf16.mxu0 0
    %114 = vmatpush1.bf16.msra.mxu0 0
    %115 = vmatprep.subr.bf16.mxu0 0
    %116 = vmatpush1.bf16.msra.mxu0 0
    %117 = vmatprep.subr.bf16.mxu0 %v105
    %118 = vmatpush1.bf16.msra.mxu0 %v102
    %119 = vmatprep.subr.bf16.mxu0 %v86
    %120 = vmatpush1.bf16.msra.mxu0 %v85
    %121 = vmatprep.subr.bf16.mxu0 %v84
    %122 = vmatpush1.bf16.msra.mxu0 %v83
    %123 = vmatprep.subr.bf16.mxu0 0
    %124 = vmatpush2.bf16.msra.mxu0 0
    %125 = vmatprep.subr.bf16.mxu0 0
    %126 = vmatpush2.bf16.msra.mxu0 0
    %127 = vmatprep.subr.bf16.mxu0 0
    %128 = vmatpush2.bf16.msra.mxu0 0
    %129 = vmatprep.subr.bf16.mxu0 0
    %130 = vmatpush2.bf16.msra.mxu0 0
    %131 = vmatprep.subr.bf16.mxu0 0
    %132 = vmatpush2.bf16.msra.mxu0 0
    %133 = vmatprep.subr.bf16.mxu0 0
    %134 = vmatpush2.bf16.msra.mxu0 0
    %135 = vmatprep.subr.bf16.mxu0 0
    %136 = vmatpush2.bf16.msra.mxu0 0
    %137 = vmatprep.subr.bf16.mxu0 0
    %138 = vmatpush2.bf16.msra.mxu0 0
    %139 = vmatprep.mubr.bf16.mxu0 0
    %140 = vmatmul.mubr.bf16.gmra.mxu0 %v95
    %v141 = vpop.f32.mrf.mxu0
    %v142 = vadd.f32 %v61, %v141
    %v143 = vpop.f32.mrf.mxu0
    %v144 = vadd.f32 %v65, %v143
    %v145 = vpop.f32.mrf.mxu0
    %v146 = vadd.f32 %v61, %v145
    %v147 = vpop.f32.mrf.mxu0
    %v148 = vadd.f32 %v65, %v147
    %149 = vmatprep.mubr.bf16.mxu0 0
    %150 = vmatmul.mubr.bf16.gmra.mxu0 %v98
    %v151 = vpop.f32.mrf.mxu0
    %v152 = vadd.f32 %v61, %v151
    %v153 = vpop.f32.mrf.mxu0
    %v154 = vadd.f32 %v65, %v153
    %v155 = vpop.f32.mrf.mxu0
    %v156 = vadd.f32 %v61, %v155
    %v157 = vpop.f32.mrf.mxu0
    %v158 = vadd.f32 %v65, %v157
    %159 = vdwg.mxu0
    %v160 = vmul.f32 %v142, 0.5
    %v161 = vmul.f32 %v144, 0.5
    %v162 = vmul.f32 %v146, 0.5
    %v163 = vmul.f32 %v148, 0.5
    %v164 = vmul.f32 %v152, 0.5
    %v165 = vmul.f32 %v154, 0.5
    %v166 = vmul.f32 %v156, 0.5
    %v167 = vmul.f32 %v158, 0.5
    %v168 = vmul.f32 %v142, 0.70710677
    %v169 = vmul.f32 %v144, 0.70710677
    %v170 = vmul.f32 %v146, 0.70710677
    %v171 = vmul.f32 %v148, 0.70710677
    %v172 = vmul.f32 %v152, 0.70710677
    %v173 = vmul.f32 %v154, 0.70710677
    %v174 = vmul.f32 %v156, 0.70710677
    %v175 = vmul.f32 %v158, 0.70710677
    %v176 = vand.u32 2147483647, %v168
    %v177 = vand.u32 2147483647, %v169
    %v178 = vand.u32 2147483647, %v170
    %v179 = vand.u32 2147483647, %v171
    %v180 = vand.u32 2147483647, %v172
    %v181 = vand.u32 2147483647, %v173
    %v182 = vand.u32 2147483647, %v174
    %v183 = vand.u32 2147483647, %v175
    %v184 = vmul.f32 %v176, 0.3275911
    %v185 = vmul.f32 %v177, 0.3275911
    %v186 = vmul.f32 %v178, 0.3275911
    %v187 = vmul.f32 %v179, 0.3275911
    %v188 = vmul.f32 %v180, 0.3275911
    %v189 = vmul.f32 %v181, 0.3275911
    %v190 = vmul.f32 %v182, 0.3275911
    %v191 = vmul.f32 %v183, 0.3275911
    %v192 = vadd.f32 %v184, 1.0
    %v193 = vadd.f32 %v185, 1.0
    %v194 = vadd.f32 %v186, 1.0
    %v195 = vadd.f32 %v187, 1.0
    %v196 = vadd.f32 %v188, 1.0
    %v197 = vadd.f32 %v189, 1.0
    %v198 = vadd.f32 %v190, 1.0
    %v199 = vadd.f32 %v191, 1.0
    %v200 = vrcp.pop %v192
    %v201 = vmul.f32 1.0, %v200
    %v202 = vrcp.pop %v193
    %v203 = vmul.f32 1.0, %v202
    %v204 = vrcp.pop %v194
    %v205 = vmul.f32 1.0, %v204
    %v206 = vrcp.pop %v195
    %v207 = vmul.f32 1.0, %v206
    %v208 = vrcp.pop %v196
    %v209 = vmul.f32 1.0, %v208
    %v210 = vrcp.pop %v197
    %v211 = vmul.f32 1.0, %v210
    %v212 = vrcp.pop %v198
    %v213 = vmul.f32 1.0, %v212
    %v214 = vrcp.pop %v199
    %v215 = vmul.f32 1.0, %v214
    %v216 = vmul.f32 %v201, 1.0614054
    %v217 = vmul.f32 %v203, 1.0614054
    %v218 = vmul.f32 %v205, 1.0614054
    %v219 = vmul.f32 %v207, 1.0614054
    %v220 = vmul.f32 %v209, 1.0614054
    %v221 = vmul.f32 %v211, 1.0614054
    %v222 = vmul.f32 %v213, 1.0614054
    %v223 = vmul.f32 %v215, 1.0614054
    %v224 = vadd.f32 %v216, -1.4531521
    %v225 = vadd.f32 %v217, -1.4531521
    %v226 = vadd.f32 %v218, -1.4531521
    %v227 = vadd.f32 %v219, -1.4531521
    %v228 = vadd.f32 %v220, -1.4531521
    %v229 = vadd.f32 %v221, -1.4531521
    %v230 = vadd.f32 %v222, -1.4531521
    %v231 = vadd.f32 %v223, -1.4531521
    %v232 = vmul.f32 %v224, %v201
    %v233 = vmul.f32 %v225, %v203
    %v234 = vmul.f32 %v226, %v205
    %v235 = vmul.f32 %v227, %v207
    %v236 = vmul.f32 %v228, %v209
    %v237 = vmul.f32 %v229, %v211
    %v238 = vmul.f32 %v230, %v213
    %v239 = vmul.f32 %v231, %v215
    %v240 = vadd.f32 %v232, 1.4214138
    %v241 = vadd.f32 %v233, 1.4214138
    %v242 = vadd.f32 %v234, 1.4214138
    %v243 = vadd.f32 %v235, 1.4214138
    %v244 = vadd.f32 %v236, 1.4214138
    %v245 = vadd.f32 %v237, 1.4214138
    %v246 = vadd.f32 %v238, 1.4214138
    %v247 = vadd.f32 %v239, 1.4214138
    %v248 = vmul.f32 %v240, %v201
    %v249 = vmul.f32 %v241, %v203
    %v250 = vmul.f32 %v242, %v205
    %v251 = vmul.f32 %v243, %v207
    %v252 = vmul.f32 %v244, %v209
    %v253 = vmul.f32 %v245, %v211
    %v254 = vmul.f32 %v246, %v213
    %v255 = vmul.f32 %v247, %v215
    %v256 = vadd.f32 %v248, -0.28449672
    %v257 = vadd.f32 %v249, -0.28449672
    %v258 = vadd.f32 %v250, -0.28449672
    %v259 = vadd.f32 %v251, -0.28449672
    %v260 = vadd.f32 %v252, -0.28449672
    %v261 = vadd.f32 %v253, -0.28449672
    %v262 = vadd.f32 %v254, -0.28449672
    %v263 = vadd.f32 %v255, -0.28449672
    %v264 = vmul.f32 %v256, %v201
    %v265 = vmul.f32 %v257, %v203
    %v266 = vmul.f32 %v258, %v205
    %v267 = vmul.f32 %v259, %v207
    %v268 = vmul.f32 %v260, %v209
    %v269 = vmul.f32 %v261, %v211
    %v270 = vmul.f32 %v262, %v213
    %v271 = vmul.f32 %v263, %v215
    %v272 = vadd.f32 %v264, 0.2548296
    %v273 = vadd.f32 %v265, 0.2548296
    %v274 = vadd.f32 %v266, 0.2548296
    %v275 = vadd.f32 %v267, 0.2548296
    %v276 = vadd.f32 %v268, 0.2548296
    %v277 = vadd.f32 %v269, 0.2548296
    %v278 = vadd.f32 %v270, 0.2548296
    %v279 = vadd.f32 %v271, 0.2548296
    %v280 = vmul.f32 %v272, %v201
    %v281 = vmul.f32 %v273, %v203
    %v282 = vmul.f32 %v274, %v205
    %v283 = vmul.f32 %v275, %v207
    %v284 = vmul.f32 %v276, %v209
    %v285 = vmul.f32 %v277, %v211
    %v286 = vmul.f32 %v278, %v213
    %v287 = vmul.f32 %v279, %v215
    %v288 = vsub.f32 0.0, %v176
    %v289 = vsub.f32 0.0, %v177
    %v290 = vsub.f32 0.0, %v178
    %v291 = vsub.f32 0.0, %v179
    %v292 = vsub.f32 0.0, %v180
    %v293 = vsub.f32 0.0, %v181
    %v294 = vsub.f32 0.0, %v182
    %v295 = vsub.f32 0.0, %v183
    %v296 = vmul.f32 %v288, %v176
    %v297 = vmul.f32 %v289, %v177
    %v298 = vmul.f32 %v290, %v178
    %v299 = vmul.f32 %v291, %v179
    %v300 = vmul.f32 %v292, %v180
    %v301 = vmul.f32 %v293, %v181
    %v302 = vmul.f32 %v294, %v182
    %v303 = vmul.f32 %v295, %v183
    %v304 = vmul.f32 %v296, 1.442695
    %v305 = vpow.pop %v304
    %v306 = vmul.f32 %v297, 1.442695
    %v307 = vpow.pop %v306
    %v308 = vmul.f32 %v298, 1.442695
    %v309 = vpow.pop %v308
    %v310 = vmul.f32 %v299, 1.442695
    %v311 = vpow.pop %v310
    %v312 = vmul.f32 %v300, 1.442695
    %v313 = vpow.pop %v312
    %v314 = vmul.f32 %v301, 1.442695
    %v315 = vpow.pop %v314
    %v316 = vmul.f32 %v302, 1.442695
    %v317 = vpow.pop %v316
    %v318 = vmul.f32 %v303, 1.442695
    %v319 = vpow.pop %v318
    %v320 = vmul.f32 %v280, %v305
    %v321 = vmul.f32 %v281, %v307
    %v322 = vmul.f32 %v282, %v309
    %v323 = vmul.f32 %v283, %v311
    %v324 = vmul.f32 %v284, %v313
    %v325 = vmul.f32 %v285, %v315
    %v326 = vmul.f32 %v286, %v317
    %v327 = vmul.f32 %v287, %v319
    %v328 = vsub.f32 1.0, %v320
    %v329 = vsub.f32 1.0, %v321
    %v330 = vsub.f32 1.0, %v322
    %v331 = vsub.f32 1.0, %v323
    %v332 = vsub.f32 1.0, %v324
    %v333 = vsub.f32 1.0, %v325
    %v334 = vsub.f32 1.0, %v326
    %v335 = vsub.f32 1.0, %v327
    %vm336 = vcmp.ge.f32.partialorder %v168, 0.0
    %vm337 = vcmp.ge.f32.partialorder %v169, 0.0
    %vm338 = vcmp.ge.f32.partialorder %v170, 0.0
    %vm339 = vcmp.ge.f32.partialorder %v171, 0.0
    %vm340 = vcmp.ge.f32.partialorder %v172, 0.0
    %vm341 = vcmp.ge.f32.partialorder %v173, 0.0
    %vm342 = vcmp.ge.f32.partialorder %v174, 0.0
    %vm343 = vcmp.ge.f32.partialorder %v175, 0.0
    %v344 = vsub.f32 0.0, %v328
    %v345 = vsub.f32 0.0, %v329
    %v346 = vsub.f32 0.0, %v330
    %v347 = vsub.f32 0.0, %v331
    %v348 = vsub.f32 0.0, %v332
    %v349 = vsub.f32 0.0, %v333
    %v350 = vsub.f32 0.0, %v334
    %v351 = vsub.f32 0.0, %v335
    %v352 = vsel %vm336, %v328, %v344
    %v353 = vsel %vm337, %v329, %v345
    %v354 = vsel %vm338, %v330, %v346
    %v355 = vsel %vm339, %v331, %v347
    %v356 = vsel %vm340, %v332, %v348
    %v357 = vsel %vm341, %v333, %v349
    %v358 = vsel %vm342, %v334, %v350
    %v359 = vsel %vm343, %v335, %v351
    %v360 = vadd.f32 %v352, 1.0
    %v361 = vadd.f32 %v353, 1.0
    %v362 = vadd.f32 %v354, 1.0
    %v363 = vadd.f32 %v355, 1.0
    %v364 = vadd.f32 %v356, 1.0
    %v365 = vadd.f32 %v357, 1.0
    %v366 = vadd.f32 %v358, 1.0
    %v367 = vadd.f32 %v359, 1.0
    %v368 = vmul.f32 %v160, %v360
    %v369 = vmul.f32 %v161, %v361
    %v370 = vmul.f32 %v162, %v362
    %v371 = vmul.f32 %v163, %v363
    %v372 = vmul.f32 %v164, %v364
    %v373 = vmul.f32 %v165, %v365
    %v374 = vmul.f32 %v166, %v366
    %v375 = vmul.f32 %v167, %v367
    %380 = vrot.lane.b32.xlu0 %v368, 64
    %v381 = vpop.permute.xlu0 %380
    %382 = vrot.lane.b32.xlu0 %v370, 64
    %v383 = vpop.permute.xlu0 %382
    %384 = vrot.lane.b32.xlu0 %v372, 64
    %v385 = vpop.permute.xlu0 %384
    %386 = vrot.lane.b32.xlu0 %v374, 64
    %v387 = vpop.permute.xlu0 %386
    %v392 = vmax.f32 %v368, %v381
    %v393 = vmax.f32 %v370, %v383
    %v394 = vmax.f32 %v372, %v385
    %v395 = vmax.f32 %v374, %v387
    %400 = vrot.lane.b32.xlu0 %v369, 64
    %v401 = vpop.permute.xlu0 %400
    %402 = vrot.lane.b32.xlu0 %v371, 64
    %v403 = vpop.permute.xlu0 %402
    %404 = vrot.lane.b32.xlu0 %v373, 64
    %v405 = vpop.permute.xlu0 %404
    %406 = vrot.lane.b32.xlu0 %v375, 64
    %v407 = vpop.permute.xlu0 %406
    %v412 = vmax.f32 %v369, %v401
    %v413 = vmax.f32 %v371, %v403
    %v414 = vmax.f32 %v373, %v405
    %v415 = vmax.f32 %v375, %v407
    %420 = vrot.lane.b32.xlu0 %v412, 64
    %v421 = vpop.permute.xlu0 %420
    %422 = vrot.lane.b32.xlu0 %v413, 64
    %v423 = vpop.permute.xlu0 %422
    %424 = vrot.lane.b32.xlu0 %v414, 64
    %v425 = vpop.permute.xlu0 %424
    %426 = vrot.lane.b32.xlu0 %v415, 64
    %v427 = vpop.permute.xlu0 %426
    %vm432 = vcmask 523264
    %v433 = vsel %vm432, %v392, %v421
    %v434 = vsel %vm432, %v393, %v423
    %v435 = vsel %vm432, %v394, %v425
    %v436 = vsel %vm432, %v395, %v427
    %v437 = vpack.c.bf16 %v433, 0.0
    %v438 = vpack.c.bf16 %v434, %v433
    %v439 = vpack.c.bf16 %v435, %v434
    %v440 = vpack.c.bf16 %v436, %v435
    %v441 = vpack.c.bf16 0.0, %v436
    %v442 = vld [vmem:[#allocation2 + $0x30] sm:$0xf]
    %v443 = vld [vmem:[#allocation2 + $0x38] sm:$0xf]
    %v444 = vld [vmem:[#allocation2 + $0x40] sm:$0xf]
    %v445 = vld [vmem:[#allocation2 + $0x48] sm:$0xf]
    %v446 = vld [vmem:[#allocation2 + $0x50] sm:$0xf]
    %v447 = vld [vmem:[#allocation2 + $0x58] sm:$0xf]
    %v448 = vld [vmem:[#allocation2 + $0x60] sm:$0xf]
    %v449 = vld [vmem:[#allocation2 + $0x68] sm:$0xf]
    %v450 = vld [vmem:[#allocation2 + $0x70] sm:$0xf]
    %v451 = vld [vmem:[#allocation2 + $0x78] sm:$0xf]
    %v452 = vld [vmem:[#allocation2 + $0x80] sm:$0xf]
    %v453 = vld [vmem:[#allocation2 + $0x88] sm:$0xf]
    %v454 = vld [vmem:[#allocation2 + $0x90] sm:$0xf]
    %v455 = vld [vmem:[#allocation2 + $0x98] sm:$0xf]
    %v456 = vld [vmem:[#allocation2 + $0xa0] sm:$0xf]
    %v457 = vld [vmem:[#allocation2 + $0xa8] sm:$0xf]
    %v458 = vld [vmem:[#allocation2 + $0xb0] sm:$0xf]
    %v459 = vld [vmem:[#allocation2 + $0xb8] sm:$0xf]
    %v460 = vld [vmem:[#allocation2 + $0xc0] sm:$0xf]
    %v461 = vld [vmem:[#allocation2 + $0xc8] sm:$0xf]
    %v462 = vld [vmem:[#allocation2 + $0xd0] sm:$0xf]
    %v463 = vld [vmem:[#allocation2 + $0xd8] sm:$0xf]
    %v464 = vld [vmem:[#allocation2 + $0xe0] sm:$0xf]
    %v465 = vld [vmem:[#allocation2 + $0xe8] sm:$0xf]
    %v466 = vld [vmem:[#allocation2 + $0xf0] sm:$0xf]
    %v467 = vld [vmem:[#allocation2 + $0xf8] sm:$0xf]
    %v468 = vld [vmem:[#allocation2 + $0x100] sm:$0xf]
    %v469 = vld [vmem:[#allocation2 + $0x108] sm:$0xf]
    %v470 = vld [vmem:[#allocation2 + $0x110] sm:$0xf]
    %v471 = vld [vmem:[#allocation2 + $0x118] sm:$0xf]
    %v472 = vld [vmem:[#allocation2 + $0x120] sm:$0xf]
    %v473 = vld [vmem:[#allocation2 + $0x128] sm:$0xf]
    %v474 = vld [vmem:[#allocation2 + $0x130] sm:$0xf]
    %v475 = vld [vmem:[#allocation2 + $0x138] sm:$0xf]
    %v476 = vld [vmem:[#allocation2 + $0x140] sm:$0xf]
    %v477 = vld [vmem:[#allocation2 + $0x148] sm:$0xf]
    %v478 = vld [vmem:[#allocation2 + $0x150] sm:$0xf]
    %v479 = vld [vmem:[#allocation2 + $0x158] sm:$0xf]
    %v480 = vld [vmem:[#allocation2 + $0x160] sm:$0xf]
    %v481 = vld [vmem:[#allocation2 + $0x168] sm:$0xf]
    %v482 = vld [vmem:[#allocation2 + $0x170] sm:$0xf]
    %v483 = vld [vmem:[#allocation2 + $0x178] sm:$0xf]
    %v484 = vld [vmem:[#allocation2 + $0x180] sm:$0xf]
    %v485 = vld [vmem:[#allocation2 + $0x188] sm:$0xf]
    %v486 = vld [vmem:[#allocation2 + $0x190] sm:$0xf]
    %v487 = vld [vmem:[#allocation2 + $0x198] sm:$0xf]
    %v488 = vld [vmem:[#allocation2 + $0x1a0] sm:$0xf]
    %v489 = vld [vmem:[#allocation2 + $0x1a8] sm:$0xf]
    %v490 = vld [vmem:[%s7 + $0x10] ss:$0 sm:$0xff]
    %v539 = vunpack.c.l.b16 %v442
    %v540 = vunpack.c.l.b16 %v443
    %v541 = vunpack.c.l.b16 %v444
    %v542 = vunpack.c.l.b16 %v445
    %v543 = vunpack.c.l.b16 %v446
    %v544 = vunpack.c.l.b16 %v447
    %v545 = vunpack.c.l.b16 %v448
    %v546 = vunpack.c.l.b16 %v449
    %v547 = vunpack.c.l.b16 %v450
    %v548 = vunpack.c.l.b16 %v451
    %v549 = vunpack.c.l.b16 %v452
    %v550 = vunpack.c.l.b16 %v453
    %v551 = vunpack.c.l.b16 %v454
    %v552 = vunpack.c.l.b16 %v455
    %v553 = vunpack.c.l.b16 %v456
    %v554 = vunpack.c.l.b16 %v457
    %v555 = vunpack.c.l.b16 %v458
    %v556 = vunpack.c.l.b16 %v459
    %v557 = vunpack.c.l.b16 %v460
    %v558 = vunpack.c.l.b16 %v461
    %v559 = vunpack.c.l.b16 %v462
    %v560 = vunpack.c.l.b16 %v463
    %v561 = vunpack.c.l.b16 %v464
    %v562 = vunpack.c.l.b16 %v465
    %v563 = vunpack.c.l.b16 %v466
    %v564 = vunpack.c.l.b16 %v467
    %v565 = vunpack.c.l.b16 %v468
    %v566 = vunpack.c.l.b16 %v469
    %v567 = vunpack.c.l.b16 %v470
    %v568 = vunpack.c.l.b16 %v471
    %v569 = vunpack.c.l.b16 %v472
    %v570 = vunpack.c.l.b16 %v473
    %v571 = vunpack.c.l.b16 %v474
    %v572 = vunpack.c.l.b16 %v475
    %v573 = vunpack.c.l.b16 %v476
    %v574 = vunpack.c.l.b16 %v477
    %v575 = vunpack.c.l.b16 %v478
    %v576 = vunpack.c.l.b16 %v479
    %v577 = vunpack.c.l.b16 %v480
    %v578 = vunpack.c.l.b16 %v481
    %v579 = vunpack.c.l.b16 %v482
    %v580 = vunpack.c.l.b16 %v483
    %v581 = vunpack.c.l.b16 %v484
    %v582 = vunpack.c.l.b16 %v485
    %v583 = vunpack.c.l.b16 %v486
    %v584 = vunpack.c.l.b16 %v487
    %v585 = vunpack.c.l.b16 %v488
    %v586 = vunpack.c.l.b16 %v489
    %v587 = vpack.c.b16 %v540, %v539
    %v588 = vpack.c.b16 %v542, %v541
    %v589 = vpack.c.b16 %v544, %v543
    %v590 = vpack.c.b16 %v546, %v545
    %v591 = vpack.c.b16 %v548, %v547
    %v592 = vpack.c.b16 %v550, %v549
    %v593 = vpack.c.b16 %v552, %v551
    %v594 = vpack.c.b16 %v554, %v553
    %v595 = vpack.c.b16 %v556, %v555
    %v596 = vpack.c.b16 %v558, %v557
    %v597 = vpack.c.b16 %v560, %v559
    %v598 = vpack.c.b16 %v562, %v561
    %v599 = vpack.c.b16 %v564, %v563
    %v600 = vpack.c.b16 %v566, %v565
    %v601 = vpack.c.b16 %v568, %v567
    %v602 = vpack.c.b16 %v570, %v569
    %v603 = vpack.c.b16 %v572, %v571
    %v604 = vpack.c.b16 %v574, %v573
    %v605 = vpack.c.b16 %v576, %v575
    %v606 = vpack.c.b16 %v578, %v577
    %v607 = vpack.c.b16 %v580, %v579
    %v608 = vpack.c.b16 %v582, %v581
    %v609 = vpack.c.b16 %v584, %v583
    %v610 = vpack.c.b16 %v586, %v585
    %635 = vmatprep.subr.bf16.mxu0 0
    %636 = vmatpush1.bf16.msra.mxu0 %v594
    %637 = vmatprep.subr.bf16.mxu0 0
    %638 = vmatpush1.bf16.msra.mxu0 %v593
    %639 = vmatprep.subr.bf16.mxu0 0
    %640 = vmatpush1.bf16.msra.mxu0 %v592
    %641 = vmatprep.subr.bf16.mxu0 0
    %642 = vmatpush1.bf16.msra.mxu0 %v591
    %643 = vmatprep.subr.bf16.mxu0 0
    %644 = vmatpush1.bf16.msra.mxu0 %v590
    %645 = vmatprep.subr.bf16.mxu0 0
    %646 = vmatpush1.bf16.msra.mxu0 %v589
    %647 = vmatprep.subr.bf16.mxu0 0
    %648 = vmatpush1.bf16.msra.mxu0 %v588
    %649 = vmatprep.subr.bf16.mxu0 0
    %650 = vmatpush1.bf16.msra.mxu0 %v587
    %651 = vmatprep.subr.bf16.mxu0 0
    %652 = vmatpush2.bf16.msra.mxu0 %v602
    %653 = vmatprep.subr.bf16.mxu0 0
    %654 = vmatpush2.bf16.msra.mxu0 %v601
    %655 = vmatprep.subr.bf16.mxu0 0
    %656 = vmatpush2.bf16.msra.mxu0 %v600
    %657 = vmatprep.subr.bf16.mxu0 0
    %658 = vmatpush2.bf16.msra.mxu0 %v599
    %659 = vmatprep.subr.bf16.mxu0 0
    %660 = vmatpush2.bf16.msra.mxu0 %v598
    %661 = vmatprep.subr.bf16.mxu0 0
    %662 = vmatpush2.bf16.msra.mxu0 %v597
    %663 = vmatprep.subr.bf16.mxu0 0
    %664 = vmatpush2.bf16.msra.mxu0 %v596
    %665 = vmatprep.subr.bf16.mxu0 0
    %666 = vmatpush2.bf16.msra.mxu0 %v595
    %667 = vmatprep.mubr.bf16.mxu0 %v438
    %668 = vmatmul.mubr.bf16.gmra.mxu0 %v437
    %v669 = vpop.f32.mrf.mxu0
    %v670 = vadd.f32 %v490, %v669
    %v671 = vpop.f32.mrf.mxu0
    %v672 = vpop.f32.mrf.mxu0
    %v673 = vadd.f32 %v490, %v672
    %v674 = vpop.f32.mrf.mxu0
    %675 = vmatprep.mubr.bf16.mxu0 %v440
    %676 = vmatmul.mubr.bf16.gmra.mxu0 %v439
    %v677 = vpop.f32.mrf.mxu0
    %v678 = vadd.f32 %v490, %v677
    %v679 = vpop.f32.mrf.mxu0
    %v680 = vpop.f32.mrf.mxu0
    %v681 = vadd.f32 %v490, %v680
    %v682 = vpop.f32.mrf.mxu0
    %683 = vdwg.mxu0
    %684 = vmatprep.subr.bf16.mxu0 0
    %685 = vmatpush1.bf16.msra.mxu0 %v610
    %686 = vmatprep.subr.bf16.mxu0 0
    %687 = vmatpush1.bf16.msra.mxu0 %v609
    %688 = vmatprep.subr.bf16.mxu0 0
    %689 = vmatpush1.bf16.msra.mxu0 %v608
    %690 = vmatprep.subr.bf16.mxu0 0
    %691 = vmatpush1.bf16.msra.mxu0 %v607
    %692 = vmatprep.subr.bf16.mxu0 0
    %693 = vmatpush1.bf16.msra.mxu0 %v606
    %694 = vmatprep.subr.bf16.mxu0 0
    %695 = vmatpush1.bf16.msra.mxu0 %v605
    %696 = vmatprep.subr.bf16.mxu0 0
    %697 = vmatpush1.bf16.msra.mxu0 %v604
    %698 = vmatprep.subr.bf16.mxu0 0
    %699 = vmatpush1.bf16.msra.mxu0 %v603
    %700 = vmatprep.subr.bf16.mxu0 0
    %701 = vmatpush2.bf16.msra.mxu0 0
    %702 = vmatprep.subr.bf16.mxu0 0
    %703 = vmatpush2.bf16.msra.mxu0 0
    %704 = vmatprep.subr.bf16.mxu0 0
    %705 = vmatpush2.bf16.msra.mxu0 0
    %706 = vmatprep.subr.bf16.mxu0 0
    %707 = vmatpush2.bf16.msra.mxu0 0
    %708 = vmatprep.subr.bf16.mxu0 0
    %709 = vmatpush2.bf16.msra.mxu0 0
    %710 = vmatprep.subr.bf16.mxu0 0
    %711 = vmatpush2.bf16.msra.mxu0 0
    %712 = vmatprep.subr.bf16.mxu0 0
    %713 = vmatpush2.bf16.msra.mxu0 0
    %714 = vmatprep.subr.bf16.mxu0 0
    %715 = vmatpush2.bf16.msra.mxu0 0
    %716 = vmatprep.mubr.bf16.mxu0 0
    %717 = vmatmul.mubr.bf16.gmra.mxu0 %v439
    %v718 = vpop.f32.mrf.mxu0
    %v719 = vadd.f32 %v670, %v718
    %v720 = vpop.f32.mrf.mxu0
    %v721 = vpop.f32.mrf.mxu0
    %v722 = vadd.f32 %v673, %v721
    %v723 = vpop.f32.mrf.mxu0
    %724 = vmatprep.mubr.bf16.mxu0 0
    %725 = vmatmul.mubr.bf16.gmra.mxu0 %v441
    %v726 = vpop.f32.mrf.mxu0
    %v727 = vadd.f32 %v678, %v726
    %v728 = vpop.f32.mrf.mxu0
    %v729 = vpop.f32.mrf.mxu0
    %v730 = vadd.f32 %v681, %v729
    %v731 = vpop.f32.mrf.mxu0
    %732 = vdwg.mxu0
    %v733 = vmul.f32 %v719, 0.5
    %v734 = vmul.f32 %v722, 0.5
    %v735 = vmul.f32 %v727, 0.5
    %v736 = vmul.f32 %v730, 0.5
    %v737 = vmul.f32 %v719, 0.70710677
    %v738 = vmul.f32 %v722, 0.70710677
    %v739 = vmul.f32 %v727, 0.70710677
    %v740 = vmul.f32 %v730, 0.70710677
    %v741 = vand.u32 2147483647, %v737
    %v742 = vand.u32 2147483647, %v738
    %v743 = vand.u32 2147483647, %v739
    %v744 = vand.u32 2147483647, %v740
    %v745 = vmul.f32 %v741, 0.3275911
    %v746 = vmul.f32 %v742, 0.3275911
    %v747 = vmul.f32 %v743, 0.3275911
    %v748 = vmul.f32 %v744, 0.3275911
    %v749 = vadd.f32 %v745, 1.0
    %v750 = vadd.f32 %v746, 1.0
    %v751 = vadd.f32 %v747, 1.0
    %v752 = vadd.f32 %v748, 1.0
    %v753 = vrcp.pop %v749
    %v754 = vmul.f32 1.0, %v753
    %v755 = vrcp.pop %v750
    %v756 = vmul.f32 1.0, %v755
    %v757 = vrcp.pop %v751
    %v758 = vmul.f32 1.0, %v757
    %v759 = vrcp.pop %v752
    %v760 = vmul.f32 1.0, %v759
    %v761 = vmul.f32 %v754, 1.0614054
    %v762 = vmul.f32 %v756, 1.0614054
    %v763 = vmul.f32 %v758, 1.0614054
    %v764 = vmul.f32 %v760, 1.0614054
    %v765 = vadd.f32 %v761, -1.4531521
    %v766 = vadd.f32 %v762, -1.4531521
    %v767 = vadd.f32 %v763, -1.4531521
    %v768 = vadd.f32 %v764, -1.4531521
    %v769 = vmul.f32 %v765, %v754
    %v770 = vmul.f32 %v766, %v756
    %v771 = vmul.f32 %v767, %v758
    %v772 = vmul.f32 %v768, %v760
    %v773 = vadd.f32 %v769, 1.4214138
    %v774 = vadd.f32 %v770, 1.4214138
    %v775 = vadd.f32 %v771, 1.4214138
    %v776 = vadd.f32 %v772, 1.4214138
    %v777 = vmul.f32 %v773, %v754
    %v778 = vmul.f32 %v774, %v756
    %v779 = vmul.f32 %v775, %v758
    %v780 = vmul.f32 %v776, %v760
    %v781 = vadd.f32 %v777, -0.28449672
    %v782 = vadd.f32 %v778, -0.28449672
    %v783 = vadd.f32 %v779, -0.28449672
    %v784 = vadd.f32 %v780, -0.28449672
    %v785 = vmul.f32 %v781, %v754
    %v786 = vmul.f32 %v782, %v756
    %v787 = vmul.f32 %v783, %v758
    %v788 = vmul.f32 %v784, %v760
    %v789 = vadd.f32 %v785, 0.2548296
    %v790 = vadd.f32 %v786, 0.2548296
    %v791 = vadd.f32 %v787, 0.2548296
    %v792 = vadd.f32 %v788, 0.2548296
    %v793 = vmul.f32 %v789, %v754
    %v794 = vmul.f32 %v790, %v756
    %v795 = vmul.f32 %v791, %v758
    %v796 = vmul.f32 %v792, %v760
    %v797 = vsub.f32 0.0, %v741
    %v798 = vsub.f32 0.0, %v742
    %v799 = vsub.f32 0.0, %v743
    %v800 = vsub.f32 0.0, %v744
    %v801 = vmul.f32 %v797, %v741
    %v802 = vmul.f32 %v798, %v742
    %v803 = vmul.f32 %v799, %v743
    %v804 = vmul.f32 %v800, %v744
    %v805 = vmul.f32 %v801, 1.442695
    %v806 = vpow.pop %v805
    %v807 = vmul.f32 %v802, 1.442695
    %v808 = vpow.pop %v807
    %v809 = vmul.f32 %v803, 1.442695
    %v810 = vpow.pop %v809
    %v811 = vmul.f32 %v804, 1.442695
    %v812 = vpow.pop %v811
    %v813 = vmul.f32 %v793, %v806
    %v814 = vmul.f32 %v794, %v808
    %v815 = vmul.f32 %v795, %v810
    %v816 = vmul.f32 %v796, %v812
    %v817 = vsub.f32 1.0, %v813
    %v818 = vsub.f32 1.0, %v814
    %v819 = vsub.f32 1.0, %v815
    %v820 = vsub.f32 1.0, %v816
    %vm821 = vcmp.ge.f32.partialorder %v737, 0.0
    %vm822 = vcmp.ge.f32.partialorder %v738, 0.0
    %vm823 = vcmp.ge.f32.partialorder %v739, 0.0
    %vm824 = vcmp.ge.f32.partialorder %v740, 0.0
    %v825 = vsub.f32 0.0, %v817
    %v826 = vsub.f32 0.0, %v818
    %v827 = vsub.f32 0.0, %v819
    %v828 = vsub.f32 0.0, %v820
    %v829 = vsel %vm821, %v817, %v825
    %v830 = vsel %vm822, %v818, %v826
    %v831 = vsel %vm823, %v819, %v827
    %v832 = vsel %vm824, %v820, %v828
    %v833 = vadd.f32 %v829, 1.0
    %v834 = vadd.f32 %v830, 1.0
    %v835 = vadd.f32 %v831, 1.0
    %v836 = vadd.f32 %v832, 1.0
    %v837 = vmul.f32 %v733, %v833
    %v838 = vmul.f32 %v734, %v834
    %v839 = vmul.f32 %v735, %v835
    %v840 = vmul.f32 %v736, %v836
    %845 = vrot.lane.b32.xlu0 %v837, 64
    %v846 = vpop.permute.xlu0 %845
    %847 = vrot.lane.b32.xlu0 %v838, 64
    %v848 = vpop.permute.xlu0 %847
    %849 = vrot.lane.b32.xlu0 %v839, 64
    %v850 = vpop.permute.xlu0 %849
    %851 = vrot.lane.b32.xlu0 %v840, 64
    %v852 = vpop.permute.xlu0 %851
    %v857 = vmax.f32 %v837, %v846
    %v858 = vmax.f32 %v838, %v848
    %v859 = vmax.f32 %v839, %v850
    %v860 = vmax.f32 %v840, %v852
    %v861 = vpack.c.bf16 %v858, %v857
    %v862 = vpack.c.bf16 %v860, %v859
    %v863 = vld [vmem:[#allocation2 + $0x1b0] sm:$0xff]
    %v864 = vld [vmem:[#allocation2 + $0x1b8] sm:$0xff]
    %v865 = vld [vmem:[#allocation2 + $0x1c0] sm:$0xff]
    %v866 = vld [vmem:[#allocation2 + $0x1c8] sm:$0xff]
    %v867 = vld [vmem:[#allocation2 + $0x1d0] sm:$0xff]
    %v868 = vld [vmem:[#allocation2 + $0x1d8] sm:$0xff]
    %v869 = vld [vmem:[#allocation2 + $0x1e0] sm:$0xff]
    %v870 = vld [vmem:[#allocation2 + $0x1e8] sm:$0xff]
    %s871 = scalar_lea.vmem %s7, 32
    %v872 = vld [vmem:[%s871] ss:$8 sm:$0x3]
    %v874 = vlaneseq
    %v875 = vshrl.u32 %v874, 7
    %v876 = vsub.s32 0, %v875
    %v877 = vrot.slane %v872, %v876
    %v878 = vlaneseq
    %v879 = vshrl.u32 %v878, 7
    %v880 = vsub.s32 1, %v879
    %v881 = vrot.slane %v872, %v880
    %v892 = vunpack.c.l.b16 %v863
    %v893 = vunpack.c.h.b16 %v863
    %v894 = vunpack.c.l.b16 %v864
    %v895 = vunpack.c.h.b16 %v864
    %v896 = vunpack.c.l.b16 %v865
    %v897 = vunpack.c.h.b16 %v865
    %v898 = vunpack.c.l.b16 %v866
    %v899 = vunpack.c.h.b16 %v866
    %v900 = vunpack.c.l.b16 %v867
    %v901 = vunpack.c.h.b16 %v867
    %v902 = vunpack.c.l.b16 %v868
    %v903 = vunpack.c.h.b16 %v868
    %v904 = vunpack.c.l.b16 %v869
    %v905 = vunpack.c.h.b16 %v869
    %v906 = vunpack.c.l.b16 %v870
    %v907 = vunpack.c.h.b16 %v870
    %v908 = vpack.c.b16 %v894, %v892
    %v909 = vpack.c.b16 %v895, %v893
    %v910 = vpack.c.b16 %v898, %v896
    %v911 = vpack.c.b16 %v899, %v897
    %v912 = vpack.c.b16 %v902, %v900
    %v913 = vpack.c.b16 %v903, %v901
    %v914 = vpack.c.b16 %v906, %v904
    %v915 = vpack.c.b16 %v907, %v905
    %v925 = vsel %vm432, %v861, 0
    %v928 = vsel %vm432, %v862, 0
    %930 = vmatprep.subr.bf16.mxu0 0
    %931 = vmatpush1.bf16.msra.mxu0 0
    %932 = vmatprep.subr.bf16.mxu0 0
    %933 = vmatpush1.bf16.msra.mxu0 0
    %934 = vmatprep.subr.bf16.mxu0 0
    %935 = vmatpush1.bf16.msra.mxu0 0
    %936 = vmatprep.subr.bf16.mxu0 0
    %937 = vmatpush1.bf16.msra.mxu0 0
    %938 = vmatprep.subr.bf16.mxu0 %v915
    %939 = vmatpush1.bf16.msra.mxu0 %v914
    %940 = vmatprep.subr.bf16.mxu0 %v913
    %941 = vmatpush1.bf16.msra.mxu0 %v912
    %942 = vmatprep.subr.bf16.mxu0 %v911
    %943 = vmatpush1.bf16.msra.mxu0 %v910
    %944 = vmatprep.subr.bf16.mxu0 %v909
    %945 = vmatpush1.bf16.msra.mxu0 %v908
    %946 = vmatprep.subr.bf16.mxu0 0
    %947 = vmatpush2.bf16.msra.mxu0 0
    %948 = vmatprep.subr.bf16.mxu0 0
    %949 = vmatpush2.bf16.msra.mxu0 0
    %950 = vmatprep.subr.bf16.mxu0 0
    %951 = vmatpush2.bf16.msra.mxu0 0
    %952 = vmatprep.subr.bf16.mxu0 0
    %953 = vmatpush2.bf16.msra.mxu0 0
    %954 = vmatprep.subr.bf16.mxu0 0
    %955 = vmatpush2.bf16.msra.mxu0 0
    %956 = vmatprep.subr.bf16.mxu0 0
    %957 = vmatpush2.bf16.msra.mxu0 0
    %958 = vmatprep.subr.bf16.mxu0 0
    %959 = vmatpush2.bf16.msra.mxu0 0
    %960 = vmatprep.subr.bf16.mxu0 0
    %961 = vmatpush2.bf16.msra.mxu0 0
    %962 = vmatprep.mubr.bf16.mxu0 0
    %963 = vmatmul.mubr.bf16.gmra.mxu0 %v925
    %v964 = vpop.f32.mrf.mxu0
    %v965 = vadd.f32 %v877, %v964
    %v966 = vpop.f32.mrf.mxu0
    %v967 = vadd.f32 %v881, %v966
    %v968 = vpop.f32.mrf.mxu0
    %v969 = vadd.f32 %v877, %v968
    %v970 = vpop.f32.mrf.mxu0
    %v971 = vadd.f32 %v881, %v970
    %972 = vmatprep.mubr.bf16.mxu0 0
    %973 = vmatmul.mubr.bf16.gmra.mxu0 %v928
    %v974 = vpop.f32.mrf.mxu0
    %v975 = vadd.f32 %v877, %v974
    %v976 = vpop.f32.mrf.mxu0
    %v977 = vadd.f32 %v881, %v976
    %v978 = vpop.f32.mrf.mxu0
    %v979 = vadd.f32 %v877, %v978
    %v980 = vpop.f32.mrf.mxu0
    %v981 = vadd.f32 %v881, %v980
    %982 = vdwg.mxu0
    %v983 = vld [vmem:[#allocation2 + $0x1f0] sm:$0xff]
    %v984 = vld [vmem:[#allocation2 + $0x1f8] sm:$0xff]
    %v985 = vld [vmem:[#allocation2 + $0x200] sm:$0xff]
    %v986 = vld [vmem:[#allocation2 + $0x208] sm:$0xff]
    %v987 = vld [vmem:[#allocation2 + $0x210] sm:$0xff]
    %v988 = vld [vmem:[#allocation2 + $0x218] sm:$0xff]
    %v989 = vld [vmem:[#allocation2 + $0x220] sm:$0xff]
    %v990 = vld [vmem:[#allocation2 + $0x228] sm:$0xff]
    %v999 = vunpack.c.l.b16 %v983
    %v1000 = vunpack.c.h.b16 %v983
    %v1001 = vunpack.c.l.b16 %v984
    %v1002 = vunpack.c.h.b16 %v984
    %v1003 = vunpack.c.l.b16 %v985
    %v1004 = vunpack.c.h.b16 %v985
    %v1005 = vunpack.c.l.b16 %v986
    %v1006 = vunpack.c.h.b16 %v986
    %v1007 = vunpack.c.l.b16 %v987
    %v1008 = vunpack.c.h.b16 %v987
    %v1009 = vunpack.c.l.b16 %v988
    %v1010 = vunpack.c.h.b16 %v988
    %v1011 = vunpack.c.l.b16 %v989
    %v1012 = vunpack.c.h.b16 %v989
    %v1013 = vunpack.c.l.b16 %v990
    %v1014 = vunpack.c.h.b16 %v990
    %v1015 = vpack.c.b16 %v1001, %v999
    %v1016 = vpack.c.b16 %v1002, %v1000
    %v1017 = vpack.c.b16 %v1005, %v1003
    %v1018 = vpack.c.b16 %v1006, %v1004
    %v1019 = vpack.c.b16 %v1009, %v1007
    %v1020 = vpack.c.b16 %v1010, %v1008
    %v1021 = vpack.c.b16 %v1013, %v1011
    %v1022 = vpack.c.b16 %v1014, %v1012
    %v1032 = vsel %vm432, 0, 0
    %1034 = vmatprep.subr.bf16.mxu0 0
    %1035 = vmatpush1.bf16.msra.mxu0 0
    %1036 = vmatprep.subr.bf16.mxu0 0
    %1037 = vmatpush1.bf16.msra.mxu0 0
    %1038 = vmatprep.subr.bf16.mxu0 0
    %1039 = vmatpush1.bf16.msra.mxu0 0
    %1040 = vmatprep.subr.bf16.mxu0 0
    %1041 = vmatpush1.bf16.msra.mxu0 0
    %1042 = vmatprep.subr.bf16.mxu0 %v1022
    %1043 = vmatpush1.bf16.msra.mxu0 %v1021
    %1044 = vmatprep.subr.bf16.mxu0 %v1020
    %1045 = vmatpush1.bf16.msra.mxu0 %v1019
    %1046 = vmatprep.subr.bf16.mxu0 %v1018
    %1047 = vmatpush1.bf16.msra.mxu0 %v1017
    %1048 = vmatprep.subr.bf16.mxu0 %v1016
    %1049 = vmatpush1.bf16.msra.mxu0 %v1015
    %1050 = vmatprep.subr.bf16.mxu0 0
    %1051 = vmatpush2.bf16.msra.mxu0 0
    %1052 = vmatprep.subr.bf16.mxu0 0
    %1053 = vmatpush2.bf16.msra.mxu0 0
    %1054 = vmatprep.subr.bf16.mxu0 0
    %1055 = vmatpush2.bf16.msra.mxu0 0
    %1056 = vmatprep.subr.bf16.mxu0 0
    %1057 = vmatpush2.bf16.msra.mxu0 0
    %1058 = vmatprep.subr.bf16.mxu0 0
    %1059 = vmatpush2.bf16.msra.mxu0 0
    %1060 = vmatprep.subr.bf16.mxu0 0
    %1061 = vmatpush2.bf16.msra.mxu0 0
    %1062 = vmatprep.subr.bf16.mxu0 0
    %1063 = vmatpush2.bf16.msra.mxu0 0
    %1064 = vmatprep.subr.bf16.mxu0 0
    %1065 = vmatpush2.bf16.msra.mxu0 0
    %1066 = vmatprep.mubr.bf16.mxu0 0
    %1067 = vmatmul.mubr.bf16.gmra.mxu0 %v1032
    %v1068 = vpop.f32.mrf.mxu0
    %v1069 = vadd.f32 0.0, %v1068
    %v1070 = vpop.f32.mrf.mxu0
    %v1071 = vadd.f32 0.0, %v1070
    %v1072 = vpop.f32.mrf.mxu0
    %v1073 = vpop.f32.mrf.mxu0
    %1074 = vdwg.mxu0
    %v1075 = vadd.f32 %v965, %v1069
    %v1076 = vadd.f32 %v967, %v1071
    %v1077 = vxor.u32 %v1075, 2147483648
    %v1078 = vmul.f32 %v1077, 1.442695
    %v1079 = vpow.pop %v1078
    %v1080 = vadd.f32 %v1079, 1.0
    %v1081 = vrcp.pop %v1080
    %v1082 = vmul.f32 1.0, %v1081
    %v1083 = vtanh.pop %v1076
    %v1084 = vxor.u32 %v1076, 2147483648
    %v1085 = vmul.f32 %v1084, 1.442695
    %v1086 = vpow.pop %v1085
    %v1087 = vadd.f32 %v1086, 1.0
    %v1088 = vrcp.pop %v1087
    %v1089 = vmul.f32 1.0, %v1088
    %v1090 = vmul.f32 %v1082, 0.0
    %v1091 = vmul.f32 %v1082, %v1083
    %1093 = vrot.lane.b32.xlu0 %v1091, 64
    %v1094 = vpop.permute.xlu0 %1093
    %v1096 = vadd.f32 %v1090, %v1094
    %v1097 = vtanh.pop %v1096
    %v1098 = vmul.f32 %v1089, %v1097
    %v1099 = vpack.c.bf16 %v1098, %v1098
    %1101 = vrot.lane.b32.xlu0 %v1099, 64
    %v1102 = vpop.permute.xlu0 %1101
    %v1104 = vsel %vm432, %v1102, 0
    %1106 = vmatprep.subr.bf16.mxu0 0
    %1107 = vmatpush1.bf16.msra.mxu0 0
    %1108 = vmatprep.subr.bf16.mxu0 0
    %1109 = vmatpush1.bf16.msra.mxu0 0
    %1110 = vmatprep.subr.bf16.mxu0 0
    %1111 = vmatpush1.bf16.msra.mxu0 0
    %1112 = vmatprep.subr.bf16.mxu0 0
    %1113 = vmatpush1.bf16.msra.mxu0 0
    %1114 = vmatprep.subr.bf16.mxu0 %v1022
    %1115 = vmatpush1.bf16.msra.mxu0 %v1021
    %1116 = vmatprep.subr.bf16.mxu0 %v1020
    %1117 = vmatpush1.bf16.msra.mxu0 %v1019
    %1118 = vmatprep.subr.bf16.mxu0 %v1018
    %1119 = vmatpush1.bf16.msra.mxu0 %v1017
    %1120 = vmatprep.subr.bf16.mxu0 %v1016
    %1121 = vmatpush1.bf16.msra.mxu0 %v1015
    %1122 = vmatprep.subr.bf16.mxu0 0
    %1123 = vmatpush2.bf16.msra.mxu0 0
    %1124 = vmatprep.subr.bf16.mxu0 0
    %1125 = vmatpush2.bf16.msra.mxu0 0
    %1126 = vmatprep.subr.bf16.mxu0 0
    %1127 = vmatpush2.bf16.msra.mxu0 0
    %1128 = vmatprep.subr.bf16.mxu0 0
    %1129 = vmatpush2.bf16.msra.mxu0 0
    %1130 = vmatprep.subr.bf16.mxu0 0
    %1131 = vmatpush2.bf16.msra.mxu0 0
    %1132 = vmatprep.subr.bf16.mxu0 0
    %1133 = vmatpush2.bf16.msra.mxu0 0
    %1134 = vmatprep.subr.bf16.mxu0 0
    %1135 = vmatpush2.bf16.msra.mxu0 0
    %1136 = vmatprep.subr.bf16.mxu0 0
    %1137 = vmatpush2.bf16.msra.mxu0 0
    %1138 = vmatprep.mubr.bf16.mxu0 0
    %1139 = vmatmul.mubr.bf16.gmra.mxu0 %v1104
    %v1140 = vpop.f32.mrf.mxu0
    %v1141 = vadd.f32 0.0, %v1140
    %v1142 = vpop.f32.mrf.mxu0
    %v1143 = vadd.f32 0.0, %v1142
    %v1144 = vpop.f32.mrf.mxu0
    %v1145 = vpop.f32.mrf.mxu0
    %1146 = vdwg.mxu0
    %v1147 = vadd.f32 %v969, %v1141
    %v1148 = vadd.f32 %v971, %v1143
    %v1149 = vxor.u32 %v1147, 2147483648
    %v1150 = vmul.f32 %v1149, 1.442695
    %v1151 = vpow.pop %v1150
    %v1152 = vadd.f32 %v1151, 1.0
    %v1153 = vrcp.pop %v1152
    %v1154 = vmul.f32 1.0, %v1153
    %v1155 = vtanh.pop %v1148
    %v1156 = vxor.u32 %v1148, 2147483648
    %v1157 = vmul.f32 %v1156, 1.442695
    %v1158 = vpow.pop %v1157
    %v1159 = vadd.f32 %v1158, 1.0
    %v1160 = vrcp.pop %v1159
    %v1161 = vmul.f32 1.0, %v1160
    %v1162 = vmul.f32 %v1154, %v1096
    %v1163 = vmul.f32 %v1154, %v1155
    %1165 = vrot.lane.b32.xlu0 %v1163, 64
    %v1166 = vpop.permute.xlu0 %1165
    %v1168 = vadd.f32 %v1162, %v1166
    %v1169 = vtanh.pop %v1168
    %v1170 = vmul.f32 %v1161, %v1169
    %v1171 = vpack.c.bf16 %v1170, %v1170
    %1173 = vrot.lane.b32.xlu0 %v1171, 64
    %v1174 = vpop.permute.xlu0 %1173
    %v1176 = vsel %vm432, %v1174, 0
    %1178 = vmatprep.subr.bf16.mxu0 0
    %1179 = vmatpush1.bf16.msra.mxu0 0
    %1180 = vmatprep.subr.bf16.mxu0 0
    %1181 = vmatpush1.bf16.msra.mxu0 0
    %1182 = vmatprep.subr.bf16.mxu0 0
    %1183 = vmatpush1.bf16.msra.mxu0 0
    %1184 = vmatprep.subr.bf16.mxu0 0
    %1185 = vmatpush1.bf16.msra.mxu0 0
    %1186 = vmatprep.subr.bf16.mxu0 %v1022
    %1187 = vmatpush1.bf16.msra.mxu0 %v1021
    %1188 = vmatprep.subr.bf16.mxu0 %v1020
    %1189 = vmatpush1.bf16.msra.mxu0 %v1019
    %1190 = vmatprep.subr.bf16.mxu0 %v1018
    %1191 = vmatpush1.bf16.msra.mxu0 %v1017
    %1192 = vmatprep.subr.bf16.mxu0 %v1016
    %1193 = vmatpush1.bf16.msra.mxu0 %v1015
    %1194 = vmatprep.subr.bf16.mxu0 0
    %1195 = vmatpush2.bf16.msra.mxu0 0
    %1196 = vmatprep.subr.bf16.mxu0 0
    %1197 = vmatpush2.bf16.msra.mxu0 0
    %1198 = vmatprep.subr.bf16.mxu0 0
    %1199 = vmatpush2.bf16.msra.mxu0 0
    %1200 = vmatprep.subr.bf16.mxu0 0
    %1201 = vmatpush2.bf16.msra.mxu0 0
    %1202 = vmatprep.subr.bf16.mxu0 0
    %1203 = vmatpush2.bf16.msra.mxu0 0
    %1204 = vmatprep.subr.bf16.mxu0 0
    %1205 = vmatpush2.bf16.msra.mxu0 0
    %1206 = vmatprep.subr.bf16.mxu0 0
    %1207 = vmatpush2.bf16.msra.mxu0 0
    %1208 = vmatprep.subr.bf16.mxu0 0
    %1209 = vmatpush2.bf16.msra.mxu0 0
    %1210 = vmatprep.mubr.bf16.mxu0 0
    %1211 = vmatmul.mubr.bf16.gmra.mxu0 %v1176
    %v1212 = vpop.f32.mrf.mxu0
    %v1213 = vadd.f32 0.0, %v1212
    %v1214 = vpop.f32.mrf.mxu0
    %v1215 = vadd.f32 0.0, %v1214
    %v1216 = vpop.f32.mrf.mxu0
    %v1217 = vpop.f32.mrf.mxu0
    %1218 = vdwg.mxu0
    %v1219 = vadd.f32 %v975, %v1213
    %v1220 = vadd.f32 %v977, %v1215
    %v1221 = vxor.u32 %v1219, 2147483648
    %v1222 = vmul.f32 %v1221, 1.442695
    %v1223 = vpow.pop %v1222
    %v1224 = vadd.f32 %v1223, 1.0
    %v1225 = vrcp.pop %v1224
    %v1226 = vmul.f32 1.0, %v1225
    %v1227 = vtanh.pop %v1220
    %v1228 = vxor.u32 %v1220, 2147483648
    %v1229 = vmul.f32 %v1228, 1.442695
    %v1230 = vpow.pop %v1229
    %v1231 = vadd.f32 %v1230, 1.0
    %v1232 = vrcp.pop %v1231
    %v1233 = vmul.f32 1.0, %v1232
    %v1234 = vmul.f32 %v1226, %v1168
    %v1235 = vmul.f32 %v1226, %v1227
    %1237 = vrot.lane.b32.xlu0 %v1235, 64
    %v1238 = vpop.permute.xlu0 %1237
    %v1240 = vadd.f32 %v1234, %v1238
    %v1241 = vtanh.pop %v1240
    %v1242 = vmul.f32 %v1233, %v1241
    %v1243 = vpack.c.bf16 %v1242, %v1242
    %1245 = vrot.lane.b32.xlu0 %v1243, 64
    %v1246 = vpop.permute.xlu0 %1245
    %v1248 = vsel %vm432, %v1246, 0
    %1250 = vmatprep.subr.bf16.mxu0 0
    %1251 = vmatpush1.bf16.msra.mxu0 0
    %1252 = vmatprep.subr.bf16.mxu0 0
    %1253 = vmatpush1.bf16.msra.mxu0 0
    %1254 = vmatprep.subr.bf16.mxu0 0
    %1255 = vmatpush1.bf16.msra.mxu0 0
    %1256 = vmatprep.subr.bf16.mxu0 0
    %1257 = vmatpush1.bf16.msra.mxu0 0
    %1258 = vmatprep.subr.bf16.mxu0 %v1022
    %1259 = vmatpush1.bf16.msra.mxu0 %v1021
    %1260 = vmatprep.subr.bf16.mxu0 %v1020
    %1261 = vmatpush1.bf16.msra.mxu0 %v1019
    %1262 = vmatprep.subr.bf16.mxu0 %v1018
    %1263 = vmatpush1.bf16.msra.mxu0 %v1017
    %1264 = vmatprep.subr.bf16.mxu0 %v1016
    %1265 = vmatpush1.bf16.msra.mxu0 %v1015
    %1266 = vmatprep.subr.bf16.mxu0 0
    %1267 = vmatpush2.bf16.msra.mxu0 0
    %1268 = vmatprep.subr.bf16.mxu0 0
    %1269 = vmatpush2.bf16.msra.mxu0 0
    %1270 = vmatprep.subr.bf16.mxu0 0
    %1271 = vmatpush2.bf16.msra.mxu0 0
    %1272 = vmatprep.subr.bf16.mxu0 0
    %1273 = vmatpush2.bf16.msra.mxu0 0
    %1274 = vmatprep.subr.bf16.mxu0 0
    %1275 = vmatpush2.bf16.msra.mxu0 0
    %1276 = vmatprep.subr.bf16.mxu0 0
    %1277 = vmatpush2.bf16.msra.mxu0 0
    %1278 = vmatprep.subr.bf16.mxu0 0
    %1279 = vmatpush2.bf16.msra.mxu0 0
    %1280 = vmatprep.subr.bf16.mxu0 0
    %1281 = vmatpush2.bf16.msra.mxu0 0
    %1282 = vmatprep.mubr.bf16.mxu0 0
    %1283 = vmatmul.mubr.bf16.gmra.mxu0 %v1248
    %v1284 = vpop.f32.mrf.mxu0
    %v1285 = vadd.f32 0.0, %v1284
    %v1286 = vpop.f32.mrf.mxu0
    %v1287 = vadd.f32 0.0, %v1286
    %v1288 = vpop.f32.mrf.mxu0
    %v1289 = vpop.f32.mrf.mxu0
    %1290 = vdwg.mxu0
    %v1291 = vadd.f32 %v979, %v1285
    %v1292 = vadd.f32 %v981, %v1287
    %v1293 = vxor.u32 %v1291, 2147483648
    %v1294 = vmul.f32 %v1293, 1.442695
    %v1295 = vpow.pop %v1294
    %v1296 = vadd.f32 %v1295, 1.0
    %v1297 = vrcp.pop %v1296
    %v1298 = vmul.f32 1.0, %v1297
    %v1299 = vtanh.pop %v1292
    %v1300 = vxor.u32 %v1292, 2147483648
    %v1301 = vmul.f32 %v1300, 1.442695
    %v1302 = vpow.pop %v1301
    %v1303 = vadd.f32 %v1302, 1.0
    %v1304 = vrcp.pop %v1303
    %v1305 = vmul.f32 1.0, %v1304
    %v1306 = vmul.f32 %v1298, %v1240
    %v1307 = vmul.f32 %v1298, %v1299
    %1309 = vrot.lane.b32.xlu0 %v1307, 64
    %v1310 = vpop.permute.xlu0 %1309
    %v1312 = vadd.f32 %v1306, %v1310
    %v1313 = vtanh.pop %v1312
    %v1314 = vmul.f32 %v1305, %v1313
    %v1315 = vpack.c.bf16 %v860, %v860
    %v1316 = vld [vmem:[#allocation2 + $0x230] sm:$0xff]
    %v1317 = vld [vmem:[#allocation2 + $0x238] sm:$0xff]
    %v1318 = vld [vmem:[#allocation2 + $0x240] sm:$0xff]
    %v1319 = vld [vmem:[#allocation2 + $0x248] sm:$0xff]
    %v1320 = vld [vmem:[#allocation2 + $0x250] sm:$0xff]
    %v1321 = vld [vmem:[#allocation2 + $0x258] sm:$0xff]
    %v1322 = vld [vmem:[#allocation2 + $0x260] sm:$0xff]
    %v1323 = vld [vmem:[#allocation2 + $0x268] sm:$0xff]
    %s1324 = scalar_lea.vmem %s7, 48
    %v1325 = vld [vmem:[%s1324] ss:$8 sm:$0x3]
    %v1327 = vlaneseq
    %v1328 = vshrl.u32 %v1327, 7
    %v1329 = vsub.s32 0, %v1328
    %v1330 = vrot.slane %v1325, %v1329
    %v1331 = vlaneseq
    %v1332 = vshrl.u32 %v1331, 7
    %v1333 = vsub.s32 1, %v1332
    %v1334 = vrot.slane %v1325, %v1333
    %v1345 = vunpack.c.l.b16 %v1316
    %v1346 = vunpack.c.h.b16 %v1316
    %v1347 = vunpack.c.l.b16 %v1317
    %v1348 = vunpack.c.h.b16 %v1317
    %v1349 = vunpack.c.l.b16 %v1318
    %v1350 = vunpack.c.h.b16 %v1318
    %v1351 = vunpack.c.l.b16 %v1319
    %v1352 = vunpack.c.h.b16 %v1319
    %v1353 = vunpack.c.l.b16 %v1320
    %v1354 = vunpack.c.h.b16 %v1320
    %v1355 = vunpack.c.l.b16 %v1321
    %v1356 = vunpack.c.h.b16 %v1321
    %v1357 = vunpack.c.l.b16 %v1322
    %v1358 = vunpack.c.h.b16 %v1322
    %v1359 = vunpack.c.l.b16 %v1323
    %v1360 = vunpack.c.h.b16 %v1323
    %v1361 = vpack.c.b16 %v1347, %v1345
    %v1362 = vpack.c.b16 %v1348, %v1346
    %v1363 = vpack.c.b16 %v1351, %v1349
    %v1364 = vpack.c.b16 %v1352, %v1350
    %v1365 = vpack.c.b16 %v1355, %v1353
    %v1366 = vpack.c.b16 %v1356, %v1354
    %v1367 = vpack.c.b16 %v1359, %v1357
    %v1368 = vpack.c.b16 %v1360, %v1358
    %v1378 = vsel %vm432, %v1315, 0
    %1380 = vmatprep.subr.bf16.mxu0 0
    %1381 = vmatpush1.bf16.msra.mxu0 0
    %1382 = vmatprep.subr.bf16.mxu0 0
    %1383 = vmatpush1.bf16.msra.mxu0 0
    %1384 = vmatprep.subr.bf16.mxu0 0
    %1385 = vmatpush1.bf16.msra.mxu0 0
    %1386 = vmatprep.subr.bf16.mxu0 0
    %1387 = vmatpush1.bf16.msra.mxu0 0
    %1388 = vmatprep.subr.bf16.mxu0 %v1368
    %1389 = vmatpush1.bf16.msra.mxu0 %v1367
    %1390 = vmatprep.subr.bf16.mxu0 %v1366
    %1391 = vmatpush1.bf16.msra.mxu0 %v1365
    %1392 = vmatprep.subr.bf16.mxu0 %v1364
    %1393 = vmatpush1.bf16.msra.mxu0 %v1363
    %1394 = vmatprep.subr.bf16.mxu0 %v1362
    %1395 = vmatpush1.bf16.msra.mxu0 %v1361
    %1396 = vmatprep.subr.bf16.mxu0 0
    %1397 = vmatpush2.bf16.msra.mxu0 0
    %1398 = vmatprep.subr.bf16.mxu0 0
    %1399 = vmatpush2.bf16.msra.mxu0 0
    %1400 = vmatprep.subr.bf16.mxu0 0
    %1401 = vmatpush2.bf16.msra.mxu0 0
    %1402 = vmatprep.subr.bf16.mxu0 0
    %1403 = vmatpush2.bf16.msra.mxu0 0
    %1404 = vmatprep.subr.bf16.mxu0 0
    %1405 = vmatpush2.bf16.msra.mxu0 0
    %1406 = vmatprep.subr.bf16.mxu0 0
    %1407 = vmatpush2.bf16.msra.mxu0 0
    %1408 = vmatprep.subr.bf16.mxu0 0
    %1409 = vmatpush2.bf16.msra.mxu0 0
    %1410 = vmatprep.subr.bf16.mxu0 0
    %1411 = vmatpush2.bf16.msra.mxu0 0
    %1412 = vmatprep.mubr.bf16.mxu0 0
    %1413 = vmatmul.mubr.bf16.gmra.mxu0 %v1378
    %v1414 = vpop.f32.mrf.mxu0
    %v1415 = vadd.f32 %v1330, %v1414
    %v1416 = vpop.f32.mrf.mxu0
    %v1417 = vadd.f32 %v1334, %v1416
    %v1418 = vpop.f32.mrf.mxu0
    %v1419 = vpop.f32.mrf.mxu0
    %1420 = vdwg.mxu0
    %v1421 = vxor.u32 %v1417, 2147483648
    %v1422 = vmul.f32 %v1421, 1.442695
    %v1423 = vpow.pop %v1422
    %v1424 = vadd.f32 %v1423, 1.0
    %v1425 = vrcp.pop %v1424
    %v1426 = vmul.f32 1.0, %v1425
    %v1427 = vxor.u32 %v1415, 2147483648
    %v1428 = vmul.f32 %v1427, 1.442695
    %v1429 = vpow.pop %v1428
    %v1430 = vadd.f32 %v1429, 1.0
    %v1431 = vrcp.pop %v1430
    %v1432 = vmul.f32 1.0, %v1431
    %v1433 = vtanh.pop %v1417
    %v1434 = vmul.f32 %v1432, %v1433
    %v1435 = vtanh.pop %v1434
    %1437 = vrot.lane.b32.xlu0 %v1435, 64
    %v1438 = vpop.permute.xlu0 %1437
    %v1440 = vmul.f32 %v1426, %v1438
    %v1441 = vpack.c.bf16 %v1314, %v1314
    %v1442 = vld [vmem:[#allocation2 + $0x270] sm:$0xf]
    %v1443 = vld [vmem:[#allocation2 + $0x278] sm:$0xf]
    %v1444 = vld [vmem:[#allocation2 + $0x280] sm:$0xf]
    %v1445 = vld [vmem:[#allocation2 + $0x288] sm:$0xf]
    %v1446 = vld [vmem:[#allocation2 + $0x290] sm:$0xf]
    %v1447 = vld [vmem:[#allocation2 + $0x298] sm:$0xf]
    %v1448 = vld [vmem:[#allocation2 + $0x2a0] sm:$0xf]
    %v1449 = vld [vmem:[#allocation2 + $0x2a8] sm:$0xf]
    %v1450 = vpack.c.bf16 %v1440, %v1440
    %v1451 = vld [vmem:[#allocation2 + $0x2b0] sm:$0xf]
    %v1452 = vld [vmem:[#allocation2 + $0x2b8] sm:$0xf]
    %v1453 = vld [vmem:[#allocation2 + $0x2c0] sm:$0xf]
    %v1454 = vld [vmem:[#allocation2 + $0x2c8] sm:$0xf]
    %v1455 = vld [vmem:[#allocation2 + $0x2d0] sm:$0xf]
    %v1456 = vld [vmem:[#allocation2 + $0x2d8] sm:$0xf]
    %v1457 = vld [vmem:[#allocation2 + $0x2e0] sm:$0xf]
    %v1458 = vld [vmem:[#allocation2 + $0x2e8] sm:$0xf]
    %1460 = vrot.lane.b32.xlu0 %v1450, 64
    %v1461 = vpop.permute.xlu0 %1460
    %v1470 = vunpack.c.l.b16 %v1451
    %v1471 = vunpack.c.l.b16 %v1452
    %v1472 = vunpack.c.l.b16 %v1453
    %v1473 = vunpack.c.l.b16 %v1454
    %v1474 = vunpack.c.l.b16 %v1455
    %v1475 = vunpack.c.l.b16 %v1456
    %v1476 = vunpack.c.l.b16 %v1457
    %v1477 = vunpack.c.l.b16 %v1458
    %v1478 = vpack.c.b16 %v1471, %v1470
    %v1479 = vpack.c.b16 %v1473, %v1472
    %v1480 = vpack.c.b16 %v1475, %v1474
    %v1481 = vpack.c.b16 %v1477, %v1476
    %v1487 = vsel %vm432, %v1461, 0
    %1489 = vmatprep.subr.bf16.mxu0 0
    %1490 = vmatpush1.bf16.msra.mxu0 0
    %1491 = vmatprep.subr.bf16.mxu0 0
    %1492 = vmatpush1.bf16.msra.mxu0 0
    %1493 = vmatprep.subr.bf16.mxu0 0
    %1494 = vmatpush1.bf16.msra.mxu0 0
    %1495 = vmatprep.subr.bf16.mxu0 0
    %1496 = vmatpush1.bf16.msra.mxu0 0
    %1497 = vmatprep.subr.bf16.mxu0 0
    %1498 = vmatpush1.bf16.msra.mxu0 %v1481
    %1499 = vmatprep.subr.bf16.mxu0 0
    %1500 = vmatpush1.bf16.msra.mxu0 %v1480
    %1501 = vmatprep.subr.bf16.mxu0 0
    %1502 = vmatpush1.bf16.msra.mxu0 %v1479
    %1503 = vmatprep.subr.bf16.mxu0 0
    %1504 = vmatpush1.bf16.msra.mxu0 %v1478
    %1505 = vmatprep.subr.bf16.mxu0 0
    %1506 = vmatpush2.bf16.msra.mxu0 0
    %1507 = vmatprep.subr.bf16.mxu0 0
    %1508 = vmatpush2.bf16.msra.mxu0 0
    %1509 = vmatprep.subr.bf16.mxu0 0
    %1510 = vmatpush2.bf16.msra.mxu0 0
    %1511 = vmatprep.subr.bf16.mxu0 0
    %1512 = vmatpush2.bf16.msra.mxu0 0
    %1513 = vmatprep.subr.bf16.mxu0 0
    %1514 = vmatpush2.bf16.msra.mxu0 0
    %1515 = vmatprep.subr.bf16.mxu0 0
    %1516 = vmatpush2.bf16.msra.mxu0 0
    %1517 = vmatprep.subr.bf16.mxu0 0
    %1518 = vmatpush2.bf16.msra.mxu0 0
    %1519 = vmatprep.subr.bf16.mxu0 0
    %1520 = vmatpush2.bf16.msra.mxu0 0
    %1521 = vmatprep.mubr.bf16.mxu0 0
    %1522 = vmatmul.mubr.bf16.gmra.mxu0 %v1487
    %v1523 = vpop.f32.mrf.mxu0
    %v1524 = vadd.f32 0.0, %v1523
    %v1525 = vpop.f32.mrf.mxu0
    %v1526 = vpop.f32.mrf.mxu0
    %v1527 = vpop.f32.mrf.mxu0
    %1528 = vdwg.mxu0
    %1530 = vrot.lane.b32.xlu0 %v1441, 64
    %v1531 = vpop.permute.xlu0 %1530
    %v1540 = vunpack.c.l.b16 %v1442
    %v1541 = vunpack.c.l.b16 %v1443
    %v1542 = vunpack.c.l.b16 %v1444
    %v1543 = vunpack.c.l.b16 %v1445
    %v1544 = vunpack.c.l.b16 %v1446
    %v1545 = vunpack.c.l.b16 %v1447
    %v1546 = vunpack.c.l.b16 %v1448
    %v1547 = vunpack.c.l.b16 %v1449
    %v1548 = vpack.c.b16 %v1541, %v1540
    %v1549 = vpack.c.b16 %v1543, %v1542
    %v1550 = vpack.c.b16 %v1545, %v1544
    %v1551 = vpack.c.b16 %v1547, %v1546
    %v1557 = vsel %vm432, %v1531, 0
    %1559 = vmatprep.subr.bf16.mxu0 0
    %1560 = vmatpush1.bf16.msra.mxu0 0
    %1561 = vmatprep.subr.bf16.mxu0 0
    %1562 = vmatpush1.bf16.msra.mxu0 0
    %1563 = vmatprep.subr.bf16.mxu0 0
    %1564 = vmatpush1.bf16.msra.mxu0 0
    %1565 = vmatprep.subr.bf16.mxu0 0
    %1566 = vmatpush1.bf16.msra.mxu0 0
    %1567 = vmatprep.subr.bf16.mxu0 0
    %1568 = vmatpush1.bf16.msra.mxu0 %v1551
    %1569 = vmatprep.subr.bf16.mxu0 0
    %1570 = vmatpush1.bf16.msra.mxu0 %v1550
    %1571 = vmatprep.subr.bf16.mxu0 0
    %1572 = vmatpush1.bf16.msra.mxu0 %v1549
    %1573 = vmatprep.subr.bf16.mxu0 0
    %1574 = vmatpush1.bf16.msra.mxu0 %v1548
    %1575 = vmatprep.subr.bf16.mxu0 0
    %1576 = vmatpush2.bf16.msra.mxu0 0
    %1577 = vmatprep.subr.bf16.mxu0 0
    %1578 = vmatpush2.bf16.msra.mxu0 0
    %1579 = vmatprep.subr.bf16.mxu0 0
    %1580 = vmatpush2.bf16.msra.mxu0 0
    %1581 = vmatprep.subr.bf16.mxu0 0
    %1582 = vmatpush2.bf16.msra.mxu0 0
    %1583 = vmatprep.subr.bf16.mxu0 0
    %1584 = vmatpush2.bf16.msra.mxu0 0
    %1585 = vmatprep.subr.bf16.mxu0 0
    %1586 = vmatpush2.bf16.msra.mxu0 0
    %1587 = vmatprep.subr.bf16.mxu0 0
    %1588 = vmatpush2.bf16.msra.mxu0 0
    %1589 = vmatprep.subr.bf16.mxu0 0
    %1590 = vmatpush2.bf16.msra.mxu0 0
    %1591 = vmatprep.mubr.bf16.mxu0 0
    %1592 = vmatmul.mubr.bf16.gmra.mxu0 %v1557
    %v1593 = vpop.f32.mrf.mxu0
    %v1594 = vadd.f32 %v1524, %v1593
    %v1595 = vpop.f32.mrf.mxu0
    %v1596 = vpop.f32.mrf.mxu0
    %v1597 = vpop.f32.mrf.mxu0
    %1598 = vdwg.mxu0
    %v1599 = vld [vmem:[%s7 + $0x40] ss:$0 sm:$0xff]
    %v1600 = vadd.f32 %v1594, %v1599
    %v1601 = vpack.c.bf16 %v1600, %v1600
    %v1602 = vld [vmem:[#allocation2 + $0x2f0] sm:$0xf]
    %v1603 = vld [vmem:[#allocation2 + $0x2f8] sm:$0xf]
    %v1604 = vld [vmem:[#allocation2 + $0x300] sm:$0xf]
    %v1605 = vld [vmem:[#allocation2 + $0x308] sm:$0xf]
    %v1606 = vld [vmem:[%s7 + $0x50] ss:$0 sm:$0xff]
    %v1611 = vunpack.c.l.b16 %v1602
    %v1612 = vunpack.c.l.b16 %v1603
    %v1613 = vunpack.c.l.b16 %v1604
    %v1614 = vunpack.c.l.b16 %v1605
    %v1615 = vpack.c.b16 %v1612, %v1611
    %v1616 = vpack.c.b16 %v1614, %v1613
    %vm1619 = vcmask 261120
    %v1621 = vsel %vm1619, %v1601, 0
    %1623 = vmatprep.subr.bf16.mxu0 0
    %1624 = vmatpush1.bf16.msra.mxu0 0
    %1625 = vmatprep.subr.bf16.mxu0 0
    %1626 = vmatpush1.bf16.msra.mxu0 0
    %1627 = vmatprep.subr.bf16.mxu0 0
    %1628 = vmatpush1.bf16.msra.mxu0 0
    %1629 = vmatprep.subr.bf16.mxu0 0
    %1630 = vmatpush1.bf16.msra.mxu0 0
    %1631 = vmatprep.subr.bf16.mxu0 0
    %1632 = vmatpush1.bf16.msra.mxu0 0
    %1633 = vmatprep.subr.bf16.mxu0 0
    %1634 = vmatpush1.bf16.msra.mxu0 0
    %1635 = vmatprep.subr.bf16.mxu0 0
    %1636 = vmatpush1.bf16.msra.mxu0 %v1616
    %1637 = vmatprep.subr.bf16.mxu0 0
    %1638 = vmatpush1.bf16.msra.mxu0 %v1615
    %1639 = vmatprep.subr.bf16.mxu0 0
    %1640 = vmatpush2.bf16.msra.mxu0 0
    %1641 = vmatprep.subr.bf16.mxu0 0
    %1642 = vmatpush2.bf16.msra.mxu0 0
    %1643 = vmatprep.subr.bf16.mxu0 0
    %1644 = vmatpush2.bf16.msra.mxu0 0
    %1645 = vmatprep.subr.bf16.mxu0 0
    %1646 = vmatpush2.bf16.msra.mxu0 0
    %1647 = vmatprep.subr.bf16.mxu0 0
    %1648 = vmatpush2.bf16.msra.mxu0 0
    %1649 = vmatprep.subr.bf16.mxu0 0
    %1650 = vmatpush2.bf16.msra.mxu0 0
    %1651 = vmatprep.subr.bf16.mxu0 0
    %1652 = vmatpush2.bf16.msra.mxu0 0
    %1653 = vmatprep.subr.bf16.mxu0 0
    %1654 = vmatpush2.bf16.msra.mxu0 0
    %1655 = vmatprep.mubr.bf16.mxu0 0
    %1656 = vmatmul.mubr.bf16.gmra.mxu0 %v1621
    %v1657 = vpop.f32.mrf.mxu0
    %v1658 = vadd.f32 %v1606, %v1657
    %v1659 = vpop.f32.mrf.mxu0
    %v1660 = vpop.f32.mrf.mxu0
    %v1661 = vpop.f32.mrf.mxu0
    %1662 = vdwg.mxu0
    %v1663 = vld [vmem:[%s1] sm:$0xff]
    %1665 = vrot.lane.b32.xlu0 %v1658, 96
    %v1666 = vpop.permute.xlu0 %1665
    %vm1667 = vcmask 64512
    %v1668 = vsel %vm1667, %v1658, 0
    %v1670 = vsel %vm1667, %v1666, 0
    %1672 = vmatprep.subr.mxu0 0.0
    %1673 = vmatpush1.xpose.msra.mxu0 0.0
    %1674 = vmatprep.subr.mxu0 0.0
    %1675 = vmatpush1.xpose.msra.mxu0 0.0
    %1676 = vmatprep.subr.mxu0 0.0
    %1677 = vmatpush1.xpose.msra.mxu0 0.0
    %1678 = vmatprep.subr.mxu0 0.0
    %1679 = vmatpush1.xpose.msra.mxu0 0.0
    %1680 = vmatprep.subr.mxu0 0.0
    %1681 = vmatpush1.xpose.msra.mxu0 0.0
    %1682 = vmatprep.subr.mxu0 0.0
    %1683 = vmatpush1.xpose.msra.mxu0 0.0
    %1684 = vmatprep.subr.mxu0 0.0
    %1685 = vmatpush1.xpose.msra.mxu0 0.0
    %1686 = vmatprep.subr.mxu0 0.0
    %1687 = vmatpush1.xpose.msra.mxu0 0.0
    %1688 = vmatprep.subr.mxu0 0.0
    %1689 = vmatpush1.xpose.msra.mxu0 0.0
    %1690 = vmatprep.subr.mxu0 0.0
    %1691 = vmatpush1.xpose.msra.mxu0 0.0
    %1692 = vmatprep.subr.mxu0 0.0
    %1693 = vmatpush1.xpose.msra.mxu0 0.0
    %1694 = vmatprep.subr.mxu0 0.0
    %1695 = vmatpush1.xpose.msra.mxu0 0.0
    %1696 = vmatprep.subr.mxu0 0.0
    %1697 = vmatpush1.xpose.msra.mxu0 0.0
    %1698 = vmatprep.subr.mxu0 0.0
    %1699 = vmatpush1.xpose.msra.mxu0 0.0
    %1700 = vmatprep.subr.mxu0 0.0
    %1701 = vmatpush1.xpose.msra.mxu0 0.0
    %1702 = vmatprep.subr.mxu0 0.0
    %1703 = vmatpush1.xpose.msra.mxu0 %v1670
    %1704 = vmatprep.subr.mxu0 0.0
    %1705 = vmatpush2.xpose.msra.mxu0 0.0
    %1706 = vmatprep.subr.mxu0 0.0
    %1707 = vmatpush2.xpose.msra.mxu0 0.0
    %1708 = vmatprep.subr.mxu0 0.0
    %1709 = vmatpush2.xpose.msra.mxu0 0.0
    %1710 = vmatprep.subr.mxu0 0.0
    %1711 = vmatpush2.xpose.msra.mxu0 0.0
    %1712 = vmatprep.subr.mxu0 0.0
    %1713 = vmatpush2.xpose.msra.mxu0 0.0
    %1714 = vmatprep.subr.mxu0 0.0
    %1715 = vmatpush2.xpose.msra.mxu0 0.0
    %1716 = vmatprep.subr.mxu0 0.0
    %1717 = vmatpush2.xpose.msra.mxu0 0.0
    %1718 = vmatprep.subr.mxu0 0.0
    %1719 = vmatpush2.xpose.msra.mxu0 0.0
    %1720 = vmatprep.subr.mxu0 0.0
    %1721 = vmatpush2.xpose.msra.mxu0 0.0
    %1722 = vmatprep.subr.mxu0 0.0
    %1723 = vmatpush2.xpose.msra.mxu0 0.0
    %1724 = vmatprep.subr.mxu0 0.0
    %1725 = vmatpush2.xpose.msra.mxu0 0.0
    %1726 = vmatprep.subr.mxu0 0.0
    %1727 = vmatpush2.xpose.msra.mxu0 0.0
    %1728 = vmatprep.subr.mxu0 0.0
    %1729 = vmatpush2.xpose.msra.mxu0 0.0
    %1730 = vmatprep.subr.mxu0 0.0
    %1731 = vmatpush2.xpose.msra.mxu0 0.0
    %1732 = vmatprep.subr.mxu0 0.0
    %1733 = vmatpush2.xpose.msra.mxu0 0.0
    %1734 = vmatprep.subr.mxu0 0.0
    %1735 = vmatpush2.xpose.msra.mxu0 0.0
    %1736 = vmatprep.mubr.f32.mxu0 0.0
    %1737 = vmatmul.mubr.f32.gmra.mxu0 %v1668
    %v1738 = vpop.f32.mrf.mxu0
    %v1739 = vadd.f32 %v1663, %v1738
    %v1740 = vpop.f32.mrf.mxu0
    %1741 = vdwg.mxu0
    %v1742 = vsel %vm1667, %v1739, -inf
    %1743 = vmax.xlane.f32.xlu0 %v1742
    %v1744 = vpop.xlane.xlu0 %1743
    %v1745 = vsub.f32 %v1739, %v1744
    %v1746 = vmul.f32 %v1745, 1.442695
    %v1747 = vpow.pop %v1746
    %v1748 = vsel %vm1667, %v1747, 0.0
    %1749 = vadd.xlane.f32.xlu0 %v1748
    %v1750 = vpop.xlane.xlu0 %1749
    %v1751 = vrcp.pop %v1750
    %v1752 = vmul.f32 %v1747, %v1751
    %1753 = vrot.lane.b32.xlu0 %v1658, 64
    %v1754 = vpop.permute.xlu0 %1753
    %v1757 = vsel %vm1667, %v1752, 0
    %1759 = vmatprep.subr.mxu0 0.0
    %1760 = vmatpush1.msra.mxu0 0.0
    %1761 = vmatprep.subr.mxu0 0.0
    %1762 = vmatpush1.msra.mxu0 0.0
    %1763 = vmatprep.subr.mxu0 0.0
    %1764 = vmatpush1.msra.mxu0 0.0
    %1765 = vmatprep.subr.mxu0 0.0
    %1766 = vmatpush1.msra.mxu0 0.0
    %1767 = vmatprep.subr.mxu0 0.0
    %1768 = vmatpush1.msra.mxu0 0.0
    %1769 = vmatprep.subr.mxu0 0.0
    %1770 = vmatpush1.msra.mxu0 0.0
    %1771 = vmatprep.subr.mxu0 0.0
    %1772 = vmatpush1.msra.mxu0 0.0
    %1773 = vmatprep.subr.mxu0 0.0
    %1774 = vmatpush1.msra.mxu0 0.0
    %1775 = vmatprep.subr.mxu0 0.0
    %1776 = vmatpush1.msra.mxu0 0.0
    %1777 = vmatprep.subr.mxu0 0.0
    %1778 = vmatpush1.msra.mxu0 0.0
    %1779 = vmatprep.subr.mxu0 0.0
    %1780 = vmatpush1.msra.mxu0 0.0
    %1781 = vmatprep.subr.mxu0 0.0
    %1782 = vmatpush1.msra.mxu0 0.0
    %1783 = vmatprep.subr.mxu0 0.0
    %1784 = vmatpush1.msra.mxu0 0.0
    %1785 = vmatprep.subr.mxu0 0.0
    %1786 = vmatpush1.msra.mxu0 0.0
    %1787 = vmatprep.subr.mxu0 0.0
    %1788 = vmatpush1.msra.mxu0 0.0
    %1789 = vmatprep.subr.mxu0 0.0
    %1790 = vmatpush1.msra.mxu0 %v1754
    %1791 = vmatprep.subr.mxu0 0.0
    %1792 = vmatpush2.msra.mxu0 0.0
    %1793 = vmatprep.subr.mxu0 0.0
    %1794 = vmatpush2.msra.mxu0 0.0
    %1795 = vmatprep.subr.mxu0 0.0
    %1796 = vmatpush2.msra.mxu0 0.0
    %1797 = vmatprep.subr.mxu0 0.0
    %1798 = vmatpush2.msra.mxu0 0.0
    %1799 = vmatprep.subr.mxu0 0.0
    %1800 = vmatpush2.msra.mxu0 0.0
    %1801 = vmatprep.subr.mxu0 0.0
    %1802 = vmatpush2.msra.mxu0 0.0
    %1803 = vmatprep.subr.mxu0 0.0
    %1804 = vmatpush2.msra.mxu0 0.0
    %1805 = vmatprep.subr.mxu0 0.0
    %1806 = vmatpush2.msra.mxu0 0.0
    %1807 = vmatprep.subr.mxu0 0.0
    %1808 = vmatpush2.msra.mxu0 0.0
    %1809 = vmatprep.subr.mxu0 0.0
    %1810 = vmatpush2.msra.mxu0 0.0
    %1811 = vmatprep.subr.mxu0 0.0
    %1812 = vmatpush2.msra.mxu0 0.0
    %1813 = vmatprep.subr.mxu0 0.0
    %1814 = vmatpush2.msra.mxu0 0.0
    %1815 = vmatprep.subr.mxu0 0.0
    %1816 = vmatpush2.msra.mxu0 0.0
    %1817 = vmatprep.subr.mxu0 0.0
    %1818 = vmatpush2.msra.mxu0 0.0
    %1819 = vmatprep.subr.mxu0 0.0
    %1820 = vmatpush2.msra.mxu0 0.0
    %1821 = vmatprep.subr.mxu0 0.0
    %1822 = vmatpush2.msra.mxu0 0.0
    %1823 = vmatprep.mubr.f32.mxu0 0.0
    %1824 = vmatmul.mubr.f32.gmra.mxu0 %v1757
    %v1825 = vpop.f32.mrf.mxu0
    %v1826 = vadd.f32 0.0, %v1825
    %v1827 = vpop.f32.mrf.mxu0
    %1828 = vdwg.mxu0
    %1829 = vrot.lane.b32.xlu0 %v1658, 120
    %v1830 = vpop.permute.xlu0 %1829
    %1831 = vrot.lane.b32.xlu0 %v1658, 88
    %v1832 = vpop.permute.xlu0 %1831
    %v1833 = vsel %vm1667, %v1830, 0
    %v1835 = vsel %vm1667, %v1832, 0
    %1837 = vmatprep.subr.mxu0 0.0
    %1838 = vmatpush1.xpose.msra.mxu0 0.0
    %1839 = vmatprep.subr.mxu0 0.0
    %1840 = vmatpush1.xpose.msra.mxu0 0.0
    %1841 = vmatprep.subr.mxu0 0.0
    %1842 = vmatpush1.xpose.msra.mxu0 0.0
    %1843 = vmatprep.subr.mxu0 0.0
    %1844 = vmatpush1.xpose.msra.mxu0 0.0
    %1845 = vmatprep.subr.mxu0 0.0
    %1846 = vmatpush1.xpose.msra.mxu0 0.0
    %1847 = vmatprep.subr.mxu0 0.0
    %1848 = vmatpush1.xpose.msra.mxu0 0.0
    %1849 = vmatprep.subr.mxu0 0.0
    %1850 = vmatpush1.xpose.msra.mxu0 0.0
    %1851 = vmatprep.subr.mxu0 0.0
    %1852 = vmatpush1.xpose.msra.mxu0 0.0
    %1853 = vmatprep.subr.mxu0 0.0
    %1854 = vmatpush1.xpose.msra.mxu0 0.0
    %1855 = vmatprep.subr.mxu0 0.0
    %1856 = vmatpush1.xpose.msra.mxu0 0.0
    %1857 = vmatprep.subr.mxu0 0.0
    %1858 = vmatpush1.xpose.msra.mxu0 0.0
    %1859 = vmatprep.subr.mxu0 0.0
    %1860 = vmatpush1.xpose.msra.mxu0 0.0
    %1861 = vmatprep.subr.mxu0 0.0
    %1862 = vmatpush1.xpose.msra.mxu0 0.0
    %1863 = vmatprep.subr.mxu0 0.0
    %1864 = vmatpush1.xpose.msra.mxu0 0.0
    %1865 = vmatprep.subr.mxu0 0.0
    %1866 = vmatpush1.xpose.msra.mxu0 0.0
    %1867 = vmatprep.subr.mxu0 0.0
    %1868 = vmatpush1.xpose.msra.mxu0 %v1835
    %1869 = vmatprep.subr.mxu0 0.0
    %1870 = vmatpush2.xpose.msra.mxu0 0.0
    %1871 = vmatprep.subr.mxu0 0.0
    %1872 = vmatpush2.xpose.msra.mxu0 0.0
    %1873 = vmatprep.subr.mxu0 0.0
    %1874 = vmatpush2.xpose.msra.mxu0 0.0
    %1875 = vmatprep.subr.mxu0 0.0
    %1876 = vmatpush2.xpose.msra.mxu0 0.0
    %1877 = vmatprep.subr.mxu0 0.0
    %1878 = vmatpush2.xpose.msra.mxu0 0.0
    %1879 = vmatprep.subr.mxu0 0.0
    %1880 = vmatpush2.xpose.msra.mxu0 0.0
    %1881 = vmatprep.subr.mxu0 0.0
    %1882 = vmatpush2.xpose.msra.mxu0 0.0
    %1883 = vmatprep.subr.mxu0 0.0
    %1884 = vmatpush2.xpose.msra.mxu0 0.0
    %1885 = vmatprep.subr.mxu0 0.0
    %1886 = vmatpush2.xpose.msra.mxu0 0.0
    %1887 = vmatprep.subr.mxu0 0.0
    %1888 = vmatpush2.xpose.msra.mxu0 0.0
    %1889 = vmatprep.subr.mxu0 0.0
    %1890 = vmatpush2.xpose.msra.mxu0 0.0
    %1891 = vmatprep.subr.mxu0 0.0
    %1892 = vmatpush2.xpose.msra.mxu0 0.0
    %1893 = vmatprep.subr.mxu0 0.0
    %1894 = vmatpush2.xpose.msra.mxu0 0.0
    %1895 = vmatprep.subr.mxu0 0.0
    %1896 = vmatpush2.xpose.msra.mxu0 0.0
    %1897 = vmatprep.subr.mxu0 0.0
    %1898 = vmatpush2.xpose.msra.mxu0 0.0
    %1899 = vmatprep.subr.mxu0 0.0
    %1900 = vmatpush2.xpose.msra.mxu0 0.0
    %1901 = vmatprep.mubr.f32.mxu0 0.0
    %1902 = vmatmul.mubr.f32.gmra.mxu0 %v1833
    %v1903 = vpop.f32.mrf.mxu0
    %v1904 = vadd.f32 %v1663, %v1903
    %v1905 = vpop.f32.mrf.mxu0
    %1906 = vdwg.mxu0
    %v1907 = vsel %vm1667, %v1904, -inf
    %1908 = vmax.xlane.f32.xlu0 %v1907
    %v1909 = vpop.xlane.xlu0 %1908
    %v1910 = vsub.f32 %v1904, %v1909
    %v1911 = vmul.f32 %v1910, 1.442695
    %v1912 = vpow.pop %v1911
    %v1913 = vsel %vm1667, %v1912, 0.0
    %1914 = vadd.xlane.f32.xlu0 %v1913
    %v1915 = vpop.xlane.xlu0 %1914
    %v1916 = vrcp.pop %v1915
    %v1917 = vmul.f32 %v1912, %v1916
    %1918 = vrot.lane.b32.xlu0 %v1658, 56
    %v1919 = vpop.permute.xlu0 %1918
    %v1922 = vsel %vm1667, %v1917, 0
    %1924 = vmatprep.subr.mxu0 0.0
    %1925 = vmatpush1.msra.mxu0 0.0
    %1926 = vmatprep.subr.mxu0 0.0
    %1927 = vmatpush1.msra.mxu0 0.0
    %1928 = vmatprep.subr.mxu0 0.0
    %1929 = vmatpush1.msra.mxu0 0.0
    %1930 = vmatprep.subr.mxu0 0.0
    %1931 = vmatpush1.msra.mxu0 0.0
    %1932 = vmatprep.subr.mxu0 0.0
    %1933 = vmatpush1.msra.mxu0 0.0
    %1934 = vmatprep.subr.mxu0 0.0
    %1935 = vmatpush1.msra.mxu0 0.0
    %1936 = vmatprep.subr.mxu0 0.0
    %1937 = vmatpush1.msra.mxu0 0.0
    %1938 = vmatprep.subr.mxu0 0.0
    %1939 = vmatpush1.msra.mxu0 0.0
    %1940 = vmatprep.subr.mxu0 0.0
    %1941 = vmatpush1.msra.mxu0 0.0
    %1942 = vmatprep.subr.mxu0 0.0
    %1943 = vmatpush1.msra.mxu0 0.0
    %1944 = vmatprep.subr.mxu0 0.0
    %1945 = vmatpush1.msra.mxu0 0.0
    %1946 = vmatprep.subr.mxu0 0.0
    %1947 = vmatpush1.msra.mxu0 0.0
    %1948 = vmatprep.subr.mxu0 0.0
    %1949 = vmatpush1.msra.mxu0 0.0
    %1950 = vmatprep.subr.mxu0 0.0
    %1951 = vmatpush1.msra.mxu0 0.0
    %1952 = vmatprep.subr.mxu0 0.0
    %1953 = vmatpush1.msra.mxu0 0.0
    %1954 = vmatprep.subr.mxu0 0.0
    %1955 = vmatpush1.msra.mxu0 %v1919
    %1956 = vmatprep.subr.mxu0 0.0
    %1957 = vmatpush2.msra.mxu0 0.0
    %1958 = vmatprep.subr.mxu0 0.0
    %1959 = vmatpush2.msra.mxu0 0.0
    %1960 = vmatprep.subr.mxu0 0.0
    %1961 = vmatpush2.msra.mxu0 0.0
    %1962 = vmatprep.subr.mxu0 0.0
    %1963 = vmatpush2.msra.mxu0 0.0
    %1964 = vmatprep.subr.mxu0 0.0
    %1965 = vmatpush2.msra.mxu0 0.0
    %1966 = vmatprep.subr.mxu0 0.0
    %1967 = vmatpush2.msra.mxu0 0.0
    %1968 = vmatprep.subr.mxu0 0.0
    %1969 = vmatpush2.msra.mxu0 0.0
    %1970 = vmatprep.subr.mxu0 0.0
    %1971 = vmatpush2.msra.mxu0 0.0
    %1972 = vmatprep.subr.mxu0 0.0
    %1973 = vmatpush2.msra.mxu0 0.0
    %1974 = vmatprep.subr.mxu0 0.0
    %1975 = vmatpush2.msra.mxu0 0.0
    %1976 = vmatprep.subr.mxu0 0.0
    %1977 = vmatpush2.msra.mxu0 0.0
    %1978 = vmatprep.subr.mxu0 0.0
    %1979 = vmatpush2.msra.mxu0 0.0
    %1980 = vmatprep.subr.mxu0 0.0
    %1981 = vmatpush2.msra.mxu0 0.0
    %1982 = vmatprep.subr.mxu0 0.0
    %1983 = vmatpush2.msra.mxu0 0.0
    %1984 = vmatprep.subr.mxu0 0.0
    %1985 = vmatpush2.msra.mxu0 0.0
    %1986 = vmatprep.subr.mxu0 0.0
    %1987 = vmatpush2.msra.mxu0 0.0
    %1988 = vmatprep.mubr.f32.mxu0 0.0
    %1989 = vmatmul.mubr.f32.gmra.mxu0 %v1922
    %v1990 = vpop.f32.mrf.mxu0
    %v1991 = vadd.f32 0.0, %v1990
    %v1992 = vpop.f32.mrf.mxu0
    %1993 = vdwg.mxu0
    %1994 = vrot.lane.b32.xlu0 %v1658, 112
    %v1995 = vpop.permute.xlu0 %1994
    %1996 = vrot.lane.b32.xlu0 %v1658, 80
    %v1997 = vpop.permute.xlu0 %1996
    %v1998 = vsel %vm1667, %v1995, 0
    %v2000 = vsel %vm1667, %v1997, 0
    %2002 = vmatprep.subr.mxu0 0.0
    %2003 = vmatpush1.xpose.msra.mxu0 0.0
    %2004 = vmatprep.subr.mxu0 0.0
    %2005 = vmatpush1.xpose.msra.mxu0 0.0
    %2006 = vmatprep.subr.mxu0 0.0
    %2007 = vmatpush1.xpose.msra.mxu0 0.0
    %2008 = vmatprep.subr.mxu0 0.0
    %2009 = vmatpush1.xpose.msra.mxu0 0.0
    %2010 = vmatprep.subr.mxu0 0.0
    %2011 = vmatpush1.xpose.msra.mxu0 0.0
    %2012 = vmatprep.subr.mxu0 0.0
    %2013 = vmatpush1.xpose.msra.mxu0 0.0
    %2014 = vmatprep.subr.mxu0 0.0
    %2015 = vmatpush1.xpose.msra.mxu0 0.0
    %2016 = vmatprep.subr.mxu0 0.0
    %2017 = vmatpush1.xpose.msra.mxu0 0.0
    %2018 = vmatprep.subr.mxu0 0.0
    %2019 = vmatpush1.xpose.msra.mxu0 0.0
    %2020 = vmatprep.subr.mxu0 0.0
    %2021 = vmatpush1.xpose.msra.mxu0 0.0
    %2022 = vmatprep.subr.mxu0 0.0
    %2023 = vmatpush1.xpose.msra.mxu0 0.0
    %2024 = vmatprep.subr.mxu0 0.0
    %2025 = vmatpush1.xpose.msra.mxu0 0.0
    %2026 = vmatprep.subr.mxu0 0.0
    %2027 = vmatpush1.xpose.msra.mxu0 0.0
    %2028 = vmatprep.subr.mxu0 0.0
    %2029 = vmatpush1.xpose.msra.mxu0 0.0
    %2030 = vmatprep.subr.mxu0 0.0
    %2031 = vmatpush1.xpose.msra.mxu0 0.0
    %2032 = vmatprep.subr.mxu0 0.0
    %2033 = vmatpush1.xpose.msra.mxu0 %v2000
    %2034 = vmatprep.subr.mxu0 0.0
    %2035 = vmatpush2.xpose.msra.mxu0 0.0
    %2036 = vmatprep.subr.mxu0 0.0
    %2037 = vmatpush2.xpose.msra.mxu0 0.0
    %2038 = vmatprep.subr.mxu0 0.0
    %2039 = vmatpush2.xpose.msra.mxu0 0.0
    %2040 = vmatprep.subr.mxu0 0.0
    %2041 = vmatpush2.xpose.msra.mxu0 0.0
    %2042 = vmatprep.subr.mxu0 0.0
    %2043 = vmatpush2.xpose.msra.mxu0 0.0
    %2044 = vmatprep.subr.mxu0 0.0
    %2045 = vmatpush2.xpose.msra.mxu0 0.0
    %2046 = vmatprep.subr.mxu0 0.0
    %2047 = vmatpush2.xpose.msra.mxu0 0.0
    %2048 = vmatprep.subr.mxu0 0.0
    %2049 = vmatpush2.xpose.msra.mxu0 0.0
    %2050 = vmatprep.subr.mxu0 0.0
    %2051 = vmatpush2.xpose.msra.mxu0 0.0
    %2052 = vmatprep.subr.mxu0 0.0
    %2053 = vmatpush2.xpose.msra.mxu0 0.0
    %2054 = vmatprep.subr.mxu0 0.0
    %2055 = vmatpush2.xpose.msra.mxu0 0.0
    %2056 = vmatprep.subr.mxu0 0.0
    %2057 = vmatpush2.xpose.msra.mxu0 0.0
    %2058 = vmatprep.subr.mxu0 0.0
    %2059 = vmatpush2.xpose.msra.mxu0 0.0
    %2060 = vmatprep.subr.mxu0 0.0
    %2061 = vmatpush2.xpose.msra.mxu0 0.0
    %2062 = vmatprep.subr.mxu0 0.0
    %2063 = vmatpush2.xpose.msra.mxu0 0.0
    %2064 = vmatprep.subr.mxu0 0.0
    %2065 = vmatpush2.xpose.msra.mxu0 0.0
    %2066 = vmatprep.mubr.f32.mxu0 0.0
    %2067 = vmatmul.mubr.f32.gmra.mxu0 %v1998
    %v2068 = vpop.f32.mrf.mxu0
    %v2069 = vadd.f32 %v1663, %v2068
    %v2070 = vpop.f32.mrf.mxu0
    %2071 = vdwg.mxu0
    %v2072 = vsel %vm1667, %v2069, -inf
    %2073 = vmax.xlane.f32.xlu0 %v2072
    %v2074 = vpop.xlane.xlu0 %2073
    %v2075 = vsub.f32 %v2069, %v2074
    %v2076 = vmul.f32 %v2075, 1.442695
    %v2077 = vpow.pop %v2076
    %v2078 = vsel %vm1667, %v2077, 0.0
    %2079 = vadd.xlane.f32.xlu0 %v2078
    %v2080 = vpop.xlane.xlu0 %2079
    %v2081 = vrcp.pop %v2080
    %v2082 = vmul.f32 %v2077, %v2081
    %2083 = vrot.lane.b32.xlu0 %v1658, 48
    %v2084 = vpop.permute.xlu0 %2083
    %v2087 = vsel %vm1667, %v2082, 0
    %2089 = vmatprep.subr.mxu0 0.0
    %2090 = vmatpush1.msra.mxu0 0.0
    %2091 = vmatprep.subr.mxu0 0.0
    %2092 = vmatpush1.msra.mxu0 0.0
    %2093 = vmatprep.subr.mxu0 0.0
    %2094 = vmatpush1.msra.mxu0 0.0
    %2095 = vmatprep.subr.mxu0 0.0
    %2096 = vmatpush1.msra.mxu0 0.0
    %2097 = vmatprep.subr.mxu0 0.0
    %2098 = vmatpush1.msra.mxu0 0.0
    %2099 = vmatprep.subr.mxu0 0.0
    %2100 = vmatpush1.msra.mxu0 0.0
    %2101 = vmatprep.subr.mxu0 0.0
    %2102 = vmatpush1.msra.mxu0 0.0
    %2103 = vmatprep.subr.mxu0 0.0
    %2104 = vmatpush1.msra.mxu0 0.0
    %2105 = vmatprep.subr.mxu0 0.0
    %2106 = vmatpush1.msra.mxu0 0.0
    %2107 = vmatprep.subr.mxu0 0.0
    %2108 = vmatpush1.msra.mxu0 0.0
    %2109 = vmatprep.subr.mxu0 0.0
    %2110 = vmatpush1.msra.mxu0 0.0
    %2111 = vmatprep.subr.mxu0 0.0
    %2112 = vmatpush1.msra.mxu0 0.0
    %2113 = vmatprep.subr.mxu0 0.0
    %2114 = vmatpush1.msra.mxu0 0.0
    %2115 = vmatprep.subr.mxu0 0.0
    %2116 = vmatpush1.msra.mxu0 0.0
    %2117 = vmatprep.subr.mxu0 0.0
    %2118 = vmatpush1.msra.mxu0 0.0
    %2119 = vmatprep.subr.mxu0 0.0
    %2120 = vmatpush1.msra.mxu0 %v2084
    %2121 = vmatprep.subr.mxu0 0.0
    %2122 = vmatpush2.msra.mxu0 0.0
    %2123 = vmatprep.subr.mxu0 0.0
    %2124 = vmatpush2.msra.mxu0 0.0
    %2125 = vmatprep.subr.mxu0 0.0
    %2126 = vmatpush2.msra.mxu0 0.0
    %2127 = vmatprep.subr.mxu0 0.0
    %2128 = vmatpush2.msra.mxu0 0.0
    %2129 = vmatprep.subr.mxu0 0.0
    %2130 = vmatpush2.msra.mxu0 0.0
    %2131 = vmatprep.subr.mxu0 0.0
    %2132 = vmatpush2.msra.mxu0 0.0
    %2133 = vmatprep.subr.mxu0 0.0
    %2134 = vmatpush2.msra.mxu0 0.0
    %2135 = vmatprep.subr.mxu0 0.0
    %2136 = vmatpush2.msra.mxu0 0.0
    %2137 = vmatprep.subr.mxu0 0.0
    %2138 = vmatpush2.msra.mxu0 0.0
    %2139 = vmatprep.subr.mxu0 0.0
    %2140 = vmatpush2.msra.mxu0 0.0
    %2141 = vmatprep.subr.mxu0 0.0
    %2142 = vmatpush2.msra.mxu0 0.0
    %2143 = vmatprep.subr.mxu0 0.0
    %2144 = vmatpush2.msra.mxu0 0.0
    %2145 = vmatprep.subr.mxu0 0.0
    %2146 = vmatpush2.msra.mxu0 0.0
    %2147 = vmatprep.subr.mxu0 0.0
    %2148 = vmatpush2.msra.mxu0 0.0
    %2149 = vmatprep.subr.mxu0 0.0
    %2150 = vmatpush2.msra.mxu0 0.0
    %2151 = vmatprep.subr.mxu0 0.0
    %2152 = vmatpush2.msra.mxu0 0.0
    %2153 = vmatprep.mubr.f32.mxu0 0.0
    %2154 = vmatmul.mubr.f32.gmra.mxu0 %v2087
    %v2155 = vpop.f32.mrf.mxu0
    %v2156 = vadd.f32 0.0, %v2155
    %v2157 = vpop.f32.mrf.mxu0
    %2158 = vdwg.mxu0
    %2159 = vrot.lane.b32.xlu0 %v1658, 104
    %v2160 = vpop.permute.xlu0 %2159
    %2161 = vrot.lane.b32.xlu0 %v1658, 72
    %v2162 = vpop.permute.xlu0 %2161
    %v2163 = vsel %vm1667, %v2160, 0
    %v2165 = vsel %vm1667, %v2162, 0
    %2167 = vmatprep.subr.mxu0 0.0
    %2168 = vmatpush1.xpose.msra.mxu0 0.0
    %2169 = vmatprep.subr.mxu0 0.0
    %2170 = vmatpush1.xpose.msra.mxu0 0.0
    %2171 = vmatprep.subr.mxu0 0.0
    %2172 = vmatpush1.xpose.msra.mxu0 0.0
    %2173 = vmatprep.subr.mxu0 0.0
    %2174 = vmatpush1.xpose.msra.mxu0 0.0
    %2175 = vmatprep.subr.mxu0 0.0
    %2176 = vmatpush1.xpose.msra.mxu0 0.0
    %2177 = vmatprep.subr.mxu0 0.0
    %2178 = vmatpush1.xpose.msra.mxu0 0.0
    %2179 = vmatprep.subr.mxu0 0.0
    %2180 = vmatpush1.xpose.msra.mxu0 0.0
    %2181 = vmatprep.subr.mxu0 0.0
    %2182 = vmatpush1.xpose.msra.mxu0 0.0
    %2183 = vmatprep.subr.mxu0 0.0
    %2184 = vmatpush1.xpose.msra.mxu0 0.0
    %2185 = vmatprep.subr.mxu0 0.0
    %2186 = vmatpush1.xpose.msra.mxu0 0.0
    %2187 = vmatprep.subr.mxu0 0.0
    %2188 = vmatpush1.xpose.msra.mxu0 0.0
    %2189 = vmatprep.subr.mxu0 0.0
    %2190 = vmatpush1.xpose.msra.mxu0 0.0
    %2191 = vmatprep.subr.mxu0 0.0
    %2192 = vmatpush1.xpose.msra.mxu0 0.0
    %2193 = vmatprep.subr.mxu0 0.0
    %2194 = vmatpush1.xpose.msra.mxu0 0.0
    %2195 = vmatprep.subr.mxu0 0.0
    %2196 = vmatpush1.xpose.msra.mxu0 0.0
    %2197 = vmatprep.subr.mxu0 0.0
    %2198 = vmatpush1.xpose.msra.mxu0 %v2165
    %2199 = vmatprep.subr.mxu0 0.0
    %2200 = vmatpush2.xpose.msra.mxu0 0.0
    %2201 = vmatprep.subr.mxu0 0.0
    %2202 = vmatpush2.xpose.msra.mxu0 0.0
    %2203 = vmatprep.subr.mxu0 0.0
    %2204 = vmatpush2.xpose.msra.mxu0 0.0
    %2205 = vmatprep.subr.mxu0 0.0
    %2206 = vmatpush2.xpose.msra.mxu0 0.0
    %2207 = vmatprep.subr.mxu0 0.0
    %2208 = vmatpush2.xpose.msra.mxu0 0.0
    %2209 = vmatprep.subr.mxu0 0.0
    %2210 = vmatpush2.xpose.msra.mxu0 0.0
    %2211 = vmatprep.subr.mxu0 0.0
    %2212 = vmatpush2.xpose.msra.mxu0 0.0
    %2213 = vmatprep.subr.mxu0 0.0
    %2214 = vmatpush2.xpose.msra.mxu0 0.0
    %2215 = vmatprep.subr.mxu0 0.0
    %2216 = vmatpush2.xpose.msra.mxu0 0.0
    %2217 = vmatprep.subr.mxu0 0.0
    %2218 = vmatpush2.xpose.msra.mxu0 0.0
    %2219 = vmatprep.subr.mxu0 0.0
    %2220 = vmatpush2.xpose.msra.mxu0 0.0
    %2221 = vmatprep.subr.mxu0 0.0
    %2222 = vmatpush2.xpose.msra.mxu0 0.0
    %2223 = vmatprep.subr.mxu0 0.0
    %2224 = vmatpush2.xpose.msra.mxu0 0.0
    %2225 = vmatprep.subr.mxu0 0.0
    %2226 = vmatpush2.xpose.msra.mxu0 0.0
    %2227 = vmatprep.subr.mxu0 0.0
    %2228 = vmatpush2.xpose.msra.mxu0 0.0
    %2229 = vmatprep.subr.mxu0 0.0
    %2230 = vmatpush2.xpose.msra.mxu0 0.0
    %2231 = vmatprep.mubr.f32.mxu0 0.0
    %2232 = vmatmul.mubr.f32.gmra.mxu0 %v2163
    %v2233 = vpop.f32.mrf.mxu0
    %v2234 = vadd.f32 %v1663, %v2233
    %v2235 = vpop.f32.mrf.mxu0
    %2236 = vdwg.mxu0
    %v2237 = vsel %vm1667, %v2234, -inf
    %2238 = vmax.xlane.f32.xlu0 %v2237
    %v2239 = vpop.xlane.xlu0 %2238
    %v2240 = vsub.f32 %v2234, %v2239
    %v2241 = vmul.f32 %v2240, 1.442695
    %v2242 = vpow.pop %v2241
    %v2243 = vsel %vm1667, %v2242, 0.0
    %2244 = vadd.xlane.f32.xlu0 %v2243
    %v2245 = vpop.xlane.xlu0 %2244
    %v2246 = vrcp.pop %v2245
    %v2247 = vmul.f32 %v2242, %v2246
    %2248 = vrot.lane.b32.xlu0 %v1658, 40
    %v2249 = vpop.permute.xlu0 %2248
    %v2252 = vsel %vm1667, %v2247, 0
    %2254 = vmatprep.subr.mxu0 0.0
    %2255 = vmatpush1.msra.mxu0 0.0
    %2256 = vmatprep.subr.mxu0 0.0
    %2257 = vmatpush1.msra.mxu0 0.0
    %2258 = vmatprep.subr.mxu0 0.0
    %2259 = vmatpush1.msra.mxu0 0.0
    %2260 = vmatprep.subr.mxu0 0.0
    %2261 = vmatpush1.msra.mxu0 0.0
    %2262 = vmatprep.subr.mxu0 0.0
    %2263 = vmatpush1.msra.mxu0 0.0
    %2264 = vmatprep.subr.mxu0 0.0
    %2265 = vmatpush1.msra.mxu0 0.0
    %2266 = vmatprep.subr.mxu0 0.0
    %2267 = vmatpush1.msra.mxu0 0.0
    %2268 = vmatprep.subr.mxu0 0.0
    %2269 = vmatpush1.msra.mxu0 0.0
    %2270 = vmatprep.subr.mxu0 0.0
    %2271 = vmatpush1.msra.mxu0 0.0
    %2272 = vmatprep.subr.mxu0 0.0
    %2273 = vmatpush1.msra.mxu0 0.0
    %2274 = vmatprep.subr.mxu0 0.0
    %2275 = vmatpush1.msra.mxu0 0.0
    %2276 = vmatprep.subr.mxu0 0.0
    %2277 = vmatpush1.msra.mxu0 0.0
    %2278 = vmatprep.subr.mxu0 0.0
    %2279 = vmatpush1.msra.mxu0 0.0
    %2280 = vmatprep.subr.mxu0 0.0
    %2281 = vmatpush1.msra.mxu0 0.0
    %2282 = vmatprep.subr.mxu0 0.0
    %2283 = vmatpush1.msra.mxu0 0.0
    %2284 = vmatprep.subr.mxu0 0.0
    %2285 = vmatpush1.msra.mxu0 %v2249
    %2286 = vmatprep.subr.mxu0 0.0
    %2287 = vmatpush2.msra.mxu0 0.0
    %2288 = vmatprep.subr.mxu0 0.0
    %2289 = vmatpush2.msra.mxu0 0.0
    %2290 = vmatprep.subr.mxu0 0.0
    %2291 = vmatpush2.msra.mxu0 0.0
    %2292 = vmatprep.subr.mxu0 0.0
    %2293 = vmatpush2.msra.mxu0 0.0
    %2294 = vmatprep.subr.mxu0 0.0
    %2295 = vmatpush2.msra.mxu0 0.0
    %2296 = vmatprep.subr.mxu0 0.0
    %2297 = vmatpush2.msra.mxu0 0.0
    %2298 = vmatprep.subr.mxu0 0.0
    %2299 = vmatpush2.msra.mxu0 0.0
    %2300 = vmatprep.subr.mxu0 0.0
    %2301 = vmatpush2.msra.mxu0 0.0
    %2302 = vmatprep.subr.mxu0 0.0
    %2303 = vmatpush2.msra.mxu0 0.0
    %2304 = vmatprep.subr.mxu0 0.0
    %2305 = vmatpush2.msra.mxu0 0.0
    %2306 = vmatprep.subr.mxu0 0.0
    %2307 = vmatpush2.msra.mxu0 0.0
    %2308 = vmatprep.subr.mxu0 0.0
    %2309 = vmatpush2.msra.mxu0 0.0
    %2310 = vmatprep.subr.mxu0 0.0
    %2311 = vmatpush2.msra.mxu0 0.0
    %2312 = vmatprep.subr.mxu0 0.0
    %2313 = vmatpush2.msra.mxu0 0.0
    %2314 = vmatprep.subr.mxu0 0.0
    %2315 = vmatpush2.msra.mxu0 0.0
    %2316 = vmatprep.subr.mxu0 0.0
    %2317 = vmatpush2.msra.mxu0 0.0
    %2318 = vmatprep.mubr.f32.mxu0 0.0
    %2319 = vmatmul.mubr.f32.gmra.mxu0 %v2252
    %v2320 = vpop.f32.mrf.mxu0
    %v2321 = vadd.f32 0.0, %v2320
    %v2322 = vpop.f32.mrf.mxu0
    %2323 = vdwg.mxu0
    %2325 = vrot.lane.b32.xlu0 %v1991, 8
    %v2326 = vpop.permute.xlu0 %2325
    %2329 = vrot.lane.b32.xlu0 %v2156, 16
    %v2330 = vpop.permute.xlu0 %2329
    %2333 = vrot.lane.b32.xlu0 %v2321, 24
    %v2334 = vpop.permute.xlu0 %2333
    %v2336 = vsel %vm1667, %v1826, %v2326
    %vm2337 = vcmask 130048
    %v2338 = vsel %vm2337, %v2336, %v2330
    %vm2339 = vcmask 195584
    %v2340 = vsel %vm2339, %v2338, %v2334
    %v2341 = vpack.c.bf16 %v2340, %v2340
    %v2342 = vld [vmem:[#allocation2 + $0x310] sm:$0xf]
    %v2343 = vld [vmem:[#allocation2 + $0x318] sm:$0xf]
    %v2344 = vld [vmem:[#allocation2 + $0x320] sm:$0xf]
    %v2345 = vld [vmem:[#allocation2 + $0x328] sm:$0xf]
    %v2346 = vld [vmem:[%s7 + $0x60] ss:$0 sm:$0xff]
    %v2351 = vunpack.c.l.b16 %v2342
    %v2352 = vunpack.c.l.b16 %v2343
    %v2353 = vunpack.c.l.b16 %v2344
    %v2354 = vunpack.c.l.b16 %v2345
    %v2355 = vpack.c.b16 %v2352, %v2351
    %v2356 = vpack.c.b16 %v2354, %v2353
    %v2360 = vsel %vm1619, %v2341, 0
    %2362 = vmatprep.subr.bf16.mxu0 0
    %2363 = vmatpush1.bf16.msra.mxu0 0
    %2364 = vmatprep.subr.bf16.mxu0 0
    %2365 = vmatpush1.bf16.msra.mxu0 0
    %2366 = vmatprep.subr.bf16.mxu0 0
    %2367 = vmatpush1.bf16.msra.mxu0 0
    %2368 = vmatprep.subr.bf16.mxu0 0
    %2369 = vmatpush1.bf16.msra.mxu0 0
    %2370 = vmatprep.subr.bf16.mxu0 0
    %2371 = vmatpush1.bf16.msra.mxu0 0
    %2372 = vmatprep.subr.bf16.mxu0 0
    %2373 = vmatpush1.bf16.msra.mxu0 0
    %2374 = vmatprep.subr.bf16.mxu0 0
    %2375 = vmatpush1.bf16.msra.mxu0 %v2356
    %2376 = vmatprep.subr.bf16.mxu0 0
    %2377 = vmatpush1.bf16.msra.mxu0 %v2355
    %2378 = vmatprep.subr.bf16.mxu0 0
    %2379 = vmatpush2.bf16.msra.mxu0 0
    %2380 = vmatprep.subr.bf16.mxu0 0
    %2381 = vmatpush2.bf16.msra.mxu0 0
    %2382 = vmatprep.subr.bf16.mxu0 0
    %2383 = vmatpush2.bf16.msra.mxu0 0
    %2384 = vmatprep.subr.bf16.mxu0 0
    %2385 = vmatpush2.bf16.msra.mxu0 0
    %2386 = vmatprep.subr.bf16.mxu0 0
    %2387 = vmatpush2.bf16.msra.mxu0 0
    %2388 = vmatprep.subr.bf16.mxu0 0
    %2389 = vmatpush2.bf16.msra.mxu0 0
    %2390 = vmatprep.subr.bf16.mxu0 0
    %2391 = vmatpush2.bf16.msra.mxu0 0
    %2392 = vmatprep.subr.bf16.mxu0 0
    %2393 = vmatpush2.bf16.msra.mxu0 0
    %2394 = vmatprep.mubr.bf16.mxu0 0
    %2395 = vmatmul.mubr.bf16.gmra.mxu0 %v2360
    %v2396 = vpop.f32.mrf.mxu0
    %v2397 = vadd.f32 %v2346, %v2396
    %v2398 = vpop.f32.mrf.mxu0
    %v2399 = vpop.f32.mrf.mxu0
    %v2400 = vpop.f32.mrf.mxu0
    %2401 = vdwg.mxu0
    %v2402 = vadd.f32 %v1600, %v2397
    %v2403 = vld [vmem:[%s7 + $0x70] ss:$0 sm:$0xff]
    %v2404 = vld [vmem:[%s7 + $0x80] ss:$0 sm:$0xff]
    %v2405 = vsel %vm1619, %v2402, 0.0
    %2406 = vadd.xlane.f32.xlu0 %v2405
    %v2407 = vpop.xlane.xlu0 %2406
    %v2408 = vrcp.pop 32.0
    %v2409 = vmul.f32 %v2407, %v2408
    %v2410 = vsub.f32 %v2402, %v2409
    %v2411 = vmul.f32 %v2410, %v2410
    %v2412 = vsel %vm1619, %v2411, 0.0
    %2413 = vadd.xlane.f32.xlu0 %v2412
    %v2414 = vpop.xlane.xlu0 %2413
    %v2415 = vmul.f32 %v2414, %v2408
    %v2416 = vadd.f32 %v2415, 1e-05
    %v2417 = vrsqrt.pop %v2416
    %v2418 = vmul.f32 %v2410, %v2417
    %v2419 = vmul.f32 %v2418, %v2403
    %v2420 = vadd.f32 %v2419, %v2404
    %v2421 = vpack.c.bf16 %v2420, %v2420
    %v2422 = vld [vmem:[#allocation2 + $0x330] sm:$0xf]
    %v2423 = vld [vmem:[#allocation2 + $0x338] sm:$0xf]
    %v2424 = vld [vmem:[#allocation2 + $0x340] sm:$0xf]
    %v2425 = vld [vmem:[#allocation2 + $0x348] sm:$0xf]
    %v2426 = vld [vmem:[%s7 + $0x90] ss:$0 sm:$0xff]
    %v2431 = vunpack.c.l.b16 %v2422
    %v2432 = vunpack.c.l.b16 %v2423
    %v2433 = vunpack.c.l.b16 %v2424
    %v2434 = vunpack.c.l.b16 %v2425
    %v2435 = vpack.c.b16 %v2432, %v2431
    %v2436 = vpack.c.b16 %v2434, %v2433
    %v2440 = vsel %vm1619, %v2421, 0
    %2442 = vmatprep.subr.bf16.mxu0 0
    %2443 = vmatpush1.bf16.msra.mxu0 0
    %2444 = vmatprep.subr.bf16.mxu0 0
    %2445 = vmatpush1.bf16.msra.mxu0 0
    %2446 = vmatprep.subr.bf16.mxu0 0
    %2447 = vmatpush1.bf16.msra.mxu0 0
    %2448 = vmatprep.subr.bf16.mxu0 0
    %2449 = vmatpush1.bf16.msra.mxu0 0
    %2450 = vmatprep.subr.bf16.mxu0 0
    %2451 = vmatpush1.bf16.msra.mxu0 0
    %2452 = vmatprep.subr.bf16.mxu0 0
    %2453 = vmatpush1.bf16.msra.mxu0 0
    %2454 = vmatprep.subr.bf16.mxu0 0
    %2455 = vmatpush1.bf16.msra.mxu0 %v2436
    %2456 = vmatprep.subr.bf16.mxu0 0
    %2457 = vmatpush1.bf16.msra.mxu0 %v2435
    %2458 = vmatprep.subr.bf16.mxu0 0
    %2459 = vmatpush2.bf16.msra.mxu0 0
    %2460 = vmatprep.subr.bf16.mxu0 0
    %2461 = vmatpush2.bf16.msra.mxu0 0
    %2462 = vmatprep.subr.bf16.mxu0 0
    %2463 = vmatpush2.bf16.msra.mxu0 0
    %2464 = vmatprep.subr.bf16.mxu0 0
    %2465 = vmatpush2.bf16.msra.mxu0 0
    %2466 = vmatprep.subr.bf16.mxu0 0
    %2467 = vmatpush2.bf16.msra.mxu0 0
    %2468 = vmatprep.subr.bf16.mxu0 0
    %2469 = vmatpush2.bf16.msra.mxu0 0
    %2470 = vmatprep.subr.bf16.mxu0 0
    %2471 = vmatpush2.bf16.msra.mxu0 0
    %2472 = vmatprep.subr.bf16.mxu0 0
    %2473 = vmatpush2.bf16.msra.mxu0 0
    %2474 = vmatprep.mubr.bf16.mxu0 0
    %2475 = vmatmul.mubr.bf16.gmra.mxu0 %v2440
    %v2476 = vpop.f32.mrf.mxu0
    %v2477 = vadd.f32 %v2426, %v2476
    %v2478 = vpop.f32.mrf.mxu0
    %v2479 = vpop.f32.mrf.mxu0
    %v2480 = vpop.f32.mrf.mxu0
    %2481 = vdwg.mxu0
    %v2482 = vmul.f32 %v2477, 0.5
    %v2483 = vmul.f32 %v2477, 0.70710677
    %v2484 = vand.u32 2147483647, %v2483
    %v2485 = vmul.f32 %v2484, 0.3275911
    %v2486 = vadd.f32 %v2485, 1.0
    %v2487 = vrcp.pop %v2486
    %v2488 = vmul.f32 1.0, %v2487
    %v2489 = vmul.f32 %v2488, 1.0614054
    %v2490 = vadd.f32 %v2489, -1.4531521
    %v2491 = vmul.f32 %v2490, %v2488
    %v2492 = vadd.f32 %v2491, 1.4214138
    %v2493 = vmul.f32 %v2492, %v2488
    %v2494 = vadd.f32 %v2493, -0.28449672
    %v2495 = vmul.f32 %v2494, %v2488
    %v2496 = vadd.f32 %v2495, 0.2548296
    %v2497 = vmul.f32 %v2496, %v2488
    %v2498 = vsub.f32 0.0, %v2484
    %v2499 = vmul.f32 %v2498, %v2484
    %v2500 = vmul.f32 %v2499, 1.442695
    %v2501 = vpow.pop %v2500
    %v2502 = vmul.f32 %v2497, %v2501
    %v2503 = vsub.f32 1.0, %v2502
    %vm2504 = vcmp.ge.f32.partialorder %v2483, 0.0
    %v2505 = vsub.f32 0.0, %v2503
    %v2506 = vsel %vm2504, %v2503, %v2505
    %v2507 = vadd.f32 %v2506, 1.0
    %v2508 = vmul.f32 %v2482, %v2507
    %v2509 = vpack.c.bf16 %v2508, %v2508
    %v2510 = vld [vmem:[#allocation2 + $0x350] sm:$0xf]
    %v2511 = vld [vmem:[#allocation2 + $0x358] sm:$0xf]
    %v2512 = vld [vmem:[#allocation2 + $0x360] sm:$0xf]
    %v2513 = vld [vmem:[#allocation2 + $0x368] sm:$0xf]
    %v2514 = vld [vmem:[#allocation2 + $0x370] sm:$0xf]
    %v2515 = vld [vmem:[#allocation2 + $0x378] sm:$0xf]
    %v2516 = vld [vmem:[#allocation2 + $0x380] sm:$0xf]
    %v2517 = vld [vmem:[#allocation2 + $0x388] sm:$0xf]
    %v2518 = vld [vmem:[#allocation2 + $0x390] sm:$0xf]
    %v2519 = vld [vmem:[#allocation2 + $0x398] sm:$0xf]
    %v2520 = vld [vmem:[#allocation2 + $0x3a0] sm:$0xf]
    %v2521 = vld [vmem:[#allocation2 + $0x3a8] sm:$0xf]
    %v2522 = vld [vmem:[#allocation2 + $0x3b0] sm:$0xf]
    %v2523 = vld [vmem:[#allocation2 + $0x3b8] sm:$0xf]
    %v2524 = vld [vmem:[#allocation2 + $0x3c0] sm:$0xf]
    %v2525 = vld [vmem:[#allocation2 + $0x3c8] sm:$0xf]
    %v2526 = vld [vmem:[%s7 + $0xa0] ss:$0 sm:$0xff]
    %v2543 = vunpack.c.l.b16 %v2510
    %v2544 = vunpack.c.l.b16 %v2511
    %v2545 = vunpack.c.l.b16 %v2512
    %v2546 = vunpack.c.l.b16 %v2513
    %v2547 = vunpack.c.l.b16 %v2514
    %v2548 = vunpack.c.l.b16 %v2515
    %v2549 = vunpack.c.l.b16 %v2516
    %v2550 = vunpack.c.l.b16 %v2517
    %v2551 = vunpack.c.l.b16 %v2518
    %v2552 = vunpack.c.l.b16 %v2519
    %v2553 = vunpack.c.l.b16 %v2520
    %v2554 = vunpack.c.l.b16 %v2521
    %v2555 = vunpack.c.l.b16 %v2522
    %v2556 = vunpack.c.l.b16 %v2523
    %v2557 = vunpack.c.l.b16 %v2524
    %v2558 = vunpack.c.l.b16 %v2525
    %v2559 = vpack.c.b16 %v2544, %v2543
    %v2560 = vpack.c.b16 %v2546, %v2545
    %v2561 = vpack.c.b16 %v2548, %v2547
    %v2562 = vpack.c.b16 %v2550, %v2549
    %v2563 = vpack.c.b16 %v2552, %v2551
    %v2564 = vpack.c.b16 %v2554, %v2553
    %v2565 = vpack.c.b16 %v2556, %v2555
    %v2566 = vpack.c.b16 %v2558, %v2557
    %2575 = vmatprep.subr.bf16.mxu0 0
    %2576 = vmatpush1.bf16.msra.mxu0 %v2566
    %2577 = vmatprep.subr.bf16.mxu0 0
    %2578 = vmatpush1.bf16.msra.mxu0 %v2565
    %2579 = vmatprep.subr.bf16.mxu0 0
    %2580 = vmatpush1.bf16.msra.mxu0 %v2564
    %2581 = vmatprep.subr.bf16.mxu0 0
    %2582 = vmatpush1.bf16.msra.mxu0 %v2563
    %2583 = vmatprep.subr.bf16.mxu0 0
    %2584 = vmatpush1.bf16.msra.mxu0 %v2562
    %2585 = vmatprep.subr.bf16.mxu0 0
    %2586 = vmatpush1.bf16.msra.mxu0 %v2561
    %2587 = vmatprep.subr.bf16.mxu0 0
    %2588 = vmatpush1.bf16.msra.mxu0 %v2560
    %2589 = vmatprep.subr.bf16.mxu0 0
    %2590 = vmatpush1.bf16.msra.mxu0 %v2559
    %2591 = vmatprep.subr.bf16.mxu0 0
    %2592 = vmatpush2.bf16.msra.mxu0 0
    %2593 = vmatprep.subr.bf16.mxu0 0
    %2594 = vmatpush2.bf16.msra.mxu0 0
    %2595 = vmatprep.subr.bf16.mxu0 0
    %2596 = vmatpush2.bf16.msra.mxu0 0
    %2597 = vmatprep.subr.bf16.mxu0 0
    %2598 = vmatpush2.bf16.msra.mxu0 0
    %2599 = vmatprep.subr.bf16.mxu0 0
    %2600 = vmatpush2.bf16.msra.mxu0 0
    %2601 = vmatprep.subr.bf16.mxu0 0
    %2602 = vmatpush2.bf16.msra.mxu0 0
    %2603 = vmatprep.subr.bf16.mxu0 0
    %2604 = vmatpush2.bf16.msra.mxu0 0
    %2605 = vmatprep.subr.bf16.mxu0 0
    %2606 = vmatpush2.bf16.msra.mxu0 0
    %2607 = vmatprep.mubr.bf16.mxu0 0
    %2608 = vmatmul.mubr.bf16.gmra.mxu0 %v2509
    %v2609 = vpop.f32.mrf.mxu0
    %v2610 = vadd.f32 %v2526, %v2609
    %v2611 = vpop.f32.mrf.mxu0
    %v2612 = vpop.f32.mrf.mxu0
    %v2613 = vpop.f32.mrf.mxu0
    %2614 = vdwg.mxu0
    %v2615 = vadd.f32 %v2420, %v2610
    %v2616 = vld [vmem:[%s7 + $0xb0] ss:$0 sm:$0xff]
    %v2617 = vld [vmem:[%s7 + $0xc0] ss:$0 sm:$0xff]
    %v2618 = vsel %vm1619, %v2615, 0.0
    %2619 = vadd.xlane.f32.xlu0 %v2618
    %v2620 = vpop.xlane.xlu0 %2619
    %v2621 = vmul.f32 %v2620, %v2408
    %v2622 = vsub.f32 %v2615, %v2621
    %v2623 = vmul.f32 %v2622, %v2622
    %v2624 = vsel %vm1619, %v2623, 0.0
    %2625 = vadd.xlane.f32.xlu0 %v2624
    %v2626 = vpop.xlane.xlu0 %2625
    %v2627 = vmul.f32 %v2626, %v2408
    %v2628 = vadd.f32 %v2627, 1e-05
    %v2629 = vrsqrt.pop %v2628
    %v2630 = vmul.f32 %v2622, %v2629
    %v2631 = vmul.f32 %v2630, %v2616
    %v2632 = vadd.f32 %v2631, %v2617
    %v2633 = vld [vmem:[%s2] sm:$0x3]
    %v2635 = vsel %vm1667, %v2633, 0
    %2637 = vmatprep.subr.mxu0 0.0
    %2638 = vmatpush1.msra.mxu0 0.0
    %2639 = vmatprep.subr.mxu0 0.0
    %2640 = vmatpush1.msra.mxu0 0.0
    %2641 = vmatprep.subr.mxu0 0.0
    %2642 = vmatpush1.msra.mxu0 0.0
    %2643 = vmatprep.subr.mxu0 0.0
    %2644 = vmatpush1.msra.mxu0 0.0
    %2645 = vmatprep.subr.mxu0 0.0
    %2646 = vmatpush1.msra.mxu0 0.0
    %2647 = vmatprep.subr.mxu0 0.0
    %2648 = vmatpush1.msra.mxu0 0.0
    %2649 = vmatprep.subr.mxu0 0.0
    %2650 = vmatpush1.msra.mxu0 0.0
    %2651 = vmatprep.subr.mxu0 0.0
    %2652 = vmatpush1.msra.mxu0 0.0
    %2653 = vmatprep.subr.mxu0 0.0
    %2654 = vmatpush1.msra.mxu0 0.0
    %2655 = vmatprep.subr.mxu0 0.0
    %2656 = vmatpush1.msra.mxu0 0.0
    %2657 = vmatprep.subr.mxu0 0.0
    %2658 = vmatpush1.msra.mxu0 0.0
    %2659 = vmatprep.subr.mxu0 0.0
    %2660 = vmatpush1.msra.mxu0 0.0
    %2661 = vmatprep.subr.mxu0 0.0
    %2662 = vmatpush1.msra.mxu0 0.0
    %2663 = vmatprep.subr.mxu0 0.0
    %2664 = vmatpush1.msra.mxu0 0.0
    %2665 = vmatprep.subr.mxu0 0.0
    %2666 = vmatpush1.msra.mxu0 0.0
    %2667 = vmatprep.subr.mxu0 0.0
    %2668 = vmatpush1.msra.mxu0 %v2632
    %2669 = vmatprep.subr.mxu0 0.0
    %2670 = vmatpush2.msra.mxu0 0.0
    %2671 = vmatprep.subr.mxu0 0.0
    %2672 = vmatpush2.msra.mxu0 0.0
    %2673 = vmatprep.subr.mxu0 0.0
    %2674 = vmatpush2.msra.mxu0 0.0
    %2675 = vmatprep.subr.mxu0 0.0
    %2676 = vmatpush2.msra.mxu0 0.0
    %2677 = vmatprep.subr.mxu0 0.0
    %2678 = vmatpush2.msra.mxu0 0.0
    %2679 = vmatprep.subr.mxu0 0.0
    %2680 = vmatpush2.msra.mxu0 0.0
    %2681 = vmatprep.subr.mxu0 0.0
    %2682 = vmatpush2.msra.mxu0 0.0
    %2683 = vmatprep.subr.mxu0 0.0
    %2684 = vmatpush2.msra.mxu0 0.0
    %2685 = vmatprep.subr.mxu0 0.0
    %2686 = vmatpush2.msra.mxu0 0.0
    %2687 = vmatprep.subr.mxu0 0.0
    %2688 = vmatpush2.msra.mxu0 0.0
    %2689 = vmatprep.subr.mxu0 0.0
    %2690 = vmatpush2.msra.mxu0 0.0
    %2691 = vmatprep.subr.mxu0 0.0
    %2692 = vmatpush2.msra.mxu0 0.0
    %2693 = vmatprep.subr.mxu0 0.0
    %2694 = vmatpush2.msra.mxu0 0.0
    %2695 = vmatprep.subr.mxu0 0.0
    %2696 = vmatpush2.msra.mxu0 0.0
    %2697 = vmatprep.subr.mxu0 0.0
    %2698 = vmatpush2.msra.mxu0 0.0
    %2699 = vmatprep.subr.mxu0 0.0
    %2700 = vmatpush2.msra.mxu0 0.0
    %2701 = vmatprep.mubr.f32.mxu0 0.0
    %2702 = vmatmul.mubr.f32.gmra.mxu0 %v2635
    %v2703 = vpop.f32.mrf.mxu0
    %v2704 = vadd.f32 0.0, %v2703
    %v2705 = vpop.f32.mrf.mxu0
    %2706 = vdwg.mxu0
    %v2707 = vld [vmem:[%s5] sm:$0x3]
    %v2708 = vld [vmem:[%s7 + $0xd0] ss:$0 sm:$0xff]
    %2710 = vset.pattern.permute.xlu0 0
    %2711 = vperm.xlu0 %2710, %v2707
    %v2712 = vpop.permute.xlu0 %2711
    %v2714 = vmul.f32 %v2712, %v2708
    %v2715 = vld [vmem:[%s7 + $0xe0] ss:$0 sm:$0xff]
    %v2716 = vadd.f32 %v2714, %v2715
    %v2717 = vmul.f32 %v2716, 0.5
    %v2718 = vmul.f32 %v2716, 0.70710677
    %v2719 = vand.u32 2147483647, %v2718
    %v2720 = vmul.f32 %v2719, 0.3275911
    %v2721 = vadd.f32 %v2720, 1.0
    %v2722 = vrcp.pop %v2721
    %v2723 = vmul.f32 1.0, %v2722
    %v2724 = vmul.f32 %v2723, 1.0614054
    %v2725 = vadd.f32 %v2724, -1.4531521
    %v2726 = vmul.f32 %v2725, %v2723
    %v2727 = vadd.f32 %v2726, 1.4214138
    %v2728 = vmul.f32 %v2727, %v2723
    %v2729 = vadd.f32 %v2728, -0.28449672
    %v2730 = vmul.f32 %v2729, %v2723
    %v2731 = vadd.f32 %v2730, 0.2548296
    %v2732 = vmul.f32 %v2731, %v2723
    %v2733 = vsub.f32 0.0, %v2719
    %v2734 = vmul.f32 %v2733, %v2719
    %v2735 = vmul.f32 %v2734, 1.442695
    %v2736 = vpow.pop %v2735
    %v2737 = vmul.f32 %v2732, %v2736
    %v2738 = vsub.f32 1.0, %v2737
    %vm2739 = vcmp.ge.f32.partialorder %v2718, 0.0
    %v2740 = vsub.f32 0.0, %v2738
    %v2741 = vsel %vm2739, %v2738, %v2740
    %v2742 = vadd.f32 %v2741, 1.0
    %v2743 = vmul.f32 %v2717, %v2742
    %v2744 = vpack.c.bf16 %v2743, %v2743
    %v2745 = vld [vmem:[#allocation2 + $0x3d0] sm:$0xf]
    %v2746 = vld [vmem:[#allocation2 + $0x3d8] sm:$0xf]
    %v2747 = vld [vmem:[%s7 + $0xf0] ss:$0 sm:$0xff]
    %v2750 = vunpack.c.l.b16 %v2745
    %v2751 = vunpack.c.l.b16 %v2746
    %v2752 = vpack.c.b16 %v2751, %v2750
    %v2755 = vsel %vm2337, %v2744, 0
    %2757 = vmatprep.subr.bf16.mxu0 0
    %2758 = vmatpush1.bf16.msra.mxu0 0
    %2759 = vmatprep.subr.bf16.mxu0 0
    %2760 = vmatpush1.bf16.msra.mxu0 0
    %2761 = vmatprep.subr.bf16.mxu0 0
    %2762 = vmatpush1.bf16.msra.mxu0 0
    %2763 = vmatprep.subr.bf16.mxu0 0
    %2764 = vmatpush1.bf16.msra.mxu0 0
    %2765 = vmatprep.subr.bf16.mxu0 0
    %2766 = vmatpush1.bf16.msra.mxu0 0
    %2767 = vmatprep.subr.bf16.mxu0 0
    %2768 = vmatpush1.bf16.msra.mxu0 0
    %2769 = vmatprep.subr.bf16.mxu0 0
    %2770 = vmatpush1.bf16.msra.mxu0 0
    %2771 = vmatprep.subr.bf16.mxu0 0
    %2772 = vmatpush1.bf16.msra.mxu0 %v2752
    %2773 = vmatprep.subr.bf16.mxu0 0
    %2774 = vmatpush2.bf16.msra.mxu0 0
    %2775 = vmatprep.subr.bf16.mxu0 0
    %2776 = vmatpush2.bf16.msra.mxu0 0
    %2777 = vmatprep.subr.bf16.mxu0 0
    %2778 = vmatpush2.bf16.msra.mxu0 0
    %2779 = vmatprep.subr.bf16.mxu0 0
    %2780 = vmatpush2.bf16.msra.mxu0 0
    %2781 = vmatprep.subr.bf16.mxu0 0
    %2782 = vmatpush2.bf16.msra.mxu0 0
    %2783 = vmatprep.subr.bf16.mxu0 0
    %2784 = vmatpush2.bf16.msra.mxu0 0
    %2785 = vmatprep.subr.bf16.mxu0 0
    %2786 = vmatpush2.bf16.msra.mxu0 0
    %2787 = vmatprep.subr.bf16.mxu0 0
    %2788 = vmatpush2.bf16.msra.mxu0 0
    %2789 = vmatprep.mubr.bf16.mxu0 0
    %2790 = vmatmul.mubr.bf16.gmra.mxu0 %v2755
    %v2791 = vpop.f32.mrf.mxu0
    %v2792 = vadd.f32 %v2747, %v2791
    %v2793 = vpop.f32.mrf.mxu0
    %v2794 = vpop.f32.mrf.mxu0
    %v2795 = vpop.f32.mrf.mxu0
    %2796 = vdwg.mxu0
    %v2797 = vpack.c.bf16 %v2704, %v2704
    %v2798 = vld [vmem:[#allocation2 + $0x3e0] sm:$0xf]
    %v2799 = vld [vmem:[#allocation2 + $0x3e8] sm:$0xf]
    %v2800 = vld [vmem:[#allocation2 + $0x3f0] sm:$0xf]
    %v2801 = vld [vmem:[#allocation2 + $0x3f8] sm:$0xf]
    %v2802 = vld [vmem:[%s4] sm:$0x3]
    %v2803 = vpack.c.bf16 %v2802, %v2802
    %v2804 = vld [vmem:[#allocation2 + $0x400] sm:$0xf]
    %v2805 = vld [vmem:[#allocation2 + $0x408] sm:$0xf]
    %v2806 = vld [vmem:[#allocation2 + $0x410] sm:$0xf]
    %v2807 = vld [vmem:[#allocation2 + $0x418] sm:$0xf]
    %v2812 = vunpack.c.l.b16 %v2804
    %v2813 = vunpack.c.l.b16 %v2805
    %v2814 = vunpack.c.l.b16 %v2806
    %v2815 = vunpack.c.l.b16 %v2807
    %v2816 = vpack.c.b16 %v2813, %v2812
    %v2817 = vpack.c.b16 %v2815, %v2814
    %v2821 = vsel %vm1619, %v2803, 0
    %2823 = vmatprep.subr.bf16.mxu0 0
    %2824 = vmatpush1.bf16.msra.mxu0 0
    %2825 = vmatprep.subr.bf16.mxu0 0
    %2826 = vmatpush1.bf16.msra.mxu0 0
    %2827 = vmatprep.subr.bf16.mxu0 0
    %2828 = vmatpush1.bf16.msra.mxu0 0
    %2829 = vmatprep.subr.bf16.mxu0 0
    %2830 = vmatpush1.bf16.msra.mxu0 0
    %2831 = vmatprep.subr.bf16.mxu0 0
    %2832 = vmatpush1.bf16.msra.mxu0 0
    %2833 = vmatprep.subr.bf16.mxu0 0
    %2834 = vmatpush1.bf16.msra.mxu0 0
    %2835 = vmatprep.subr.bf16.mxu0 0
    %2836 = vmatpush1.bf16.msra.mxu0 %v2817
    %2837 = vmatprep.subr.bf16.mxu0 0
    %2838 = vmatpush1.bf16.msra.mxu0 %v2816
    %2839 = vmatprep.subr.bf16.mxu0 0
    %2840 = vmatpush2.bf16.msra.mxu0 0
    %2841 = vmatprep.subr.bf16.mxu0 0
    %2842 = vmatpush2.bf16.msra.mxu0 0
    %2843 = vmatprep.subr.bf16.mxu0 0
    %2844 = vmatpush2.bf16.msra.mxu0 0
    %2845 = vmatprep.subr.bf16.mxu0 0
    %2846 = vmatpush2.bf16.msra.mxu0 0
    %2847 = vmatprep.subr.bf16.mxu0 0
    %2848 = vmatpush2.bf16.msra.mxu0 0
    %2849 = vmatprep.subr.bf16.mxu0 0
    %2850 = vmatpush2.bf16.msra.mxu0 0
    %2851 = vmatprep.subr.bf16.mxu0 0
    %2852 = vmatpush2.bf16.msra.mxu0 0
    %2853 = vmatprep.subr.bf16.mxu0 0
    %2854 = vmatpush2.bf16.msra.mxu0 0
    %2855 = vmatprep.mubr.bf16.mxu0 0
    %2856 = vmatmul.mubr.bf16.gmra.mxu0 %v2821
    %v2857 = vpop.f32.mrf.mxu0
    %v2858 = vadd.f32 0.0, %v2857
    %v2859 = vpop.f32.mrf.mxu0
    %v2860 = vpop.f32.mrf.mxu0
    %v2861 = vpop.f32.mrf.mxu0
    %2862 = vdwg.mxu0
    %v2867 = vunpack.c.l.b16 %v2798
    %v2868 = vunpack.c.l.b16 %v2799
    %v2869 = vunpack.c.l.b16 %v2800
    %v2870 = vunpack.c.l.b16 %v2801
    %v2871 = vpack.c.b16 %v2868, %v2867
    %v2872 = vpack.c.b16 %v2870, %v2869
    %v2876 = vsel %vm1619, %v2797, 0
    %2878 = vmatprep.subr.bf16.mxu0 0
    %2879 = vmatpush1.bf16.msra.mxu0 0
    %2880 = vmatprep.subr.bf16.mxu0 0
    %2881 = vmatpush1.bf16.msra.mxu0 0
    %2882 = vmatprep.subr.bf16.mxu0 0
    %2883 = vmatpush1.bf16.msra.mxu0 0
    %2884 = vmatprep.subr.bf16.mxu0 0
    %2885 = vmatpush1.bf16.msra.mxu0 0
    %2886 = vmatprep.subr.bf16.mxu0 0
    %2887 = vmatpush1.bf16.msra.mxu0 0
    %2888 = vmatprep.subr.bf16.mxu0 0
    %2889 = vmatpush1.bf16.msra.mxu0 0
    %2890 = vmatprep.subr.bf16.mxu0 0
    %2891 = vmatpush1.bf16.msra.mxu0 %v2872
    %2892 = vmatprep.subr.bf16.mxu0 0
    %2893 = vmatpush1.bf16.msra.mxu0 %v2871
    %2894 = vmatprep.subr.bf16.mxu0 0
    %2895 = vmatpush2.bf16.msra.mxu0 0
    %2896 = vmatprep.subr.bf16.mxu0 0
    %2897 = vmatpush2.bf16.msra.mxu0 0
    %2898 = vmatprep.subr.bf16.mxu0 0
    %2899 = vmatpush2.bf16.msra.mxu0 0
    %2900 = vmatprep.subr.bf16.mxu0 0
    %2901 = vmatpush2.bf16.msra.mxu0 0
    %2902 = vmatprep.subr.bf16.mxu0 0
    %2903 = vmatpush2.bf16.msra.mxu0 0
    %2904 = vmatprep.subr.bf16.mxu0 0
    %2905 = vmatpush2.bf16.msra.mxu0 0
    %2906 = vmatprep.subr.bf16.mxu0 0
    %2907 = vmatpush2.bf16.msra.mxu0 0
    %2908 = vmatprep.subr.bf16.mxu0 0
    %2909 = vmatpush2.bf16.msra.mxu0 0
    %2910 = vmatprep.mubr.bf16.mxu0 0
    %2911 = vmatmul.mubr.bf16.gmra.mxu0 %v2876
    %v2912 = vpop.f32.mrf.mxu0
    %v2913 = vadd.f32 %v2858, %v2912
    %v2914 = vpop.f32.mrf.mxu0
    %v2915 = vpop.f32.mrf.mxu0
    %v2916 = vpop.f32.mrf.mxu0
    %2917 = vdwg.mxu0
    %v2918 = vpack.c.bf16 %v2792, %v2792
    %v2919 = vld [vmem:[#allocation2 + $0x420] sm:$0xf]
    %v2920 = vld [vmem:[#allocation2 + $0x428] sm:$0xf]
    %v2921 = vld [vmem:[#allocation2 + $0x430] sm:$0xf]
    %v2922 = vld [vmem:[#allocation2 + $0x438] sm:$0xf]
    %v2927 = vunpack.c.l.b16 %v2919
    %v2928 = vunpack.c.l.b16 %v2920
    %v2929 = vunpack.c.l.b16 %v2921
    %v2930 = vunpack.c.l.b16 %v2922
    %v2931 = vpack.c.b16 %v2928, %v2927
    %v2932 = vpack.c.b16 %v2930, %v2929
    %v2936 = vsel %vm1619, %v2918, 0
    %2938 = vmatprep.subr.bf16.mxu0 0
    %2939 = vmatpush1.bf16.msra.mxu0 0
    %2940 = vmatprep.subr.bf16.mxu0 0
    %2941 = vmatpush1.bf16.msra.mxu0 0
    %2942 = vmatprep.subr.bf16.mxu0 0
    %2943 = vmatpush1.bf16.msra.mxu0 0
    %2944 = vmatprep.subr.bf16.mxu0 0
    %2945 = vmatpush1.bf16.msra.mxu0 0
    %2946 = vmatprep.subr.bf16.mxu0 0
    %2947 = vmatpush1.bf16.msra.mxu0 0
    %2948 = vmatprep.subr.bf16.mxu0 0
    %2949 = vmatpush1.bf16.msra.mxu0 0
    %2950 = vmatprep.subr.bf16.mxu0 0
    %2951 = vmatpush1.bf16.msra.mxu0 %v2932
    %2952 = vmatprep.subr.bf16.mxu0 0
    %2953 = vmatpush1.bf16.msra.mxu0 %v2931
    %2954 = vmatprep.subr.bf16.mxu0 0
    %2955 = vmatpush2.bf16.msra.mxu0 0
    %2956 = vmatprep.subr.bf16.mxu0 0
    %2957 = vmatpush2.bf16.msra.mxu0 0
    %2958 = vmatprep.subr.bf16.mxu0 0
    %2959 = vmatpush2.bf16.msra.mxu0 0
    %2960 = vmatprep.subr.bf16.mxu0 0
    %2961 = vmatpush2.bf16.msra.mxu0 0
    %2962 = vmatprep.subr.bf16.mxu0 0
    %2963 = vmatpush2.bf16.msra.mxu0 0
    %2964 = vmatprep.subr.bf16.mxu0 0
    %2965 = vmatpush2.bf16.msra.mxu0 0
    %2966 = vmatprep.subr.bf16.mxu0 0
    %2967 = vmatpush2.bf16.msra.mxu0 0
    %2968 = vmatprep.subr.bf16.mxu0 0
    %2969 = vmatpush2.bf16.msra.mxu0 0
    %2970 = vmatprep.mubr.bf16.mxu0 0
    %2971 = vmatmul.mubr.bf16.gmra.mxu0 %v2936
    %v2972 = vpop.f32.mrf.mxu0
    %v2973 = vadd.f32 0.0, %v2972
    %v2974 = vpop.f32.mrf.mxu0
    %v2975 = vpop.f32.mrf.mxu0
    %v2976 = vpop.f32.mrf.mxu0
    %2977 = vdwg.mxu0
    %v2978 = vadd.f32 %v2913, %v2973
    %v2979 = vld [vmem:[%s7 + $0x100] ss:$0 sm:$0xff]
    %v2980 = vadd.f32 %v2978, %v2979
    %v2981 = vmul.f32 %v2980, 0.5
    %v2982 = vmul.f32 %v2980, 0.70710677
    %v2983 = vand.u32 2147483647, %v2982
    %v2984 = vmul.f32 %v2983, 0.3275911
    %v2985 = vadd.f32 %v2984, 1.0
    %v2986 = vrcp.pop %v2985
    %v2987 = vmul.f32 1.0, %v2986
    %v2988 = vmul.f32 %v2987, 1.0614054
    %v2989 = vadd.f32 %v2988, -1.4531521
    %v2990 = vmul.f32 %v2989, %v2987
    %v2991 = vadd.f32 %v2990, 1.4214138
    %v2992 = vmul.f32 %v2991, %v2987
    %v2993 = vadd.f32 %v2992, -0.28449672
    %v2994 = vmul.f32 %v2993, %v2987
    %v2995 = vadd.f32 %v2994, 0.2548296
    %v2996 = vmul.f32 %v2995, %v2987
    %v2997 = vsub.f32 0.0, %v2983
    %v2998 = vmul.f32 %v2997, %v2983
    %v2999 = vmul.f32 %v2998, 1.442695
    %v3000 = vpow.pop %v2999
    %v3001 = vmul.f32 %v2996, %v3000
    %v3002 = vsub.f32 1.0, %v3001
    %vm3003 = vcmp.ge.f32.partialorder %v2982, 0.0
    %v3004 = vsub.f32 0.0, %v3002
    %v3005 = vsel %vm3003, %v3002, %v3004
    %v3006 = vadd.f32 %v3005, 1.0
    %v3007 = vmul.f32 %v2981, %v3006
    %v3008 = vpack.c.bf16 %v3007, %v3007
    %v3009 = vld [vmem:[#allocation2 + $0x440] sm:$0xf]
    %v3010 = vld [vmem:[#allocation2 + $0x448] sm:$0xf]
    %v3011 = vld [vmem:[#allocation2 + $0x450] sm:$0xf]
    %v3012 = vld [vmem:[#allocation2 + $0x458] sm:$0xf]
    %v3013 = vld [vmem:[#allocation2 + $0x460] sm:$0xf]
    %v3014 = vld [vmem:[#allocation2 + $0x468] sm:$0xf]
    %v3015 = vld [vmem:[#allocation2 + $0x470] sm:$0xf]
    %v3016 = vld [vmem:[#allocation2 + $0x478] sm:$0xf]
    %v3017 = vld [vmem:[%s7 + $0x110] ss:$0 sm:$0xff]
    %v3026 = vunpack.c.l.b16 %v3009
    %v3027 = vunpack.c.l.b16 %v3010
    %v3028 = vunpack.c.l.b16 %v3011
    %v3029 = vunpack.c.l.b16 %v3012
    %v3030 = vunpack.c.l.b16 %v3013
    %v3031 = vunpack.c.l.b16 %v3014
    %v3032 = vunpack.c.l.b16 %v3015
    %v3033 = vunpack.c.l.b16 %v3016
    %v3034 = vpack.c.b16 %v3027, %v3026
    %v3035 = vpack.c.b16 %v3029, %v3028
    %v3036 = vpack.c.b16 %v3031, %v3030
    %v3037 = vpack.c.b16 %v3033, %v3032
    %v3043 = vsel %vm432, %v3008, 0
    %3045 = vmatprep.subr.bf16.mxu0 0
    %3046 = vmatpush1.bf16.msra.mxu0 0
    %3047 = vmatprep.subr.bf16.mxu0 0
    %3048 = vmatpush1.bf16.msra.mxu0 0
    %3049 = vmatprep.subr.bf16.mxu0 0
    %3050 = vmatpush1.bf16.msra.mxu0 0
    %3051 = vmatprep.subr.bf16.mxu0 0
    %3052 = vmatpush1.bf16.msra.mxu0 0
    %3053 = vmatprep.subr.bf16.mxu0 0
    %3054 = vmatpush1.bf16.msra.mxu0 %v3037
    %3055 = vmatprep.subr.bf16.mxu0 0
    %3056 = vmatpush1.bf16.msra.mxu0 %v3036
    %3057 = vmatprep.subr.bf16.mxu0 0
    %3058 = vmatpush1.bf16.msra.mxu0 %v3035
    %3059 = vmatprep.subr.bf16.mxu0 0
    %3060 = vmatpush1.bf16.msra.mxu0 %v3034
    %3061 = vmatprep.subr.bf16.mxu0 0
    %3062 = vmatpush2.bf16.msra.mxu0 0
    %3063 = vmatprep.subr.bf16.mxu0 0
    %3064 = vmatpush2.bf16.msra.mxu0 0
    %3065 = vmatprep.subr.bf16.mxu0 0
    %3066 = vmatpush2.bf16.msra.mxu0 0
    %3067 = vmatprep.subr.bf16.mxu0 0
    %3068 = vmatpush2.bf16.msra.mxu0 0
    %3069 = vmatprep.subr.bf16.mxu0 0
    %3070 = vmatpush2.bf16.msra.mxu0 0
    %3071 = vmatprep.subr.bf16.mxu0 0
    %3072 = vmatpush2.bf16.msra.mxu0 0
    %3073 = vmatprep.subr.bf16.mxu0 0
    %3074 = vmatpush2.bf16.msra.mxu0 0
    %3075 = vmatprep.subr.bf16.mxu0 0
    %3076 = vmatpush2.bf16.msra.mxu0 0
    %3077 = vmatprep.mubr.bf16.mxu0 0
    %3078 = vmatmul.mubr.bf16.gmra.mxu0 %v3043
    %v3079 = vpop.f32.mrf.mxu0
    %v3080 = vadd.f32 %v3017, %v3079
    %v3081 = vpop.f32.mrf.mxu0
    %v3082 = vpop.f32.mrf.mxu0
    %v3083 = vpop.f32.mrf.mxu0
    %3084 = vdwg.mxu0
    %v3085 = vmul.f32 %v3080, 0.5
    %v3086 = vmul.f32 %v3080, 0.70710677
    %v3087 = vand.u32 2147483647, %v3086
    %v3088 = vmul.f32 %v3087, 0.3275911
    %v3089 = vadd.f32 %v3088, 1.0
    %v3090 = vrcp.pop %v3089
    %v3091 = vmul.f32 1.0, %v3090
    %v3092 = vmul.f32 %v3091, 1.0614054
    %v3093 = vadd.f32 %v3092, -1.4531521
    %v3094 = vmul.f32 %v3093, %v3091
    %v3095 = vadd.f32 %v3094, 1.4214138
    %v3096 = vmul.f32 %v3095, %v3091
    %v3097 = vadd.f32 %v3096, -0.28449672
    %v3098 = vmul.f32 %v3097, %v3091
    %v3099 = vadd.f32 %v3098, 0.2548296
    %v3100 = vmul.f32 %v3099, %v3091
    %v3101 = vsub.f32 0.0, %v3087
    %v3102 = vmul.f32 %v3101, %v3087
    %v3103 = vmul.f32 %v3102, 1.442695
    %v3104 = vpow.pop %v3103
    %v3105 = vmul.f32 %v3100, %v3104
    %v3106 = vsub.f32 1.0, %v3105
    %vm3107 = vcmp.ge.f32.partialorder %v3086, 0.0
    %v3108 = vsub.f32 0.0, %v3106
    %v3109 = vsel %vm3107, %v3106, %v3108
    %v3110 = vadd.f32 %v3109, 1.0
    %v3111 = vmul.f32 %v3085, %v3110
    %v3112 = vpack.c.bf16 %v3111, %v3111
    %v3113 = vld [vmem:[#allocation2 + $0x480] sm:$0xf]
    %v3114 = vld [vmem:[#allocation2 + $0x488] sm:$0xf]
    %v3115 = vld [vmem:[#allocation2 + $0x490] sm:$0xf]
    %v3116 = vld [vmem:[#allocation2 + $0x498] sm:$0xf]
    %v3117 = vld [vmem:[%s7 + $0x120] ss:$0 sm:$0xff]
    %v3122 = vunpack.c.l.b16 %v3113
    %v3123 = vunpack.c.l.b16 %v3114
    %v3124 = vunpack.c.l.b16 %v3115
    %v3125 = vunpack.c.l.b16 %v3116
    %v3126 = vpack.c.b16 %v3123, %v3122
    %v3127 = vpack.c.b16 %v3125, %v3124
    %v3131 = vsel %vm1619, %v3112, 0
    %3133 = vmatprep.subr.bf16.mxu0 0
    %3134 = vmatpush1.bf16.msra.mxu0 0
    %3135 = vmatprep.subr.bf16.mxu0 0
    %3136 = vmatpush1.bf16.msra.mxu0 0
    %3137 = vmatprep.subr.bf16.mxu0 0
    %3138 = vmatpush1.bf16.msra.mxu0 0
    %3139 = vmatprep.subr.bf16.mxu0 0
    %3140 = vmatpush1.bf16.msra.mxu0 0
    %3141 = vmatprep.subr.bf16.mxu0 0
    %3142 = vmatpush1.bf16.msra.mxu0 0
    %3143 = vmatprep.subr.bf16.mxu0 0
    %3144 = vmatpush1.bf16.msra.mxu0 0
    %3145 = vmatprep.subr.bf16.mxu0 0
    %3146 = vmatpush1.bf16.msra.mxu0 %v3127
    %3147 = vmatprep.subr.bf16.mxu0 0
    %3148 = vmatpush1.bf16.msra.mxu0 %v3126
    %3149 = vmatprep.subr.bf16.mxu0 0
    %3150 = vmatpush2.bf16.msra.mxu0 0
    %3151 = vmatprep.subr.bf16.mxu0 0
    %3152 = vmatpush2.bf16.msra.mxu0 0
    %3153 = vmatprep.subr.bf16.mxu0 0
    %3154 = vmatpush2.bf16.msra.mxu0 0
    %3155 = vmatprep.subr.bf16.mxu0 0
    %3156 = vmatpush2.bf16.msra.mxu0 0
    %3157 = vmatprep.subr.bf16.mxu0 0
    %3158 = vmatpush2.bf16.msra.mxu0 0
    %3159 = vmatprep.subr.bf16.mxu0 0
    %3160 = vmatpush2.bf16.msra.mxu0 0
    %3161 = vmatprep.subr.bf16.mxu0 0
    %3162 = vmatpush2.bf16.msra.mxu0 0
    %3163 = vmatprep.subr.bf16.mxu0 0
    %3164 = vmatpush2.bf16.msra.mxu0 0
    %3165 = vmatprep.mubr.bf16.mxu0 0
    %3166 = vmatmul.mubr.bf16.gmra.mxu0 %v3131
    %v3167 = vpop.f32.mrf.mxu0
    %v3168 = vadd.f32 %v3117, %v3167
    %v3169 = vpop.f32.mrf.mxu0
    %v3170 = vpop.f32.mrf.mxu0
    %v3171 = vpop.f32.mrf.mxu0
    %3172 = vdwg.mxu0
    %v3173 = vld [vmem:[%s3] sm:$0x3]
    %v3174 = vmul.f32 %v3168, %v3173
    %v3175 = vsub.f32 1.0, %v3173
    %v3176 = vmul.f32 %v3175, 1e+10
    %v3177 = vsub.f32 %v3174, %v3176
    %vm3178 = vcmask 25600
    %v3179 = vsel %vm3178, %v3177, -inf
    %3180 = vmax.xlane.f32.xlu0 %v3179
    %v3181 = vpop.xlane.xlu0 %3180
    %v3182 = vsub.f32 %v3177, %v3181
    %v3183 = vmul.f32 %v3182, 1.442695
    %v3184 = vpow.pop %v3183
    %v3185 = vsel %vm3178, %v3184, 0.0
    %3186 = vadd.xlane.f32.xlu0 %v3185
    %v3187 = vpop.xlane.xlu0 %3186
    %v3188 = vrcp.pop %v3187
    %v3189 = vmul.f32 %v3184, %v3188
    %3190 = vst.msk [vmem:[#allocation5] sm:$0x3] %vm3178, %v3189
    // Predicated region
    $region38: #{forward.1} parent=1 // pred_check
      _
    $region39: #{forward.1} parent=1 // pred_check_branch
      %3192 = sbr.rel (0) target = $region41
    $region40: #{forward.1} parent=1 // pred_region
      %s3194 = ssub.s32 32, 32
      %3195 = vsyncadd [#allocation4], %s3194
      %s3197 = sshll.u32 [#allocation5], 4
      %s3198 = int_to_ptr.vmem [resolvable:$true] %s3197
      %3200 = dma.vmem_to_hbm [thread:$0]  %s3198, 32, %s8, [#allocation4]
    $region41: #{forward.1} parent=1 // pred_fallthru
      _
    // Predicated region
    $region42: #{forward.1} parent=1 // pred_check
      _
    $region43: #{forward.1} parent=1 // pred_check_branch
      %3202 = sbr.rel (0) target = $region45
    $region44: #{forward.1} parent=1 // pred_region
      %3203 = dma.done [#allocation4], 32
    $region45: #{forward.1} parent=1 // pred_fallthru
      _
    %3204 = vsyncpa [#allocation3], 1
    %3205 = vsyncpa [#allocation4], 1

</llo_original>
